<compile_context>
chip_gen: v6e
topology: v6e:2x2x1
jax: 0.10.0
libtpu: 0.0.40
codegen_flags: <defaults>
</compile_context>

<pallas_src>
import jax
import jax.numpy as jnp
from jax.experimental import pallas as pl
from jax.experimental.pallas import tpu as pltpu

BATCH_TILE = 128  # images per grid step


# ----------------------------------------------------------------------------
# Fused kernel: conv1 -> pool -> conv2 -> pool -> fc1 -> fc2 -> fc3
# ----------------------------------------------------------------------------
def _make_kernel(bt):
    rows = bt * 16  # stacked rows per tile (16 rows per image at every stage)

    def kernel(xe_ref, xo_ref, m1_ref, b1_ref, t1_ref, m2_ref, b2_ref, t2_ref,
               w1_ref, fb1_ref, w2_ref, fb2_ref, w3_ref, fb3_ref,
               o_ref, p1_ref, y2_ref):
        f32 = jnp.float32
        bf16 = jnp.bfloat16

        def mm(a, b):
            return jnp.dot(a, b, preferred_element_type=f32)

        # ---- conv1 (kh folded into K=96) + bias + ReLU for the even / odd
        # output rows of every image in the tile; 2x2 row-pool = plain max. ---
        m1 = m1_ref[...]                                    # (96, 180) bf16
        b1 = b1_ref[...]                                    # (1, 180)  f32
        ye = jnp.maximum(mm(xe_ref[...], m1) + b1, 0.0)     # (rows, 180) f32
        yo = jnp.maximum(mm(xo_ref[...], m1) + b1, 0.0)
        yr = jnp.maximum(ye, yo).astype(bf16)               # row-pooled
        # 2x2 col-pool via exact 0/1 selector matmuls (lane mixing on MXU).
        p1 = jnp.maximum(mm(yr, t1_ref[0]), mm(yr, t1_ref[1]))   # (rows, 90)
        p1_ref[0:rows, :] = p1.astype(bf16)
        p1_ref[rows:rows + 8, :] = jnp.zeros((8, 90), bf16)      # shifted-read tail

        # ---- conv2: 3 matmuls against row-shifted views of the pooled plane.
        # The shifts stay inside each image for the 13 valid output rows; rows
        # >= 13 per image are garbage and are never read by the pool/fc stage.
        acc = mm(p1_ref[0:rows, :], m2_ref[0])
        acc = acc + mm(p1_ref[1:rows + 1, :], m2_ref[1])
        acc = acc + mm(p1_ref[2:rows + 2, :], m2_ref[2])
        y2 = jnp.maximum(acc + b2_ref[...], 0.0)            # (rows, 208) f32
        y2_ref[...] = y2.reshape(bt, 16, 208).astype(bf16)  # per-image view

        # ---- fused 2x2 max-pool (floor mode) + fc1 partial sums over the 6
        # surviving pooled rows; col-pool again via selector matmuls. ---------
        t2e = t2_ref[0]                                     # (208, 96) bf16
        t2o = t2_ref[1]
        h = jnp.zeros((bt, 128), f32)
        for r in range(6):
            rm = jnp.maximum(y2_ref[:, 2 * r, :], y2_ref[:, 2 * r + 1, :])
            ft = jnp.maximum(mm(rm, t2e), mm(rm, t2o)).astype(bf16)  # (bt, 96)
            h = h + mm(ft, w1_ref[r])                                # (bt, 128)
        h = jnp.maximum(h + fb1_ref[...], 0.0).astype(bf16)              # fc1
        h = jnp.maximum(mm(h, w2_ref[...]) + fb2_ref[...], 0.0).astype(bf16)  # fc2
        o_ref[...] = mm(h, w3_ref[...]) + fb3_ref[...]                   # fc3

    return kernel


# ----------------------------------------------------------------------------
# Wrapper: im2row (parity split) in XLA, single fused pallas_call.
# ----------------------------------------------------------------------------
def _im2row_parity(x, n_pad):
    """x: (n, 32, 32) f32 -> two (n_pad*16, 96) bf16 planes.
    xe[b*16+r, kh*32+w] = x[b, 2r+kh, w]   (even conv1 output rows)
    xo[b*16+r, kh*32+w] = x[b, 2r+1+kh, w] (odd  conv1 output rows)"""
    n = x.shape[0]
    xp = jnp.pad(x, ((0, n_pad - n), (0, 2), (0, 0)))          # (n_pad, 34, 32)
    win = jnp.concatenate([xp[:, k:k + 32, :] for k in range(3)], axis=-1)
    xe = win[:, 0::2, :].reshape(n_pad * 16, 96)
    xo = win[:, 1::2, :].reshape(n_pad * 16, 96)
    return xe.astype(jnp.bfloat16), xo.astype(jnp.bfloat16)


def _forward(x_nchw, kp):
    n, c, h, w = x_nchw.shape
    assert (c, h, w) == (1, 32, 32), "Net expects (N, 1, 32, 32) inputs"
    bt = BATCH_TILE if n >= BATCH_TILE else max(8, ((n + 7) // 8) * 8)
    n_tiles = pl.cdiv(n, bt)
    n_pad = n_tiles * bt
    xe, xo = _im2row_parity(x_nchw.reshape(n, 32, 32), n_pad)

    rows = bt * 16
    c2 = lambda i: (0, 0)
    c3 = lambda i: (0, 0, 0)

    out = pl.pallas_call(
        _make_kernel(bt),
        out_shape=jax.ShapeDtypeStruct((n_pad, 128), jnp.float32),
        grid=(n_tiles,),
        in_specs=[
            pl.BlockSpec((rows, 96), lambda i: (i, 0)),   # even-row im2row
            pl.BlockSpec((rows, 96), lambda i: (i, 0)),   # odd-row im2row
            pl.BlockSpec((96, 180), c2),                  # conv1 Toeplitz (K=96)
            pl.BlockSpec((1, 180), c2),                   # conv1 bias (tiled)
            pl.BlockSpec((2, 180, 90), c3),               # pool1 col selectors
            pl.BlockSpec((3, 90, 208), c3),               # conv2 Toeplitz
            pl.BlockSpec((1, 208), c2),                   # conv2 bias (tiled)
            pl.BlockSpec((2, 208, 96), c3),               # pool2 col selectors
            pl.BlockSpec((6, 96, 128), c3),               # fc1 (permuted, padded)
            pl.BlockSpec((1, 128), c2),                   # fc1 bias
            pl.BlockSpec((128, 128), c2),                 # fc2 (padded)
            pl.BlockSpec((1, 128), c2),                   # fc2 bias
            pl.BlockSpec((128, 128), c2),                 # fc3 (padded)
            pl.BlockSpec((1, 128), c2),                   # fc3 bias
        ],
        out_specs=pl.BlockSpec((bt, 128), lambda i: (i, 0)),
        scratch_shapes=[
            pltpu.VMEM((rows + 8, 90), jnp.bfloat16),     # pooled conv1 plane
            pltpu.VMEM((bt, 16, 208), jnp.bfloat16),      # conv2 output (per image)
        ],
        compiler_params=pltpu.CompilerParams(
            dimension_semantics=("parallel",),
            vmem_limit_bytes=48 * 1024 * 1024),
    )(xe, xo, kp['m1'], kp['b1'], kp['t1'], kp['m2'], kp['b2'], kp['t2'],
      kp['w1'], kp['fb1'], kp['w2'], kp['fb2'], kp['w3'], kp['fb3'])
    return out[:n, :10]


@jax.jit
def net_forward(x_nchw, kernel_params):
    return _forward(x_nchw, kernel_params)


# ----------------------------------------------------------------------------
# Parameter construction: PyTorch-layout params -> packed kernel operands.
# ----------------------------------------------------------------------------
def init_torch_params(key):
    """Synthetic parameters in PyTorch's native layouts (OIHW conv, (out,in) fc)."""
    ks = jax.random.split(key, 10)

    def u(k, shape, fan_in):
        bound = 1.0 / (fan_in ** 0.5)
        return jax.random.uniform(k, shape, jnp.float32, -bound, bound)

    return dict(
        conv1_w=u(ks[0], (6, 1, 3, 3), 9), conv1_b=u(ks[1], (6,), 9),
        conv2_w=u(ks[2], (16, 6, 3, 3), 54), conv2_b=u(ks[3], (16,), 54),
        fc1_w=u(ks[4], (120, 576), 576), fc1_b=u(ks[5], (120,), 576),
        fc2_w=u(ks[6], (84, 120), 120), fc2_b=u(ks[7], (84,), 120),
        fc3_w=u(ks[8], (10, 84), 84), fc3_b=u(ks[9], (10,), 84),
    )


def _toeplitz(w_oihw, wi):
    """(Cout,Cin,K,K) conv weight -> (K, Wi*Cin, Wo*Cout) banded matrices with
    m[kh, w*Cin+ci, wo*Cout+co] = W[co, ci, kh, w-wo] for 0 <= w-wo < K."""
    cout, cin, k, _ = w_oihw.shape
    wo = wi - k + 1
    w_hwio = jnp.transpose(w_oihw, (2, 3, 1, 0))          # (K, K, Cin, Cout)
    eye = jnp.eye(wo, dtype=jnp.float32)
    m = jnp.zeros((k, wi * cin, wo * cout), jnp.float32)
    for kh in range(k):
        for kw in range(k):
            blk = jnp.kron(eye, w_hwio[kh, kw])           # (Wo*Cin, Wo*Cout)
            m = m.at[kh, kw * cin:(kw + wo) * cin, :].add(blk)
    return m


def _pool_cols(cols, cout):
    """0/1 selection matrices for a 2x2 stride-2 (floor) column max pool on a
    (rows, cols*cout) plane whose lane index is col*cout + c."""
    pw = cols // 2
    ar = jnp.arange(pw)
    ce = jnp.zeros((cols, pw), jnp.float32).at[2 * ar, ar].set(1.0)
    co = jnp.zeros((cols, pw), jnp.float32).at[2 * ar + 1, ar].set(1.0)
    eye_c = jnp.eye(cout, dtype=jnp.float32)
    return jnp.stack([jnp.kron(ce, eye_c), jnp.kron(co, eye_c)])


def pack_params(p):
    bf16 = jnp.bfloat16
    m1 = _toeplitz(p['conv1_w'], 32).reshape(96, 180).astype(bf16)   # kh folded in K
    m2 = _toeplitz(p['conv2_w'], 15).astype(bf16)                    # (3, 90, 208)
    b1 = jnp.tile(p['conv1_b'], 30).reshape(1, 180).astype(jnp.float32)
    b2 = jnp.tile(p['conv2_b'], 13).reshape(1, 208).astype(jnp.float32)
    t1 = _pool_cols(30, 6).astype(bf16)                              # (2, 180, 90)
    t2 = _pool_cols(13, 16).astype(bf16)                             # (2, 208, 96)
    # fc1: permute rows from PyTorch NCHW flatten order (c*36+h*6+w) to the
    # kernel's (h, w*16+c) feature layout; pad outputs 120 -> 128 lanes.
    w1 = p['fc1_w'].T.reshape(16, 6, 6, 120).transpose(1, 2, 0, 3).reshape(6, 96, 120)
    w1 = jnp.pad(w1, ((0, 0), (0, 0), (0, 8))).astype(bf16)
    fb1 = jnp.pad(p['fc1_b'], (0, 8)).reshape(1, 128)
    w2 = jnp.pad(p['fc2_w'].T, ((0, 8), (0, 44))).astype(bf16)       # (128, 128)
    fb2 = jnp.pad(p['fc2_b'], (0, 44)).reshape(1, 128)
    w3 = jnp.pad(p['fc3_w'].T, ((0, 44), (0, 118))).astype(bf16)     # (128, 128)
    fb3 = jnp.pad(p['fc3_b'], (0, 118)).reshape(1, 128)
    return dict(m1=m1, b1=b1, t1=t1, m2=m2, b2=b2, t2=t2,
                w1=w1, fb1=fb1, w2=w2, fb2=fb2, w3=w3, fb3=fb3)


# ----------------------------------------------------------------------------
# Pure-JAX reference (for a numerical sanity check).
# ----------------------------------------------------------------------------
def _reference_forward(x_nchw, p):
    dn = ('NCHW', 'OIHW', 'NCHW')
    y = jax.lax.conv_general_dilated(x_nchw, p['conv1_w'], (1, 1), 'VALID',
                                     dimension_numbers=dn)
    y = jax.nn.relu(y + p['conv1_b'][None, :, None, None])
    y = jax.lax.reduce_window(y, -jnp.inf, jax.lax.max,
                              (1, 1, 2, 2), (1, 1, 2, 2), 'VALID')
    y = jax.lax.conv_general_dilated(y, p['conv2_w'], (1, 1), 'VALID',
                                     dimension_numbers=dn)
    y = jax.nn.relu(y + p['conv2_b'][None, :, None, None])
    y = jax.lax.reduce_window(y, -jnp.inf, jax.lax.max,
                              (1, 1, 2, 2), (1, 1, 2, 2), 'VALID')
    y = y.reshape(y.shape[0], -1)                          # NCHW flatten -> 576
    y = jax.nn.relu(y @ p['fc1_w'].T + p['fc1_b'])
    y = jax.nn.relu(y @ p['fc2_w'].T + p['fc2_b'])
    return y @ p['fc3_w'].T + p['fc3_b']


if __name__ == "__main__":
    key = jax.random.PRNGKey(0)
    pkey, xkey = jax.random.split(key)
    tparams = init_torch_params(pkey)
    kparams = pack_params(tparams)

    # Net's fc1 = Linear(16*6*6, 120) implies a 32x32 single-channel input.
    x = jax.random.normal(xkey, (2, 1, 32, 32), jnp.float32)

    out = net_forward(x, kparams)
    jax.block_until_ready(out)
    assert out.shape == (2, 10)

    ref = _reference_forward(x, tparams)
    err = float(jnp.max(jnp.abs(out - ref)))
    assert err < 3e-2, f"kernel/reference mismatch: max abs err {err}"

    print("KERNEL_OK")
</pallas_src>

<mosaic_0001>
module attributes {stable_mosaic.version = 11 : i64} {
  func.func @kernel(%arg0: i32, %arg1: memref<128x96xbf16, #tpu.memory_space<vmem>>, %arg2: memref<128x96xbf16, #tpu.memory_space<vmem>>, %arg3: memref<96x180xbf16, #tpu.memory_space<vmem>>, %arg4: memref<1x180xf32, #tpu.memory_space<vmem>>, %arg5: memref<2x180x90xbf16, #tpu.memory_space<vmem>>, %arg6: memref<3x90x208xbf16, #tpu.memory_space<vmem>>, %arg7: memref<1x208xf32, #tpu.memory_space<vmem>>, %arg8: memref<2x208x96xbf16, #tpu.memory_space<vmem>>, %arg9: memref<6x96x128xbf16, #tpu.memory_space<vmem>>, %arg10: memref<1x128xf32, #tpu.memory_space<vmem>>, %arg11: memref<128x128xbf16, #tpu.memory_space<vmem>>, %arg12: memref<1x128xf32, #tpu.memory_space<vmem>>, %arg13: memref<128x128xbf16, #tpu.memory_space<vmem>>, %arg14: memref<1x128xf32, #tpu.memory_space<vmem>>, %arg15: memref<8x128xf32, #tpu.memory_space<vmem>>, %arg16: memref<136x90xbf16, #tpu.memory_space<vmem>>, %arg17: memref<8x16x208xbf16, #tpu.memory_space<vmem>>) attributes {dimension_semantics = [#tpu.dimension_semantics<parallel>], iteration_bounds = array<i64: 1>, scalar_prefetch = 0 : i64, scratch_operands = 2 : i64, tpu.core_type = #tpu.core_type<tc>, window_params = [{transform_indices = @transform_0, window_bounds = array<i64: 128, 96>}, {transform_indices = @transform_1, window_bounds = array<i64: 128, 96>}, {pipeline_mode = #tpu.pipeline_mode<synchronous>, transform_indices = @transform_2, window_bounds = array<i64: 96, 180>}, {pipeline_mode = #tpu.pipeline_mode<synchronous>, transform_indices = @transform_3, window_bounds = array<i64: 1, 180>}, {pipeline_mode = #tpu.pipeline_mode<synchronous>, transform_indices = @transform_4, window_bounds = array<i64: 2, 180, 90>}, {pipeline_mode = #tpu.pipeline_mode<synchronous>, transform_indices = @transform_5, window_bounds = array<i64: 3, 90, 208>}, {pipeline_mode = #tpu.pipeline_mode<synchronous>, transform_indices = @transform_6, window_bounds = array<i64: 1, 208>}, {pipeline_mode = #tpu.pipeline_mode<synchronous>, transform_indices = @transform_7, window_bounds = array<i64: 2, 208, 96>}, {pipeline_mode = #tpu.pipeline_mode<synchronous>, transform_indices = @transform_8, window_bounds = array<i64: 6, 96, 128>}, {pipeline_mode = #tpu.pipeline_mode<synchronous>, transform_indices = @transform_9, window_bounds = array<i64: 1, 128>}, {pipeline_mode = #tpu.pipeline_mode<synchronous>, transform_indices = @transform_10, window_bounds = array<i64: 128, 128>}, {pipeline_mode = #tpu.pipeline_mode<synchronous>, transform_indices = @transform_11, window_bounds = array<i64: 1, 128>}, {pipeline_mode = #tpu.pipeline_mode<synchronous>, transform_indices = @transform_12, window_bounds = array<i64: 128, 128>}, {pipeline_mode = #tpu.pipeline_mode<synchronous>, transform_indices = @transform_13, window_bounds = array<i64: 1, 128>}, {transform_indices = @transform_14, window_bounds = array<i64: 8, 128>}]} {
    %c0 = arith.constant 0 : index
    %c0_0 = arith.constant 0 : index
    %0 = vector.load %arg3[%c0, %c0_0] : memref<96x180xbf16, #tpu.memory_space<vmem>>, vector<96x180xbf16>
    %c0_1 = arith.constant 0 : index
    %c0_2 = arith.constant 0 : index
    %1 = vector.load %arg4[%c0_1, %c0_2] : memref<1x180xf32, #tpu.memory_space<vmem>>, vector<1x180xf32>
    %c0_3 = arith.constant 0 : index
    %c0_4 = arith.constant 0 : index
    %2 = vector.load %arg1[%c0_3, %c0_4] : memref<128x96xbf16, #tpu.memory_space<vmem>>, vector<128x96xbf16>
    %cst = arith.constant dense<0.000000e+00> : vector<128x180xf32>
    %3 = tpu.matmul %2, %0, %cst {dimension_numbers = #tpu.dot_dimension_numbers<[1], [0], [0], [1], [0, 0, 1, 1], [], []>} : vector<128x96xbf16>, vector<96x180xbf16>, vector<128x180xf32> -> vector<128x180xf32>
    %4 = vector.broadcast %1 : vector<1x180xf32> to vector<128x180xf32>
    %5 = arith.addf %3, %4 : vector<128x180xf32>
    %cst_5 = arith.constant 0.000000e+00 : f32
    %6 = vector.broadcast %cst_5 : f32 to vector<128x180xf32>
    %7 = arith.maximumf %5, %6 : vector<128x180xf32>
    %c0_6 = arith.constant 0 : index
    %c0_7 = arith.constant 0 : index
    %8 = vector.load %arg2[%c0_6, %c0_7] : memref<128x96xbf16, #tpu.memory_space<vmem>>, vector<128x96xbf16>
    %cst_8 = arith.constant dense<0.000000e+00> : vector<128x180xf32>
    %9 = tpu.matmul %8, %0, %cst_8 {dimension_numbers = #tpu.dot_dimension_numbers<[1], [0], [0], [1], [0, 0, 1, 1], [], []>} : vector<128x96xbf16>, vector<96x180xbf16>, vector<128x180xf32> -> vector<128x180xf32>
    %10 = vector.broadcast %1 : vector<1x180xf32> to vector<128x180xf32>
    %11 = arith.addf %9, %10 : vector<128x180xf32>
    %cst_9 = arith.constant 0.000000e+00 : f32
    %12 = vector.broadcast %cst_9 : f32 to vector<128x180xf32>
    %13 = arith.maximumf %11, %12 : vector<128x180xf32>
    %14 = arith.maximumf %7, %13 : vector<128x180xf32>
    %15 = arith.truncf %14 : vector<128x180xf32> to vector<128x180xbf16>
    %c0_10 = arith.constant 0 : index
    %c0_11 = arith.constant 0 : index
    %c0_12 = arith.constant 0 : index
    %16 = vector.load %arg5[%c0_10, %c0_11, %c0_12] : memref<2x180x90xbf16, #tpu.memory_space<vmem>>, vector<1x180x90xbf16>
    %17 = vector.shape_cast %16 : vector<1x180x90xbf16> to vector<180x90xbf16>
    %cst_13 = arith.constant dense<0.000000e+00> : vector<128x90xf32>
    %18 = tpu.matmul %15, %17, %cst_13 {dimension_numbers = #tpu.dot_dimension_numbers<[1], [0], [0], [1], [0, 0, 1, 1], [], []>} : vector<128x180xbf16>, vector<180x90xbf16>, vector<128x90xf32> -> vector<128x90xf32>
    %c1 = arith.constant 1 : index
    %c0_14 = arith.constant 0 : index
    %c0_15 = arith.constant 0 : index
    %19 = vector.load %arg5[%c1, %c0_14, %c0_15] : memref<2x180x90xbf16, #tpu.memory_space<vmem>>, vector<1x180x90xbf16>
    %20 = vector.shape_cast %19 : vector<1x180x90xbf16> to vector<180x90xbf16>
    %cst_16 = arith.constant dense<0.000000e+00> : vector<128x90xf32>
    %21 = tpu.matmul %15, %20, %cst_16 {dimension_numbers = #tpu.dot_dimension_numbers<[1], [0], [0], [1], [0, 0, 1, 1], [], []>} : vector<128x180xbf16>, vector<180x90xbf16>, vector<128x90xf32> -> vector<128x90xf32>
    %22 = arith.maximumf %18, %21 : vector<128x90xf32>
    %23 = arith.truncf %22 : vector<128x90xf32> to vector<128x90xbf16>
    %c0_17 = arith.constant 0 : index
    %c0_18 = arith.constant 0 : index
    %24 = vector.load %arg16[%c0_17, %c0_18] : memref<136x90xbf16, #tpu.memory_space<vmem>>, vector<128x90xbf16>
    tpu.vector_store %arg16[%c0_17, %c0_18], %23 {strides = array<i32>} : memref<136x90xbf16, #tpu.memory_space<vmem>>, vector<128x90xbf16>,
    %cst_19 = arith.constant 0.000000e+00 : bf16
    %25 = vector.broadcast %cst_19 : bf16 to vector<8x90xbf16>
    %c128 = arith.constant 128 : index
    %c0_20 = arith.constant 0 : index
    %26 = vector.load %arg16[%c128, %c0_20] : memref<136x90xbf16, #tpu.memory_space<vmem>>, vector<8x90xbf16>
    tpu.vector_store %arg16[%c128, %c0_20], %25 {strides = array<i32>} : memref<136x90xbf16, #tpu.memory_space<vmem>>, vector<8x90xbf16>,
    %c0_21 = arith.constant 0 : index
    %c0_22 = arith.constant 0 : index
    %27 = vector.load %arg16[%c0_21, %c0_22] : memref<136x90xbf16, #tpu.memory_space<vmem>>, vector<128x90xbf16>
    %c0_23 = arith.constant 0 : index
    %c0_24 = arith.constant 0 : index
    %c0_25 = arith.constant 0 : index
    %28 = vector.load %arg6[%c0_23, %c0_24, %c0_25] : memref<3x90x208xbf16, #tpu.memory_space<vmem>>, vector<1x90x208xbf16>
    %29 = vector.shape_cast %28 : vector<1x90x208xbf16> to vector<90x208xbf16>
    %cst_26 = arith.constant dense<0.000000e+00> : vector<128x208xf32>
    %30 = tpu.matmul %27, %29, %cst_26 {dimension_numbers = #tpu.dot_dimension_numbers<[1], [0], [0], [1], [0, 0, 1, 1], [], []>} : vector<128x90xbf16>, vector<90x208xbf16>, vector<128x208xf32> -> vector<128x208xf32>
    %c1_27 = arith.constant 1 : index
    %c0_28 = arith.constant 0 : index
    %31 = vector.load %arg16[%c1_27, %c0_28] : memref<136x90xbf16, #tpu.memory_space<vmem>>, vector<128x90xbf16>
    %c1_29 = arith.constant 1 : index
    %c0_30 = arith.constant 0 : index
    %c0_31 = arith.constant 0 : index
    %32 = vector.load %arg6[%c1_29, %c0_30, %c0_31] : memref<3x90x208xbf16, #tpu.memory_space<vmem>>, vector<1x90x208xbf16>
    %33 = vector.shape_cast %32 : vector<1x90x208xbf16> to vector<90x208xbf16>
    %cst_32 = arith.constant dense<0.000000e+00> : vector<128x208xf32>
    %34 = tpu.matmul %31, %33, %cst_32 {dimension_numbers = #tpu.dot_dimension_numbers<[1], [0], [0], [1], [0, 0, 1, 1], [], []>} : vector<128x90xbf16>, vector<90x208xbf16>, vector<128x208xf32> -> vector<128x208xf32>
    %35 = arith.addf %30, %34 : vector<128x208xf32>
    %c2 = arith.constant 2 : index
    %c0_33 = arith.constant 0 : index
    %36 = vector.load %arg16[%c2, %c0_33] : memref<136x90xbf16, #tpu.memory_space<vmem>>, vector<128x90xbf16>
    %c2_34 = arith.constant 2 : index
    %c0_35 = arith.constant 0 : index
    %c0_36 = arith.constant 0 : index
    %37 = vector.load %arg6[%c2_34, %c0_35, %c0_36] : memref<3x90x208xbf16, #tpu.memory_space<vmem>>, vector<1x90x208xbf16>
    %38 = vector.shape_cast %37 : vector<1x90x208xbf16> to vector<90x208xbf16>
    %cst_37 = arith.constant dense<0.000000e+00> : vector<128x208xf32>
    %39 = tpu.matmul %36, %38, %cst_37 {dimension_numbers = #tpu.dot_dimension_numbers<[1], [0], [0], [1], [0, 0, 1, 1], [], []>} : vector<128x90xbf16>, vector<90x208xbf16>, vector<128x208xf32> -> vector<128x208xf32>
    %40 = arith.addf %35, %39 : vector<128x208xf32>
    %c0_38 = arith.constant 0 : index
    %c0_39 = arith.constant 0 : index
    %41 = vector.load %arg7[%c0_38, %c0_39] : memref<1x208xf32, #tpu.memory_space<vmem>>, vector<1x208xf32>
    %42 = vector.broadcast %41 : vector<1x208xf32> to vector<128x208xf32>
    %43 = arith.addf %40, %42 : vector<128x208xf32>
    %cst_40 = arith.constant 0.000000e+00 : f32
    %44 = vector.broadcast %cst_40 : f32 to vector<128x208xf32>
    %45 = arith.maximumf %43, %44 : vector<128x208xf32>
    %46 = vector.shape_cast %45 : vector<128x208xf32> to vector<8x16x208xf32>
    %47 = arith.truncf %46 : vector<8x16x208xf32> to vector<8x16x208xbf16>
    %c0_41 = arith.constant 0 : index
    %c0_42 = arith.constant 0 : index
    %c0_43 = arith.constant 0 : index
    %48 = vector.load %arg17[%c0_41, %c0_42, %c0_43] : memref<8x16x208xbf16, #tpu.memory_space<vmem>>, vector<8x16x208xbf16>
    tpu.vector_store %arg17[%c0_41, %c0_42, %c0_43], %47 {strides = array<i32>} : memref<8x16x208xbf16, #tpu.memory_space<vmem>>, vector<8x16x208xbf16>,
    %c0_44 = arith.constant 0 : index
    %c0_45 = arith.constant 0 : index
    %c0_46 = arith.constant 0 : index
    %49 = vector.load %arg8[%c0_44, %c0_45, %c0_46] : memref<2x208x96xbf16, #tpu.memory_space<vmem>>, vector<1x208x96xbf16>
    %50 = vector.shape_cast %49 : vector<1x208x96xbf16> to vector<208x96xbf16>
    %c1_47 = arith.constant 1 : index
    %c0_48 = arith.constant 0 : index
    %c0_49 = arith.constant 0 : index
    %51 = vector.load %arg8[%c1_47, %c0_48, %c0_49] : memref<2x208x96xbf16, #tpu.memory_space<vmem>>, vector<1x208x96xbf16>
    %52 = vector.shape_cast %51 : vector<1x208x96xbf16> to vector<208x96xbf16>
    %cst_50 = arith.constant 0.000000e+00 : f32
    %53 = vector.broadcast %cst_50 : f32 to vector<8x128xf32>
    %c0_51 = arith.constant 0 : index
    %c0_52 = arith.constant 0 : index
    %c0_53 = arith.constant 0 : index
    %54 = vector.load %arg17[%c0_51, %c0_52, %c0_53] : memref<8x16x208xbf16, #tpu.memory_space<vmem>>, vector<8x1x208xbf16>
    %55 = vector.shape_cast %54 : vector<8x1x208xbf16> to vector<8x208xbf16>
    %c0_54 = arith.constant 0 : index
    %c1_55 = arith.constant 1 : index
    %c0_56 = arith.constant 0 : index
    %56 = vector.load %arg17[%c0_54, %c1_55, %c0_56] : memref<8x16x208xbf16, #tpu.memory_space<vmem>>, vector<8x1x208xbf16>
    %57 = vector.shape_cast %56 : vector<8x1x208xbf16> to vector<8x208xbf16>
    %58 = arith.maximumf %55, %57 : vector<8x208xbf16>
    %cst_57 = arith.constant dense<0.000000e+00> : vector<8x96xf32>
    %59 = tpu.matmul %58, %50, %cst_57 {dimension_numbers = #tpu.dot_dimension_numbers<[1], [0], [0], [1], [0, 0, 1, 1], [], []>} : vector<8x208xbf16>, vector<208x96xbf16>, vector<8x96xf32> -> vector<8x96xf32>
    %cst_58 = arith.constant dense<0.000000e+00> : vector<8x96xf32>
    %60 = tpu.matmul %58, %52, %cst_58 {dimension_numbers = #tpu.dot_dimension_numbers<[1], [0], [0], [1], [0, 0, 1, 1], [], []>} : vector<8x208xbf16>, vector<208x96xbf16>, vector<8x96xf32> -> vector<8x96xf32>
    %61 = arith.maximumf %59, %60 : vector<8x96xf32>
    %62 = arith.truncf %61 : vector<8x96xf32> to vector<8x96xbf16>
    %c0_59 = arith.constant 0 : index
    %c0_60 = arith.constant 0 : index
    %c0_61 = arith.constant 0 : index
    %63 = vector.load %arg9[%c0_59, %c0_60, %c0_61] : memref<6x96x128xbf16, #tpu.memory_space<vmem>>, vector<1x96x128xbf16>
    %64 = vector.shape_cast %63 : vector<1x96x128xbf16> to vector<96x128xbf16>
    %cst_62 = arith.constant dense<0.000000e+00> : vector<8x128xf32>
    %65 = tpu.matmul %62, %64, %cst_62 {dimension_numbers = #tpu.dot_dimension_numbers<[1], [0], [0], [1], [0, 0, 1, 1], [], []>} : vector<8x96xbf16>, vector<96x128xbf16>, vector<8x128xf32> -> vector<8x128xf32>
    %66 = arith.addf %53, %65 : vector<8x128xf32>
    %c0_63 = arith.constant 0 : index
    %c2_64 = arith.constant 2 : index
    %c0_65 = arith.constant 0 : index
    %67 = vector.load %arg17[%c0_63, %c2_64, %c0_65] : memref<8x16x208xbf16, #tpu.memory_space<vmem>>, vector<8x1x208xbf16>
    %68 = vector.shape_cast %67 : vector<8x1x208xbf16> to vector<8x208xbf16>
    %c0_66 = arith.constant 0 : index
    %c3 = arith.constant 3 : index
    %c0_67 = arith.constant 0 : index
    %69 = vector.load %arg17[%c0_66, %c3, %c0_67] : memref<8x16x208xbf16, #tpu.memory_space<vmem>>, vector<8x1x208xbf16>
    %70 = vector.shape_cast %69 : vector<8x1x208xbf16> to vector<8x208xbf16>
    %71 = arith.maximumf %68, %70 : vector<8x208xbf16>
    %cst_68 = arith.constant dense<0.000000e+00> : vector<8x96xf32>
    %72 = tpu.matmul %71, %50, %cst_68 {dimension_numbers = #tpu.dot_dimension_numbers<[1], [0], [0], [1], [0, 0, 1, 1], [], []>} : vector<8x208xbf16>, vector<208x96xbf16>, vector<8x96xf32> -> vector<8x96xf32>
    %cst_69 = arith.constant dense<0.000000e+00> : vector<8x96xf32>
    %73 = tpu.matmul %71, %52, %cst_69 {dimension_numbers = #tpu.dot_dimension_numbers<[1], [0], [0], [1], [0, 0, 1, 1], [], []>} : vector<8x208xbf16>, vector<208x96xbf16>, vector<8x96xf32> -> vector<8x96xf32>
    %74 = arith.maximumf %72, %73 : vector<8x96xf32>
    %75 = arith.truncf %74 : vector<8x96xf32> to vector<8x96xbf16>
    %c1_70 = arith.constant 1 : index
    %c0_71 = arith.constant 0 : index
    %c0_72 = arith.constant 0 : index
    %76 = vector.load %arg9[%c1_70, %c0_71, %c0_72] : memref<6x96x128xbf16, #tpu.memory_space<vmem>>, vector<1x96x128xbf16>
    %77 = vector.shape_cast %76 : vector<1x96x128xbf16> to vector<96x128xbf16>
    %cst_73 = arith.constant dense<0.000000e+00> : vector<8x128xf32>
    %78 = tpu.matmul %75, %77, %cst_73 {dimension_numbers = #tpu.dot_dimension_numbers<[1], [0], [0], [1], [0, 0, 1, 1], [], []>} : vector<8x96xbf16>, vector<96x128xbf16>, vector<8x128xf32> -> vector<8x128xf32>
    %79 = arith.addf %66, %78 : vector<8x128xf32>
    %c0_74 = arith.constant 0 : index
    %c4 = arith.constant 4 : index
    %c0_75 = arith.constant 0 : index
    %80 = vector.load %arg17[%c0_74, %c4, %c0_75] : memref<8x16x208xbf16, #tpu.memory_space<vmem>>, vector<8x1x208xbf16>
    %81 = vector.shape_cast %80 : vector<8x1x208xbf16> to vector<8x208xbf16>
    %c0_76 = arith.constant 0 : index
    %c5 = arith.constant 5 : index
    %c0_77 = arith.constant 0 : index
    %82 = vector.load %arg17[%c0_76, %c5, %c0_77] : memref<8x16x208xbf16, #tpu.memory_space<vmem>>, vector<8x1x208xbf16>
    %83 = vector.shape_cast %82 : vector<8x1x208xbf16> to vector<8x208xbf16>
    %84 = arith.maximumf %81, %83 : vector<8x208xbf16>
    %cst_78 = arith.constant dense<0.000000e+00> : vector<8x96xf32>
    %85 = tpu.matmul %84, %50, %cst_78 {dimension_numbers = #tpu.dot_dimension_numbers<[1], [0], [0], [1], [0, 0, 1, 1], [], []>} : vector<8x208xbf16>, vector<208x96xbf16>, vector<8x96xf32> -> vector<8x96xf32>
    %cst_79 = arith.constant dense<0.000000e+00> : vector<8x96xf32>
    %86 = tpu.matmul %84, %52, %cst_79 {dimension_numbers = #tpu.dot_dimension_numbers<[1], [0], [0], [1], [0, 0, 1, 1], [], []>} : vector<8x208xbf16>, vector<208x96xbf16>, vector<8x96xf32> -> vector<8x96xf32>
    %87 = arith.maximumf %85, %86 : vector<8x96xf32>
    %88 = arith.truncf %87 : vector<8x96xf32> to vector<8x96xbf16>
    %c2_80 = arith.constant 2 : index
    %c0_81 = arith.constant 0 : index
    %c0_82 = arith.constant 0 : index
    %89 = vector.load %arg9[%c2_80, %c0_81, %c0_82] : memref<6x96x128xbf16, #tpu.memory_space<vmem>>, vector<1x96x128xbf16>
    %90 = vector.shape_cast %89 : vector<1x96x128xbf16> to vector<96x128xbf16>
    %cst_83 = arith.constant dense<0.000000e+00> : vector<8x128xf32>
    %91 = tpu.matmul %88, %90, %cst_83 {dimension_numbers = #tpu.dot_dimension_numbers<[1], [0], [0], [1], [0, 0, 1, 1], [], []>} : vector<8x96xbf16>, vector<96x128xbf16>, vector<8x128xf32> -> vector<8x128xf32>
    %92 = arith.addf %79, %91 : vector<8x128xf32>
    %c0_84 = arith.constant 0 : index
    %c6 = arith.constant 6 : index
    %c0_85 = arith.constant 0 : index
    %93 = vector.load %arg17[%c0_84, %c6, %c0_85] : memref<8x16x208xbf16, #tpu.memory_space<vmem>>, vector<8x1x208xbf16>
    %94 = vector.shape_cast %93 : vector<8x1x208xbf16> to vector<8x208xbf16>
    %c0_86 = arith.constant 0 : index
    %c7 = arith.constant 7 : index
    %c0_87 = arith.constant 0 : index
    %95 = vector.load %arg17[%c0_86, %c7, %c0_87] : memref<8x16x208xbf16, #tpu.memory_space<vmem>>, vector<8x1x208xbf16>
    %96 = vector.shape_cast %95 : vector<8x1x208xbf16> to vector<8x208xbf16>
    %97 = arith.maximumf %94, %96 : vector<8x208xbf16>
    %cst_88 = arith.constant dense<0.000000e+00> : vector<8x96xf32>
    %98 = tpu.matmul %97, %50, %cst_88 {dimension_numbers = #tpu.dot_dimension_numbers<[1], [0], [0], [1], [0, 0, 1, 1], [], []>} : vector<8x208xbf16>, vector<208x96xbf16>, vector<8x96xf32> -> vector<8x96xf32>
    %cst_89 = arith.constant dense<0.000000e+00> : vector<8x96xf32>
    %99 = tpu.matmul %97, %52, %cst_89 {dimension_numbers = #tpu.dot_dimension_numbers<[1], [0], [0], [1], [0, 0, 1, 1], [], []>} : vector<8x208xbf16>, vector<208x96xbf16>, vector<8x96xf32> -> vector<8x96xf32>
    %100 = arith.maximumf %98, %99 : vector<8x96xf32>
    %101 = arith.truncf %100 : vector<8x96xf32> to vector<8x96xbf16>
    %c3_90 = arith.constant 3 : index
    %c0_91 = arith.constant 0 : index
    %c0_92 = arith.constant 0 : index
    %102 = vector.load %arg9[%c3_90, %c0_91, %c0_92] : memref<6x96x128xbf16, #tpu.memory_space<vmem>>, vector<1x96x128xbf16>
    %103 = vector.shape_cast %102 : vector<1x96x128xbf16> to vector<96x128xbf16>
    %cst_93 = arith.constant dense<0.000000e+00> : vector<8x128xf32>
    %104 = tpu.matmul %101, %103, %cst_93 {dimension_numbers = #tpu.dot_dimension_numbers<[1], [0], [0], [1], [0, 0, 1, 1], [], []>} : vector<8x96xbf16>, vector<96x128xbf16>, vector<8x128xf32> -> vector<8x128xf32>
    %105 = arith.addf %92, %104 : vector<8x128xf32>
    %c0_94 = arith.constant 0 : index
    %c8 = arith.constant 8 : index
    %c0_95 = arith.constant 0 : index
    %106 = vector.load %arg17[%c0_94, %c8, %c0_95] : memref<8x16x208xbf16, #tpu.memory_space<vmem>>, vector<8x1x208xbf16>
    %107 = vector.shape_cast %106 : vector<8x1x208xbf16> to vector<8x208xbf16>
    %c0_96 = arith.constant 0 : index
    %c9 = arith.constant 9 : index
    %c0_97 = arith.constant 0 : index
    %108 = vector.load %arg17[%c0_96, %c9, %c0_97] : memref<8x16x208xbf16, #tpu.memory_space<vmem>>, vector<8x1x208xbf16>
    %109 = vector.shape_cast %108 : vector<8x1x208xbf16> to vector<8x208xbf16>
    %110 = arith.maximumf %107, %109 : vector<8x208xbf16>
    %cst_98 = arith.constant dense<0.000000e+00> : vector<8x96xf32>
    %111 = tpu.matmul %110, %50, %cst_98 {dimension_numbers = #tpu.dot_dimension_numbers<[1], [0], [0], [1], [0, 0, 1, 1], [], []>} : vector<8x208xbf16>, vector<208x96xbf16>, vector<8x96xf32> -> vector<8x96xf32>
    %cst_99 = arith.constant dense<0.000000e+00> : vector<8x96xf32>
    %112 = tpu.matmul %110, %52, %cst_99 {dimension_numbers = #tpu.dot_dimension_numbers<[1], [0], [0], [1], [0, 0, 1, 1], [], []>} : vector<8x208xbf16>, vector<208x96xbf16>, vector<8x96xf32> -> vector<8x96xf32>
    %113 = arith.maximumf %111, %112 : vector<8x96xf32>
    %114 = arith.truncf %113 : vector<8x96xf32> to vector<8x96xbf16>
    %c4_100 = arith.constant 4 : index
    %c0_101 = arith.constant 0 : index
    %c0_102 = arith.constant 0 : index
    %115 = vector.load %arg9[%c4_100, %c0_101, %c0_102] : memref<6x96x128xbf16, #tpu.memory_space<vmem>>, vector<1x96x128xbf16>
    %116 = vector.shape_cast %115 : vector<1x96x128xbf16> to vector<96x128xbf16>
    %cst_103 = arith.constant dense<0.000000e+00> : vector<8x128xf32>
    %117 = tpu.matmul %114, %116, %cst_103 {dimension_numbers = #tpu.dot_dimension_numbers<[1], [0], [0], [1], [0, 0, 1, 1], [], []>} : vector<8x96xbf16>, vector<96x128xbf16>, vector<8x128xf32> -> vector<8x128xf32>
    %118 = arith.addf %105, %117 : vector<8x128xf32>
    %c0_104 = arith.constant 0 : index
    %c10 = arith.constant 10 : index
    %c0_105 = arith.constant 0 : index
    %119 = vector.load %arg17[%c0_104, %c10, %c0_105] : memref<8x16x208xbf16, #tpu.memory_space<vmem>>, vector<8x1x208xbf16>
    %120 = vector.shape_cast %119 : vector<8x1x208xbf16> to vector<8x208xbf16>
    %c0_106 = arith.constant 0 : index
    %c11 = arith.constant 11 : index
    %c0_107 = arith.constant 0 : index
    %121 = vector.load %arg17[%c0_106, %c11, %c0_107] : memref<8x16x208xbf16, #tpu.memory_space<vmem>>, vector<8x1x208xbf16>
    %122 = vector.shape_cast %121 : vector<8x1x208xbf16> to vector<8x208xbf16>
    %123 = arith.maximumf %120, %122 : vector<8x208xbf16>
    %cst_108 = arith.constant dense<0.000000e+00> : vector<8x96xf32>
    %124 = tpu.matmul %123, %50, %cst_108 {dimension_numbers = #tpu.dot_dimension_numbers<[1], [0], [0], [1], [0, 0, 1, 1], [], []>} : vector<8x208xbf16>, vector<208x96xbf16>, vector<8x96xf32> -> vector<8x96xf32>
    %cst_109 = arith.constant dense<0.000000e+00> : vector<8x96xf32>
    %125 = tpu.matmul %123, %52, %cst_109 {dimension_numbers = #tpu.dot_dimension_numbers<[1], [0], [0], [1], [0, 0, 1, 1], [], []>} : vector<8x208xbf16>, vector<208x96xbf16>, vector<8x96xf32> -> vector<8x96xf32>
    %126 = arith.maximumf %124, %125 : vector<8x96xf32>
    %127 = arith.truncf %126 : vector<8x96xf32> to vector<8x96xbf16>
    %c5_110 = arith.constant 5 : index
    %c0_111 = arith.constant 0 : index
    %c0_112 = arith.constant 0 : index
    %128 = vector.load %arg9[%c5_110, %c0_111, %c0_112] : memref<6x96x128xbf16, #tpu.memory_space<vmem>>, vector<1x96x128xbf16>
    %129 = vector.shape_cast %128 : vector<1x96x128xbf16> to vector<96x128xbf16>
    %cst_113 = arith.constant dense<0.000000e+00> : vector<8x128xf32>
    %130 = tpu.matmul %127, %129, %cst_113 {dimension_numbers = #tpu.dot_dimension_numbers<[1], [0], [0], [1], [0, 0, 1, 1], [], []>} : vector<8x96xbf16>, vector<96x128xbf16>, vector<8x128xf32> -> vector<8x128xf32>
    %131 = arith.addf %118, %130 : vector<8x128xf32>
    %c0_114 = arith.constant 0 : index
    %c0_115 = arith.constant 0 : index
    %132 = vector.load %arg10[%c0_114, %c0_115] : memref<1x128xf32, #tpu.memory_space<vmem>>, vector<1x128xf32>
    %133 = vector.broadcast %132 : vector<1x128xf32> to vector<8x128xf32>
    %134 = arith.addf %131, %133 : vector<8x128xf32>
    %cst_116 = arith.constant 0.000000e+00 : f32
    %135 = vector.broadcast %cst_116 : f32 to vector<8x128xf32>
    %136 = arith.maximumf %134, %135 : vector<8x128xf32>
    %137 = arith.truncf %136 : vector<8x128xf32> to vector<8x128xbf16>
    %c0_117 = arith.constant 0 : index
    %c0_118 = arith.constant 0 : index
    %138 = vector.load %arg11[%c0_117, %c0_118] : memref<128x128xbf16, #tpu.memory_space<vmem>>, vector<128x128xbf16>
    %cst_119 = arith.constant dense<0.000000e+00> : vector<8x128xf32>
    %139 = tpu.matmul %137, %138, %cst_119 {dimension_numbers = #tpu.dot_dimension_numbers<[1], [0], [0], [1], [0, 0, 1, 1], [], []>} : vector<8x128xbf16>, vector<128x128xbf16>, vector<8x128xf32> -> vector<8x128xf32>
    %c0_120 = arith.constant 0 : index
    %c0_121 = arith.constant 0 : index
    %140 = vector.load %arg12[%c0_120, %c0_121] : memref<1x128xf32, #tpu.memory_space<vmem>>, vector<1x128xf32>
    %141 = vector.broadcast %140 : vector<1x128xf32> to vector<8x128xf32>
    %142 = arith.addf %139, %141 : vector<8x128xf32>
    %cst_122 = arith.constant 0.000000e+00 : f32
    %143 = vector.broadcast %cst_122 : f32 to vector<8x128xf32>
    %144 = arith.maximumf %142, %143 : vector<8x128xf32>
    %145 = arith.truncf %144 : vector<8x128xf32> to vector<8x128xbf16>
    %c0_123 = arith.constant 0 : index
    %c0_124 = arith.constant 0 : index
    %146 = vector.load %arg13[%c0_123, %c0_124] : memref<128x128xbf16, #tpu.memory_space<vmem>>, vector<128x128xbf16>
    %cst_125 = arith.constant dense<0.000000e+00> : vector<8x128xf32>
    %147 = tpu.matmul %145, %146, %cst_125 {dimension_numbers = #tpu.dot_dimension_numbers<[1], [0], [0], [1], [0, 0, 1, 1], [], []>} : vector<8x128xbf16>, vector<128x128xbf16>, vector<8x128xf32> -> vector<8x128xf32>
    %c0_126 = arith.constant 0 : index
    %c0_127 = arith.constant 0 : index
    %148 = vector.load %arg14[%c0_126, %c0_127] : memref<1x128xf32, #tpu.memory_space<vmem>>, vector<1x128xf32>
    %149 = vector.broadcast %148 : vector<1x128xf32> to vector<8x128xf32>
    %150 = arith.addf %147, %149 : vector<8x128xf32>
    %c0_128 = arith.constant 0 : index
    %c0_129 = arith.constant 0 : index
    %151 = vector.load %arg15[%c0_128, %c0_129] : memref<8x128xf32, #tpu.memory_space<vmem>>, vector<8x128xf32>
    tpu.vector_store %arg15[%c0_128, %c0_129], %150 {strides = array<i32>} : memref<8x128xf32, #tpu.memory_space<vmem>>, vector<8x128xf32>,
    return
  }
  func.func @transform_0(%arg0: i32) -> (i32, i32) {
    %c0_i32 = arith.constant 0 : i32
    %c0_i32_0 = arith.constant 0 : i32
    return %arg0, %c0_i32 : i32, i32
  }
  func.func @transform_1(%arg0: i32) -> (i32, i32) {
    %c0_i32 = arith.constant 0 : i32
    %c0_i32_0 = arith.constant 0 : i32
    return %arg0, %c0_i32 : i32, i32
  }
  func.func @transform_2(%arg0: i32) -> (i32, i32) {
    %c0_i32 = arith.constant 0 : i32
    %c0_i32_0 = arith.constant 0 : i32
    %c0_i32_1 = arith.constant 0 : i32
    return %c0_i32, %c0_i32_0 : i32, i32
  }
  func.func @transform_3(%arg0: i32) -> (i32, i32) {
    %c0_i32 = arith.constant 0 : i32
    %c0_i32_0 = arith.constant 0 : i32
    %c0_i32_1 = arith.constant 0 : i32
    return %c0_i32, %c0_i32_0 : i32, i32
  }
  func.func @transform_4(%arg0: i32) -> (i32, i32, i32) {
    %c0_i32 = arith.constant 0 : i32
    %c0_i32_0 = arith.constant 0 : i32
    %c0_i32_1 = arith.constant 0 : i32
    %c0_i32_2 = arith.constant 0 : i32
    return %c0_i32, %c0_i32_0, %c0_i32_1 : i32, i32, i32
  }
  func.func @transform_5(%arg0: i32) -> (i32, i32, i32) {
    %c0_i32 = arith.constant 0 : i32
    %c0_i32_0 = arith.constant 0 : i32
    %c0_i32_1 = arith.constant 0 : i32
    %c0_i32_2 = arith.constant 0 : i32
    return %c0_i32, %c0_i32_0, %c0_i32_1 : i32, i32, i32
  }
  func.func @transform_6(%arg0: i32) -> (i32, i32) {
    %c0_i32 = arith.constant 0 : i32
    %c0_i32_0 = arith.constant 0 : i32
    %c0_i32_1 = arith.constant 0 : i32
    return %c0_i32, %c0_i32_0 : i32, i32
  }
  func.func @transform_7(%arg0: i32) -> (i32, i32, i32) {
    %c0_i32 = arith.constant 0 : i32
    %c0_i32_0 = arith.constant 0 : i32
    %c0_i32_1 = arith.constant 0 : i32
    %c0_i32_2 = arith.constant 0 : i32
    return %c0_i32, %c0_i32_0, %c0_i32_1 : i32, i32, i32
  }
  func.func @transform_8(%arg0: i32) -> (i32, i32, i32) {
    %c0_i32 = arith.constant 0 : i32
    %c0_i32_0 = arith.constant 0 : i32
    %c0_i32_1 = arith.constant 0 : i32
    %c0_i32_2 = arith.constant 0 : i32
    return %c0_i32, %c0_i32_0, %c0_i32_1 : i32, i32, i32
  }
  func.func @transform_9(%arg0: i32) -> (i32, i32) {
    %c0_i32 = arith.constant 0 : i32
    %c0_i32_0 = arith.constant 0 : i32
    %c0_i32_1 = arith.constant 0 : i32
    return %c0_i32, %c0_i32_0 : i32, i32
  }
  func.func @transform_10(%arg0: i32) -> (i32, i32) {
    %c0_i32 = arith.constant 0 : i32
    %c0_i32_0 = arith.constant 0 : i32
    %c0_i32_1 = arith.constant 0 : i32
    return %c0_i32, %c0_i32_0 : i32, i32
  }
  func.func @transform_11(%arg0: i32) -> (i32, i32) {
    %c0_i32 = arith.constant 0 : i32
    %c0_i32_0 = arith.constant 0 : i32
    %c0_i32_1 = arith.constant 0 : i32
    return %c0_i32, %c0_i32_0 : i32, i32
  }
  func.func @transform_12(%arg0: i32) -> (i32, i32) {
    %c0_i32 = arith.constant 0 : i32
    %c0_i32_0 = arith.constant 0 : i32
    %c0_i32_1 = arith.constant 0 : i32
    return %c0_i32, %c0_i32_0 : i32, i32
  }
  func.func @transform_13(%arg0: i32) -> (i32, i32) {
    %c0_i32 = arith.constant 0 : i32
    %c0_i32_0 = arith.constant 0 : i32
    %c0_i32_1 = arith.constant 0 : i32
    return %c0_i32, %c0_i32_0 : i32, i32
  }
  func.func @transform_14(%arg0: i32) -> (i32, i32) {
    %c0_i32 = arith.constant 0 : i32
    %c0_i32_0 = arith.constant 0 : i32
    return %arg0, %c0_i32 : i32, i32
  }
}

</mosaic_0001>

<llo_original>
// kernel: net_forward.1
$region0: #{net_forward.1}
  #allocation0 [shape = 'u32[]', space=smem, size = 0x4, offset = 0x4, fixed_abs, tag = 'smem constant byte address 0x4 - core index']
  #allocation1 [shape = 'u32[144,128]{1,0:T(1,128)}', space=vmem, size = 0x12000, scoped, tag = 'internal scratch']
  #allocation2 [shape = 'bf16[136,90]{1,0:T(8,128)(2,1)}', space=vmem, size = 0x8800, scoped, tag = 'scratch operand']
  #allocation3 [shape = 'bf16[8,16,208]{2,1,0:T(8,128)(2,1)}', space=vmem, size = 0x10000, scoped, tag = 'scratch operand']
  %s0 = inlined_call_operand.vmem [shape: bf16[128,96], index: 0, kind: input, shape index: {}]
  %s1 = inlined_call_operand.vmem [shape: bf16[128,96], index: 1, kind: input, shape index: {}]
  %s2 = inlined_call_operand.vmem [shape: bf16[96,180], index: 2, kind: input, shape index: {}]
  %s3 = inlined_call_operand.vmem [shape: f32[1,180], index: 3, kind: input, shape index: {}]
  %s4 = inlined_call_operand.vmem [shape: bf16[2,180,90], index: 4, kind: input, shape index: {}]
  %s5 = inlined_call_operand.vmem [shape: bf16[3,90,208], index: 5, kind: input, shape index: {}]
  %s6 = inlined_call_operand.vmem [shape: f32[1,208], index: 6, kind: input, shape index: {}]
  %s7 = inlined_call_operand.vmem [shape: bf16[2,208,96], index: 7, kind: input, shape index: {}]
  %s8 = inlined_call_operand.vmem [shape: bf16[6,96,128], index: 8, kind: input, shape index: {}]
  %s9 = inlined_call_operand.vmem [shape: f32[1,128], index: 9, kind: input, shape index: {}]
  %s10 = inlined_call_operand.vmem [shape: bf16[128,128], index: 10, kind: input, shape index: {}]
  %s11 = inlined_call_operand.vmem [shape: f32[1,128], index: 11, kind: input, shape index: {}]
  %s12 = inlined_call_operand.vmem [shape: bf16[128,128], index: 12, kind: input, shape index: {}]
  %s13 = inlined_call_operand.vmem [shape: f32[1,128], index: 13, kind: input, shape index: {}]
  %s14 = inlined_call_operand.vmem [shape: f32[8,128], index: 14, kind: output, shape index: {}]
  %s15 = sld [smem:[#allocation0]]
  $region66: #{net_forward.1} parent=0
    _
  %s17 = ssub.s32 1, %s15
  %s18 = scalar_select 0, %s17, %s15
  // Predicated region
  $region2: #{net_forward.1} parent=0 // pred_check
    _
  $region3: #{net_forward.1} parent=0 // pred_check_branch
    %20 = sbr.rel (0) target = $region5
  $region4: #{net_forward.1} parent=0 // pred_region
    _
  $region5: #{net_forward.1} parent=0 // pred_fallthru
    _
  // Predicated region
  $region6: #{net_forward.1} parent=0 // pred_check
    _
  $region7: #{net_forward.1} parent=0 // pred_check_branch
    %22 = sbr.rel (0) target = $region9
  $region8: #{net_forward.1} parent=0 // pred_region
    _
  $region9: #{net_forward.1} parent=0 // pred_fallthru
    _
  // Predicated region
  $region10: #{net_forward.1} parent=0 // pred_check
    _
  $region11: #{net_forward.1} parent=0 // pred_check_branch
    %24 = sbr.rel (0) target = $region13
  $region12: #{net_forward.1} parent=0 // pred_region
    _
  $region13: #{net_forward.1} parent=0 // pred_fallthru
    _
  // Predicated region
  $region14: #{net_forward.1} parent=0 // pred_check
    _
  $region15: #{net_forward.1} parent=0 // pred_check_branch
    %26 = sbr.rel (0) target = $region17
  $region16: #{net_forward.1} parent=0 // pred_region
    _
  $region17: #{net_forward.1} parent=0 // pred_fallthru
    _
  // Predicated region
  $region18: #{net_forward.1} parent=0 // pred_check
    _
  $region19: #{net_forward.1} parent=0 // pred_check_branch
    %28 = sbr.rel (0) target = $region21
  $region20: #{net_forward.1} parent=0 // pred_region
    _
  $region21: #{net_forward.1} parent=0 // pred_fallthru
    _
  // Predicated region
  $region22: #{net_forward.1} parent=0 // pred_check
    _
  $region23: #{net_forward.1} parent=0 // pred_check_branch
    %30 = sbr.rel (0) target = $region25
  $region24: #{net_forward.1} parent=0 // pred_region
    _
  $region25: #{net_forward.1} parent=0 // pred_fallthru
    _
  // Predicated region
  $region26: #{net_forward.1} parent=0 // pred_check
    _
  $region27: #{net_forward.1} parent=0 // pred_check_branch
    %32 = sbr.rel (0) target = $region29
  $region28: #{net_forward.1} parent=0 // pred_region
    _
  $region29: #{net_forward.1} parent=0 // pred_fallthru
    _
  // Predicated region
  $region30: #{net_forward.1} parent=0 // pred_check
    _
  $region31: #{net_forward.1} parent=0 // pred_check_branch
    %34 = sbr.rel (0) target = $region33
  $region32: #{net_forward.1} parent=0 // pred_region
    _
  $region33: #{net_forward.1} parent=0 // pred_fallthru
    _
  // Predicated region
  $region34: #{net_forward.1} parent=0 // pred_check
    _
  $region35: #{net_forward.1} parent=0 // pred_check_branch
    %36 = sbr.rel (0) target = $region37
  $region36: #{net_forward.1} parent=0 // pred_region
    _
  $region37: #{net_forward.1} parent=0 // pred_fallthru
    _
  // Predicated region
  $region38: #{net_forward.1} parent=0 // pred_check
    _
  $region39: #{net_forward.1} parent=0 // pred_check_branch
    %38 = sbr.rel (0) target = $region41
  $region40: #{net_forward.1} parent=0 // pred_region
    _
  $region41: #{net_forward.1} parent=0 // pred_fallthru
    _
  // Predicated region
  $region42: #{net_forward.1} parent=0 // pred_check
    _
  $region43: #{net_forward.1} parent=0 // pred_check_branch
    %40 = sbr.rel (0) target = $region45
  $region44: #{net_forward.1} parent=0 // pred_region
    _
  $region45: #{net_forward.1} parent=0 // pred_fallthru
    _
  // Predicated region
  $region46: #{net_forward.1} parent=0 // pred_check
    _
  $region47: #{net_forward.1} parent=0 // pred_check_branch
    %42 = sbr.rel (0) target = $region49
  $region48: #{net_forward.1} parent=0 // pred_region
    _
  $region49: #{net_forward.1} parent=0 // pred_fallthru
    _
  // Predicated region
  $region50: #{net_forward.1} parent=0 // pred_check
    _
  $region51: #{net_forward.1} parent=0 // pred_check_branch
    %44 = sbr.rel (0) target = $region53
  $region52: #{net_forward.1} parent=0 // pred_region
    _
  $region53: #{net_forward.1} parent=0 // pred_fallthru
    _
  // Predicated region
  $region54: #{net_forward.1} parent=0 // pred_check
    _
  $region55: #{net_forward.1} parent=0 // pred_check_branch
    %46 = sbr.rel (0) target = $region57
  $region56: #{net_forward.1} parent=0 // pred_region
    _
  $region57: #{net_forward.1} parent=0 // pred_fallthru
    _
  %v48 = vld [vmem:[%s2] sm:$0xff]
  %v49 = vld [vmem:[%s2 + $0x8] sm:$0xff]
  %v50 = vld [vmem:[%s2 + $0x10] sm:$0xff]
  %v51 = vld [vmem:[%s2 + $0x18] sm:$0xff]
  %v52 = vld [vmem:[%s2 + $0x20] sm:$0xff]
  %v53 = vld [vmem:[%s2 + $0x28] sm:$0xff]
  %v54 = vld [vmem:[%s2 + $0x30] sm:$0xff]
  %v55 = vld [vmem:[%s2 + $0x38] sm:$0xff]
  %v56 = vld [vmem:[%s2 + $0x40] sm:$0xff]
  %v57 = vld [vmem:[%s2 + $0x48] sm:$0xff]
  %v58 = vld [vmem:[%s2 + $0x50] sm:$0xff]
  %v59 = vld [vmem:[%s2 + $0x58] sm:$0xff]
  %v60 = vld [vmem:[%s3] sm:$0x3]
  %v61 = vld [vmem:[%s0] sm:$0xf]
  %v62 = vld [vmem:[%s0 + $0x4] sm:$0xf]
  %v63 = vld [vmem:[%s0 + $0x8] sm:$0xf]
  %v64 = vld [vmem:[%s0 + $0xc] sm:$0xf]
  %v65 = vld [vmem:[%s0 + $0x10] sm:$0xf]
  %v66 = vld [vmem:[%s0 + $0x14] sm:$0xf]
  %v67 = vld [vmem:[%s0 + $0x18] sm:$0xf]
  %v68 = vld [vmem:[%s0 + $0x1c] sm:$0xf]
  %v69 = vld [vmem:[%s0 + $0x20] sm:$0xf]
  %v70 = vld [vmem:[%s0 + $0x24] sm:$0xf]
  %v71 = vld [vmem:[%s0 + $0x28] sm:$0xf]
  %v72 = vld [vmem:[%s0 + $0x2c] sm:$0xf]
  %v73 = vld [vmem:[%s0 + $0x30] sm:$0xf]
  %v74 = vld [vmem:[%s0 + $0x34] sm:$0xf]
  %v75 = vld [vmem:[%s0 + $0x38] sm:$0xf]
  %v76 = vld [vmem:[%s0 + $0x3c] sm:$0xf]
  %v78 = vlaneseq
  %v79 = vshrl.u32 %v78, 7
  %v80 = vsub.s32 0, %v79
  %v81 = vrot.slane %v60, %v80
  %v82 = vlaneseq
  %v83 = vshrl.u32 %v82, 7
  %v84 = vsub.s32 1, %v83
  %v85 = vrot.slane %v60, %v84
  %v104 = vunpack.c.l.b16 %v61
  %v105 = vunpack.c.l.b16 %v62
  %v106 = vunpack.c.l.b16 %v63
  %v107 = vunpack.c.l.b16 %v64
  %v108 = vunpack.c.l.b16 %v65
  %v109 = vunpack.c.l.b16 %v66
  %v110 = vunpack.c.l.b16 %v67
  %v111 = vunpack.c.l.b16 %v68
  %v112 = vunpack.c.l.b16 %v69
  %v113 = vunpack.c.l.b16 %v70
  %v114 = vunpack.c.l.b16 %v71
  %v115 = vunpack.c.l.b16 %v72
  %v116 = vunpack.c.l.b16 %v73
  %v117 = vunpack.c.l.b16 %v74
  %v118 = vunpack.c.l.b16 %v75
  %v119 = vunpack.c.l.b16 %v76
  %v120 = vpack.c.b16 %v105, %v104
  %v121 = vpack.c.b16 %v107, %v106
  %v122 = vpack.c.b16 %v109, %v108
  %v123 = vpack.c.b16 %v111, %v110
  %v124 = vpack.c.b16 %v113, %v112
  %v125 = vpack.c.b16 %v115, %v114
  %v126 = vpack.c.b16 %v117, %v116
  %v127 = vpack.c.b16 %v119, %v118
  %v140 = vunpack.c.l.b16 %v48
  %v141 = vunpack.c.h.b16 %v48
  %v142 = vunpack.c.l.b16 %v49
  %v143 = vunpack.c.h.b16 %v49
  %v144 = vunpack.c.l.b16 %v50
  %v145 = vunpack.c.h.b16 %v50
  %v146 = vunpack.c.l.b16 %v51
  %v147 = vunpack.c.h.b16 %v51
  %v148 = vunpack.c.l.b16 %v52
  %v149 = vunpack.c.h.b16 %v52
  %v150 = vunpack.c.l.b16 %v53
  %v151 = vunpack.c.h.b16 %v53
  %v152 = vunpack.c.l.b16 %v54
  %v153 = vunpack.c.h.b16 %v54
  %v154 = vunpack.c.l.b16 %v55
  %v155 = vunpack.c.h.b16 %v55
  %v156 = vunpack.c.l.b16 %v56
  %v157 = vunpack.c.h.b16 %v56
  %v158 = vunpack.c.l.b16 %v57
  %v159 = vunpack.c.h.b16 %v57
  %v160 = vunpack.c.l.b16 %v58
  %v161 = vunpack.c.h.b16 %v58
  %v162 = vunpack.c.l.b16 %v59
  %v163 = vunpack.c.h.b16 %v59
  %v164 = vpack.c.b16 %v142, %v140
  %v165 = vpack.c.b16 %v143, %v141
  %v166 = vpack.c.b16 %v146, %v144
  %v167 = vpack.c.b16 %v147, %v145
  %v168 = vpack.c.b16 %v150, %v148
  %v169 = vpack.c.b16 %v151, %v149
  %v170 = vpack.c.b16 %v154, %v152
  %v171 = vpack.c.b16 %v155, %v153
  %v172 = vpack.c.b16 %v158, %v156
  %v173 = vpack.c.b16 %v159, %v157
  %v174 = vpack.c.b16 %v162, %v160
  %v175 = vpack.c.b16 %v163, %v161
  %vm188 = vcmask 785408
  %v190 = vsel %vm188, %v120, 0
  %v193 = vsel %vm188, %v121, 0
  %v196 = vsel %vm188, %v122, 0
  %v199 = vsel %vm188, %v123, 0
  %v202 = vsel %vm188, %v124, 0
  %v205 = vsel %vm188, %v125, 0
  %v208 = vsel %vm188, %v126, 0
  %v211 = vsel %vm188, %v127, 0
  %213 = vmatprep.subr.bf16.mxu0 0
  %214 = vmatpush1.bf16.msra.mxu0 0
  %215 = vmatprep.subr.bf16.mxu0 0
  %216 = vmatpush1.bf16.msra.mxu0 0
  %217 = vmatprep.subr.bf16.mxu0 %v175
  %218 = vmatpush1.bf16.msra.mxu0 %v174
  %219 = vmatprep.subr.bf16.mxu0 %v173
  %220 = vmatpush1.bf16.msra.mxu0 %v172
  %221 = vmatprep.subr.bf16.mxu0 %v171
  %222 = vmatpush1.bf16.msra.mxu0 %v170
  %223 = vmatprep.subr.bf16.mxu0 %v169
  %224 = vmatpush1.bf16.msra.mxu0 %v168
  %225 = vmatprep.subr.bf16.mxu0 %v167
  %226 = vmatpush1.bf16.msra.mxu0 %v166
  %227 = vmatprep.subr.bf16.mxu0 %v165
  %228 = vmatpush1.bf16.msra.mxu0 %v164
  %229 = vmatprep.subr.bf16.mxu0 0
  %230 = vmatpush2.bf16.msra.mxu0 0
  %231 = vmatprep.subr.bf16.mxu0 0
  %232 = vmatpush2.bf16.msra.mxu0 0
  %233 = vmatprep.subr.bf16.mxu0 0
  %234 = vmatpush2.bf16.msra.mxu0 0
  %235 = vmatprep.subr.bf16.mxu0 0
  %236 = vmatpush2.bf16.msra.mxu0 0
  %237 = vmatprep.subr.bf16.mxu0 0
  %238 = vmatpush2.bf16.msra.mxu0 0
  %239 = vmatprep.subr.bf16.mxu0 0
  %240 = vmatpush2.bf16.msra.mxu0 0
  %241 = vmatprep.subr.bf16.mxu0 0
  %242 = vmatpush2.bf16.msra.mxu0 0
  %243 = vmatprep.subr.bf16.mxu0 0
  %244 = vmatpush2.bf16.msra.mxu0 0
  %245 = vmatprep.mubr.bf16.mxu0 0
  %246 = vmatmul.mubr.bf16.gmra.mxu0 %v190
  %v247 = vpop.f32.mrf.mxu0
  %v248 = vadd.f32 %v81, %v247
  %v249 = vpop.f32.mrf.mxu0
  %v250 = vadd.f32 %v85, %v249
  %v251 = vpop.f32.mrf.mxu0
  %v252 = vadd.f32 %v81, %v251
  %v253 = vpop.f32.mrf.mxu0
  %v254 = vadd.f32 %v85, %v253
  %255 = vmatprep.mubr.bf16.mxu0 0
  %256 = vmatmul.mubr.bf16.gmra.mxu0 %v193
  %v257 = vpop.f32.mrf.mxu0
  %v258 = vadd.f32 %v81, %v257
  %v259 = vpop.f32.mrf.mxu0
  %v260 = vadd.f32 %v85, %v259
  %v261 = vpop.f32.mrf.mxu0
  %v262 = vadd.f32 %v81, %v261
  %v263 = vpop.f32.mrf.mxu0
  %v264 = vadd.f32 %v85, %v263
  %265 = vmatprep.mubr.bf16.mxu0 0
  %266 = vmatmul.mubr.bf16.gmra.mxu0 %v196
  %v267 = vpop.f32.mrf.mxu0
  %v268 = vadd.f32 %v81, %v267
  %v269 = vpop.f32.mrf.mxu0
  %v270 = vadd.f32 %v85, %v269
  %v271 = vpop.f32.mrf.mxu0
  %v272 = vadd.f32 %v81, %v271
  %v273 = vpop.f32.mrf.mxu0
  %v274 = vadd.f32 %v85, %v273
  %275 = vmatprep.mubr.bf16.mxu0 0
  %276 = vmatmul.mubr.bf16.gmra.mxu0 %v199
  %v277 = vpop.f32.mrf.mxu0
  %v278 = vadd.f32 %v81, %v277
  %v279 = vpop.f32.mrf.mxu0
  %v280 = vadd.f32 %v85, %v279
  %v281 = vpop.f32.mrf.mxu0
  %v282 = vadd.f32 %v81, %v281
  %v283 = vpop.f32.mrf.mxu0
  %v284 = vadd.f32 %v85, %v283
  %285 = vmatprep.mubr.bf16.mxu0 0
  %286 = vmatmul.mubr.bf16.gmra.mxu0 %v202
  %v287 = vpop.f32.mrf.mxu0
  %v288 = vadd.f32 %v81, %v287
  %v289 = vpop.f32.mrf.mxu0
  %v290 = vadd.f32 %v85, %v289
  %v291 = vpop.f32.mrf.mxu0
  %v292 = vadd.f32 %v81, %v291
  %v293 = vpop.f32.mrf.mxu0
  %v294 = vadd.f32 %v85, %v293
  %295 = vmatprep.mubr.bf16.mxu0 0
  %296 = vmatmul.mubr.bf16.gmra.mxu0 %v205
  %v297 = vpop.f32.mrf.mxu0
  %v298 = vadd.f32 %v81, %v297
  %v299 = vpop.f32.mrf.mxu0
  %v300 = vadd.f32 %v85, %v299
  %v301 = vpop.f32.mrf.mxu0
  %v302 = vadd.f32 %v81, %v301
  %v303 = vpop.f32.mrf.mxu0
  %v304 = vadd.f32 %v85, %v303
  %305 = vmatprep.mubr.bf16.mxu0 0
  %306 = vmatmul.mubr.bf16.gmra.mxu0 %v208
  %v307 = vpop.f32.mrf.mxu0
  %v308 = vadd.f32 %v81, %v307
  %v309 = vpop.f32.mrf.mxu0
  %v310 = vadd.f32 %v85, %v309
  %v311 = vpop.f32.mrf.mxu0
  %v312 = vadd.f32 %v81, %v311
  %v313 = vpop.f32.mrf.mxu0
  %v314 = vadd.f32 %v85, %v313
  %315 = vmatprep.mubr.bf16.mxu0 0
  %316 = vmatmul.mubr.bf16.gmra.mxu0 %v211
  %v317 = vpop.f32.mrf.mxu0
  %v318 = vadd.f32 %v81, %v317
  %v319 = vpop.f32.mrf.mxu0
  %v320 = vadd.f32 %v85, %v319
  %v321 = vpop.f32.mrf.mxu0
  %v322 = vadd.f32 %v81, %v321
  %v323 = vpop.f32.mrf.mxu0
  %v324 = vadd.f32 %v85, %v323
  %325 = vdwg.mxu0
  %v326 = vmax.f32 %v248, 0.0
  %v327 = vmax.f32 %v250, 0.0
  %v328 = vmax.f32 %v252, 0.0
  %v329 = vmax.f32 %v254, 0.0
  %v330 = vmax.f32 %v258, 0.0
  %v331 = vmax.f32 %v260, 0.0
  %v332 = vmax.f32 %v262, 0.0
  %v333 = vmax.f32 %v264, 0.0
  %v334 = vmax.f32 %v268, 0.0
  %v335 = vmax.f32 %v270, 0.0
  %v336 = vmax.f32 %v272, 0.0
  %v337 = vmax.f32 %v274, 0.0
  %v338 = vmax.f32 %v278, 0.0
  %v339 = vmax.f32 %v280, 0.0
  %v340 = vmax.f32 %v282, 0.0
  %v341 = vmax.f32 %v284, 0.0
  %v342 = vmax.f32 %v288, 0.0
  %v343 = vmax.f32 %v290, 0.0
  %v344 = vmax.f32 %v292, 0.0
  %v345 = vmax.f32 %v294, 0.0
  %v346 = vmax.f32 %v298, 0.0
  %v347 = vmax.f32 %v300, 0.0
  %v348 = vmax.f32 %v302, 0.0
  %v349 = vmax.f32 %v304, 0.0
  %v350 = vmax.f32 %v308, 0.0
  %v351 = vmax.f32 %v310, 0.0
  %v352 = vmax.f32 %v312, 0.0
  %v353 = vmax.f32 %v314, 0.0
  %v354 = vmax.f32 %v318, 0.0
  %v355 = vmax.f32 %v320, 0.0
  %v356 = vmax.f32 %v322, 0.0
  %v357 = vmax.f32 %v324, 0.0
  %v358 = vld [vmem:[%s1] sm:$0xf]
  %v359 = vld [vmem:[%s1 + $0x4] sm:$0xf]
  %v360 = vld [vmem:[%s1 + $0x8] sm:$0xf]
  %v361 = vld [vmem:[%s1 + $0xc] sm:$0xf]
  %v362 = vld [vmem:[%s1 + $0x10] sm:$0xf]
  %v363 = vld [vmem:[%s1 + $0x14] sm:$0xf]
  %v364 = vld [vmem:[%s1 + $0x18] sm:$0xf]
  %v365 = vld [vmem:[%s1 + $0x1c] sm:$0xf]
  %v366 = vld [vmem:[%s1 + $0x20] sm:$0xf]
  %v367 = vld [vmem:[%s1 + $0x24] sm:$0xf]
  %v368 = vld [vmem:[%s1 + $0x28] sm:$0xf]
  %v369 = vld [vmem:[%s1 + $0x2c] sm:$0xf]
  %v370 = vld [vmem:[%s1 + $0x30] sm:$0xf]
  %v371 = vld [vmem:[%s1 + $0x34] sm:$0xf]
  %v372 = vld [vmem:[%s1 + $0x38] sm:$0xf]
  %v373 = vld [vmem:[%s1 + $0x3c] sm:$0xf]
  %v390 = vunpack.c.l.b16 %v358
  %v391 = vunpack.c.l.b16 %v359
  %v392 = vunpack.c.l.b16 %v360
  %v393 = vunpack.c.l.b16 %v361
  %v394 = vunpack.c.l.b16 %v362
  %v395 = vunpack.c.l.b16 %v363
  %v396 = vunpack.c.l.b16 %v364
  %v397 = vunpack.c.l.b16 %v365
  %v398 = vunpack.c.l.b16 %v366
  %v399 = vunpack.c.l.b16 %v367
  %v400 = vunpack.c.l.b16 %v368
  %v401 = vunpack.c.l.b16 %v369
  %v402 = vunpack.c.l.b16 %v370
  %v403 = vunpack.c.l.b16 %v371
  %v404 = vunpack.c.l.b16 %v372
  %v405 = vunpack.c.l.b16 %v373
  %v406 = vpack.c.b16 %v391, %v390
  %v407 = vpack.c.b16 %v393, %v392
  %v408 = vpack.c.b16 %v395, %v394
  %v409 = vpack.c.b16 %v397, %v396
  %v410 = vpack.c.b16 %v399, %v398
  %v411 = vpack.c.b16 %v401, %v400
  %v412 = vpack.c.b16 %v403, %v402
  %v413 = vpack.c.b16 %v405, %v404
  %v415 = vsel %vm188, %v406, 0
  %v418 = vsel %vm188, %v407, 0
  %v421 = vsel %vm188, %v408, 0
  %v424 = vsel %vm188, %v409, 0
  %v427 = vsel %vm188, %v410, 0
  %v430 = vsel %vm188, %v411, 0
  %v433 = vsel %vm188, %v412, 0
  %v436 = vsel %vm188, %v413, 0
  %438 = vmatprep.subr.bf16.mxu0 0
  %439 = vmatpush1.bf16.msra.mxu0 0
  %440 = vmatprep.subr.bf16.mxu0 0
  %441 = vmatpush1.bf16.msra.mxu0 0
  %442 = vmatprep.subr.bf16.mxu0 %v175
  %443 = vmatpush1.bf16.msra.mxu0 %v174
  %444 = vmatprep.subr.bf16.mxu0 %v173
  %445 = vmatpush1.bf16.msra.mxu0 %v172
  %446 = vmatprep.subr.bf16.mxu0 %v171
  %447 = vmatpush1.bf16.msra.mxu0 %v170
  %448 = vmatprep.subr.bf16.mxu0 %v169
  %449 = vmatpush1.bf16.msra.mxu0 %v168
  %450 = vmatprep.subr.bf16.mxu0 %v167
  %451 = vmatpush1.bf16.msra.mxu0 %v166
  %452 = vmatprep.subr.bf16.mxu0 %v165
  %453 = vmatpush1.bf16.msra.mxu0 %v164
  %454 = vmatprep.subr.bf16.mxu0 0
  %455 = vmatpush2.bf16.msra.mxu0 0
  %456 = vmatprep.subr.bf16.mxu0 0
  %457 = vmatpush2.bf16.msra.mxu0 0
  %458 = vmatprep.subr.bf16.mxu0 0
  %459 = vmatpush2.bf16.msra.mxu0 0
  %460 = vmatprep.subr.bf16.mxu0 0
  %461 = vmatpush2.bf16.msra.mxu0 0
  %462 = vmatprep.subr.bf16.mxu0 0
  %463 = vmatpush2.bf16.msra.mxu0 0
  %464 = vmatprep.subr.bf16.mxu0 0
  %465 = vmatpush2.bf16.msra.mxu0 0
  %466 = vmatprep.subr.bf16.mxu0 0
  %467 = vmatpush2.bf16.msra.mxu0 0
  %468 = vmatprep.subr.bf16.mxu0 0
  %469 = vmatpush2.bf16.msra.mxu0 0
  %470 = vmatprep.mubr.bf16.mxu0 0
  %471 = vmatmul.mubr.bf16.gmra.mxu0 %v415
  %v472 = vpop.f32.mrf.mxu0
  %v473 = vadd.f32 %v81, %v472
  %v474 = vpop.f32.mrf.mxu0
  %v475 = vadd.f32 %v85, %v474
  %v476 = vpop.f32.mrf.mxu0
  %v477 = vadd.f32 %v81, %v476
  %v478 = vpop.f32.mrf.mxu0
  %v479 = vadd.f32 %v85, %v478
  %480 = vmatprep.mubr.bf16.mxu0 0
  %481 = vmatmul.mubr.bf16.gmra.mxu0 %v418
  %v482 = vpop.f32.mrf.mxu0
  %v483 = vadd.f32 %v81, %v482
  %v484 = vpop.f32.mrf.mxu0
  %v485 = vadd.f32 %v85, %v484
  %v486 = vpop.f32.mrf.mxu0
  %v487 = vadd.f32 %v81, %v486
  %v488 = vpop.f32.mrf.mxu0
  %v489 = vadd.f32 %v85, %v488
  %490 = vmatprep.mubr.bf16.mxu0 0
  %491 = vmatmul.mubr.bf16.gmra.mxu0 %v421
  %v492 = vpop.f32.mrf.mxu0
  %v493 = vadd.f32 %v81, %v492
  %v494 = vpop.f32.mrf.mxu0
  %v495 = vadd.f32 %v85, %v494
  %v496 = vpop.f32.mrf.mxu0
  %v497 = vadd.f32 %v81, %v496
  %v498 = vpop.f32.mrf.mxu0
  %v499 = vadd.f32 %v85, %v498
  %500 = vmatprep.mubr.bf16.mxu0 0
  %501 = vmatmul.mubr.bf16.gmra.mxu0 %v424
  %v502 = vpop.f32.mrf.mxu0
  %v503 = vadd.f32 %v81, %v502
  %v504 = vpop.f32.mrf.mxu0
  %v505 = vadd.f32 %v85, %v504
  %v506 = vpop.f32.mrf.mxu0
  %v507 = vadd.f32 %v81, %v506
  %v508 = vpop.f32.mrf.mxu0
  %v509 = vadd.f32 %v85, %v508
  %510 = vmatprep.mubr.bf16.mxu0 0
  %511 = vmatmul.mubr.bf16.gmra.mxu0 %v427
  %v512 = vpop.f32.mrf.mxu0
  %v513 = vadd.f32 %v81, %v512
  %v514 = vpop.f32.mrf.mxu0
  %v515 = vadd.f32 %v85, %v514
  %v516 = vpop.f32.mrf.mxu0
  %v517 = vadd.f32 %v81, %v516
  %v518 = vpop.f32.mrf.mxu0
  %v519 = vadd.f32 %v85, %v518
  %520 = vmatprep.mubr.bf16.mxu0 0
  %521 = vmatmul.mubr.bf16.gmra.mxu0 %v430
  %v522 = vpop.f32.mrf.mxu0
  %v523 = vadd.f32 %v81, %v522
  %v524 = vpop.f32.mrf.mxu0
  %v525 = vadd.f32 %v85, %v524
  %v526 = vpop.f32.mrf.mxu0
  %v527 = vadd.f32 %v81, %v526
  %v528 = vpop.f32.mrf.mxu0
  %v529 = vadd.f32 %v85, %v528
  %530 = vmatprep.mubr.bf16.mxu0 0
  %531 = vmatmul.mubr.bf16.gmra.mxu0 %v433
  %v532 = vpop.f32.mrf.mxu0
  %v533 = vadd.f32 %v81, %v532
  %v534 = vpop.f32.mrf.mxu0
  %v535 = vadd.f32 %v85, %v534
  %v536 = vpop.f32.mrf.mxu0
  %v537 = vadd.f32 %v81, %v536
  %v538 = vpop.f32.mrf.mxu0
  %v539 = vadd.f32 %v85, %v538
  %540 = vmatprep.mubr.bf16.mxu0 0
  %541 = vmatmul.mubr.bf16.gmra.mxu0 %v436
  %v542 = vpop.f32.mrf.mxu0
  %v543 = vadd.f32 %v81, %v542
  %v544 = vpop.f32.mrf.mxu0
  %v545 = vadd.f32 %v85, %v544
  %v546 = vpop.f32.mrf.mxu0
  %v547 = vadd.f32 %v81, %v546
  %v548 = vpop.f32.mrf.mxu0
  %v549 = vadd.f32 %v85, %v548
  %550 = vdwg.mxu0
  %v551 = vmax.f32 %v473, 0.0
  %v552 = vmax.f32 %v475, 0.0
  %v553 = vmax.f32 %v477, 0.0
  %v554 = vmax.f32 %v479, 0.0
  %v555 = vmax.f32 %v483, 0.0
  %v556 = vmax.f32 %v485, 0.0
  %v557 = vmax.f32 %v487, 0.0
  %v558 = vmax.f32 %v489, 0.0
  %v559 = vmax.f32 %v493, 0.0
  %v560 = vmax.f32 %v495, 0.0
  %v561 = vmax.f32 %v497, 0.0
  %v562 = vmax.f32 %v499, 0.0
  %v563 = vmax.f32 %v503, 0.0
  %v564 = vmax.f32 %v505, 0.0
  %v565 = vmax.f32 %v507, 0.0
  %v566 = vmax.f32 %v509, 0.0
  %v567 = vmax.f32 %v513, 0.0
  %v568 = vmax.f32 %v515, 0.0
  %v569 = vmax.f32 %v517, 0.0
  %v570 = vmax.f32 %v519, 0.0
  %v571 = vmax.f32 %v523, 0.0
  %v572 = vmax.f32 %v525, 0.0
  %v573 = vmax.f32 %v527, 0.0
  %v574 = vmax.f32 %v529, 0.0
  %v575 = vmax.f32 %v533, 0.0
  %v576 = vmax.f32 %v535, 0.0
  %v577 = vmax.f32 %v537, 0.0
  %v578 = vmax.f32 %v539, 0.0
  %v579 = vmax.f32 %v543, 0.0
  %v580 = vmax.f32 %v545, 0.0
  %v581 = vmax.f32 %v547, 0.0
  %v582 = vmax.f32 %v549, 0.0
  %v583 = vmax.f32 %v326, %v551
  %v584 = vmax.f32 %v327, %v552
  %v585 = vmax.f32 %v328, %v553
  %v586 = vmax.f32 %v329, %v554
  %v587 = vmax.f32 %v330, %v555
  %v588 = vmax.f32 %v331, %v556
  %v589 = vmax.f32 %v332, %v557
  %v590 = vmax.f32 %v333, %v558
  %v591 = vmax.f32 %v334, %v559
  %v592 = vmax.f32 %v335, %v560
  %v593 = vmax.f32 %v336, %v561
  %v594 = vmax.f32 %v337, %v562
  %v595 = vmax.f32 %v338, %v563
  %v596 = vmax.f32 %v339, %v564
  %v597 = vmax.f32 %v340, %v565
  %v598 = vmax.f32 %v341, %v566
  %v599 = vmax.f32 %v342, %v567
  %v600 = vmax.f32 %v343, %v568
  %v601 = vmax.f32 %v344, %v569
  %v602 = vmax.f32 %v345, %v570
  %v603 = vmax.f32 %v346, %v571
  %v604 = vmax.f32 %v347, %v572
  %v605 = vmax.f32 %v348, %v573
  %v606 = vmax.f32 %v349, %v574
  %v607 = vmax.f32 %v350, %v575
  %v608 = vmax.f32 %v351, %v576
  %v609 = vmax.f32 %v352, %v577
  %v610 = vmax.f32 %v353, %v578
  %v611 = vmax.f32 %v354, %v579
  %v612 = vmax.f32 %v355, %v580
  %v613 = vmax.f32 %v356, %v581
  %v614 = vmax.f32 %v357, %v582
  %v615 = vpack.c.bf16 %v585, %v583
  %v616 = vpack.c.bf16 %v586, %v584
  %v617 = vpack.c.bf16 %v589, %v587
  %v618 = vpack.c.bf16 %v590, %v588
  %v619 = vpack.c.bf16 %v593, %v591
  %v620 = vpack.c.bf16 %v594, %v592
  %v621 = vpack.c.bf16 %v597, %v595
  %v622 = vpack.c.bf16 %v598, %v596
  %v623 = vpack.c.bf16 %v601, %v599
  %v624 = vpack.c.bf16 %v602, %v600
  %v625 = vpack.c.bf16 %v605, %v603
  %v626 = vpack.c.bf16 %v606, %v604
  %v627 = vpack.c.bf16 %v609, %v607
  %v628 = vpack.c.bf16 %v610, %v608
  %v629 = vpack.c.bf16 %v613, %v611
  %v630 = vpack.c.bf16 %v614, %v612
  %v631 = vld [vmem:[%s4] sm:$0xf]
  %v632 = vld [vmem:[%s4 + $0x4] sm:$0xf]
  %v633 = vld [vmem:[%s4 + $0x8] sm:$0xf]
  %v634 = vld [vmem:[%s4 + $0xc] sm:$0xf]
  %v635 = vld [vmem:[%s4 + $0x10] sm:$0xf]
  %v636 = vld [vmem:[%s4 + $0x14] sm:$0xf]
  %v637 = vld [vmem:[%s4 + $0x18] sm:$0xf]
  %v638 = vld [vmem:[%s4 + $0x1c] sm:$0xf]
  %v639 = vld [vmem:[%s4 + $0x20] sm:$0xf]
  %v640 = vld [vmem:[%s4 + $0x24] sm:$0xf]
  %v641 = vld [vmem:[%s4 + $0x28] sm:$0xf]
  %v642 = vld [vmem:[%s4 + $0x2c] sm:$0xf]
  %v643 = vld [vmem:[%s4 + $0x30] sm:$0xf]
  %v644 = vld [vmem:[%s4 + $0x34] sm:$0xf]
  %v645 = vld [vmem:[%s4 + $0x38] sm:$0xf]
  %v646 = vld [vmem:[%s4 + $0x3c] sm:$0xf]
  %v647 = vld [vmem:[%s4 + $0x40] sm:$0xf]
  %v648 = vld [vmem:[%s4 + $0x44] sm:$0xf]
  %v649 = vld [vmem:[%s4 + $0x48] sm:$0xf]
  %v650 = vld [vmem:[%s4 + $0x4c] sm:$0xf]
  %v651 = vld [vmem:[%s4 + $0x50] sm:$0xf]
  %v652 = vld [vmem:[%s4 + $0x54] sm:$0xf]
  %v653 = vld [vmem:[%s4 + $0x58] sm:$0x3]
  %v677 = vunpack.c.l.b16 %v631
  %v678 = vunpack.c.l.b16 %v632
  %v679 = vunpack.c.l.b16 %v633
  %v680 = vunpack.c.l.b16 %v634
  %v681 = vunpack.c.l.b16 %v635
  %v682 = vunpack.c.l.b16 %v636
  %v683 = vunpack.c.l.b16 %v637
  %v684 = vunpack.c.l.b16 %v638
  %v685 = vunpack.c.l.b16 %v639
  %v686 = vunpack.c.l.b16 %v640
  %v687 = vunpack.c.l.b16 %v641
  %v688 = vunpack.c.l.b16 %v642
  %v689 = vunpack.c.l.b16 %v643
  %v690 = vunpack.c.l.b16 %v644
  %v691 = vunpack.c.l.b16 %v645
  %v692 = vunpack.c.l.b16 %v646
  %v693 = vunpack.c.l.b16 %v647
  %v694 = vunpack.c.l.b16 %v648
  %v695 = vunpack.c.l.b16 %v649
  %v696 = vunpack.c.l.b16 %v650
  %v697 = vunpack.c.l.b16 %v651
  %v698 = vunpack.c.l.b16 %v652
  %v699 = vunpack.c.l.b16 %v653
  %v700 = vpack.c.b16 %v678, %v677
  %v701 = vpack.c.b16 %v680, %v679
  %v702 = vpack.c.b16 %v682, %v681
  %v703 = vpack.c.b16 %v684, %v683
  %v704 = vpack.c.b16 %v686, %v685
  %v705 = vpack.c.b16 %v688, %v687
  %v706 = vpack.c.b16 %v690, %v689
  %v707 = vpack.c.b16 %v692, %v691
  %v708 = vpack.c.b16 %v694, %v693
  %v709 = vpack.c.b16 %v696, %v695
  %v710 = vpack.c.b16 %v698, %v697
  %v711 = vpack.c.b16 %v699, %v699
  %vm723 = vcmask 424960
  %v725 = vsel %vm723, %v616, 0
  %v728 = vsel %vm723, %v618, 0
  %v731 = vsel %vm723, %v620, 0
  %v734 = vsel %vm723, %v622, 0
  %v737 = vsel %vm723, %v624, 0
  %v740 = vsel %vm723, %v626, 0
  %v743 = vsel %vm723, %v628, 0
  %v746 = vsel %vm723, %v630, 0
  %vm748 = vcmask 1041408
  %v750 = vsel %vm748, %v711, 0
  %752 = vmatprep.subr.bf16.mxu0 0
  %753 = vmatpush1.bf16.msra.mxu0 %v707
  %754 = vmatprep.subr.bf16.mxu0 0
  %755 = vmatpush1.bf16.msra.mxu0 %v706
  %756 = vmatprep.subr.bf16.mxu0 0
  %757 = vmatpush1.bf16.msra.mxu0 %v705
  %758 = vmatprep.subr.bf16.mxu0 0
  %759 = vmatpush1.bf16.msra.mxu0 %v704
  %760 = vmatprep.subr.bf16.mxu0 0
  %761 = vmatpush1.bf16.msra.mxu0 %v703
  %762 = vmatprep.subr.bf16.mxu0 0
  %763 = vmatpush1.bf16.msra.mxu0 %v702
  %764 = vmatprep.subr.bf16.mxu0 0
  %765 = vmatpush1.bf16.msra.mxu0 %v701
  %766 = vmatprep.subr.bf16.mxu0 0
  %767 = vmatpush1.bf16.msra.mxu0 %v700
  %768 = vmatprep.subr.bf16.mxu0 0
  %769 = vmatpush2.bf16.msra.mxu0 0
  %770 = vmatprep.subr.bf16.mxu0 0
  %771 = vmatpush2.bf16.msra.mxu0 0
  %772 = vmatprep.subr.bf16.mxu0 0
  %773 = vmatpush2.bf16.msra.mxu0 0
  %774 = vmatprep.subr.bf16.mxu0 0
  %775 = vmatpush2.bf16.msra.mxu0 0
  %776 = vmatprep.subr.bf16.mxu0 0
  %777 = vmatpush2.bf16.msra.mxu0 %v750
  %778 = vmatprep.subr.bf16.mxu0 0
  %779 = vmatpush2.bf16.msra.mxu0 %v710
  %780 = vmatprep.subr.bf16.mxu0 0
  %781 = vmatpush2.bf16.msra.mxu0 %v709
  %782 = vmatprep.subr.bf16.mxu0 0
  %783 = vmatpush2.bf16.msra.mxu0 %v708
  %784 = vmatprep.mubr.bf16.mxu0 %v725
  %785 = vmatmul.mubr.bf16.gmra.mxu0 %v615
  %v786 = vpop.f32.mrf.mxu0
  %v787 = vadd.f32 0.0, %v786
  %v788 = vpop.f32.mrf.mxu0
  %v789 = vpop.f32.mrf.mxu0
  %v790 = vadd.f32 0.0, %v789
  %v791 = vpop.f32.mrf.mxu0
  %792 = vmatprep.mubr.bf16.mxu0 %v728
  %793 = vmatmul.mubr.bf16.gmra.mxu0 %v617
  %v794 = vpop.f32.mrf.mxu0
  %v795 = vadd.f32 0.0, %v794
  %v796 = vpop.f32.mrf.mxu0
  %v797 = vpop.f32.mrf.mxu0
  %v798 = vadd.f32 0.0, %v797
  %v799 = vpop.f32.mrf.mxu0
  %800 = vmatprep.mubr.bf16.mxu0 %v731
  %801 = vmatmul.mubr.bf16.gmra.mxu0 %v619
  %v802 = vpop.f32.mrf.mxu0
  %v803 = vadd.f32 0.0, %v802
  %v804 = vpop.f32.mrf.mxu0
  %v805 = vpop.f32.mrf.mxu0
  %v806 = vadd.f32 0.0, %v805
  %v807 = vpop.f32.mrf.mxu0
  %808 = vmatprep.mubr.bf16.mxu0 %v734
  %809 = vmatmul.mubr.bf16.gmra.mxu0 %v621
  %v810 = vpop.f32.mrf.mxu0
  %v811 = vadd.f32 0.0, %v810
  %v812 = vpop.f32.mrf.mxu0
  %v813 = vpop.f32.mrf.mxu0
  %v814 = vadd.f32 0.0, %v813
  %v815 = vpop.f32.mrf.mxu0
  %816 = vmatprep.mubr.bf16.mxu0 %v737
  %817 = vmatmul.mubr.bf16.gmra.mxu0 %v623
  %v818 = vpop.f32.mrf.mxu0
  %v819 = vadd.f32 0.0, %v818
  %v820 = vpop.f32.mrf.mxu0
  %v821 = vpop.f32.mrf.mxu0
  %v822 = vadd.f32 0.0, %v821
  %v823 = vpop.f32.mrf.mxu0
  %824 = vmatprep.mubr.bf16.mxu0 %v740
  %825 = vmatmul.mubr.bf16.gmra.mxu0 %v625
  %v826 = vpop.f32.mrf.mxu0
  %v827 = vadd.f32 0.0, %v826
  %v828 = vpop.f32.mrf.mxu0
  %v829 = vpop.f32.mrf.mxu0
  %v830 = vadd.f32 0.0, %v829
  %v831 = vpop.f32.mrf.mxu0
  %832 = vmatprep.mubr.bf16.mxu0 %v743
  %833 = vmatmul.mubr.bf16.gmra.mxu0 %v627
  %v834 = vpop.f32.mrf.mxu0
  %v835 = vadd.f32 0.0, %v834
  %v836 = vpop.f32.mrf.mxu0
  %v837 = vpop.f32.mrf.mxu0
  %v838 = vadd.f32 0.0, %v837
  %v839 = vpop.f32.mrf.mxu0
  %840 = vmatprep.mubr.bf16.mxu0 %v746
  %841 = vmatmul.mubr.bf16.gmra.mxu0 %v629
  %v842 = vpop.f32.mrf.mxu0
  %v843 = vadd.f32 0.0, %v842
  %v844 = vpop.f32.mrf.mxu0
  %v845 = vpop.f32.mrf.mxu0
  %v846 = vadd.f32 0.0, %v845
  %v847 = vpop.f32.mrf.mxu0
  %848 = vdwg.mxu0
  %s849 = scalar_lea.vmem %s4, 92
  %v850 = vld [vmem:[%s849] sm:$0xf]
  %v851 = vld [vmem:[%s849 + $0x4] sm:$0xf]
  %v852 = vld [vmem:[%s849 + $0x8] sm:$0xf]
  %v853 = vld [vmem:[%s849 + $0xc] sm:$0xf]
  %v854 = vld [vmem:[%s849 + $0x10] sm:$0xf]
  %v855 = vld [vmem:[%s849 + $0x14] sm:$0xf]
  %v856 = vld [vmem:[%s849 + $0x18] sm:$0xf]
  %v857 = vld [vmem:[%s849 + $0x1c] sm:$0xf]
  %v858 = vld [vmem:[%s849 + $0x20] sm:$0xf]
  %v859 = vld [vmem:[%s849 + $0x24] sm:$0xf]
  %v860 = vld [vmem:[%s849 + $0x28] sm:$0xf]
  %v861 = vld [vmem:[%s849 + $0x2c] sm:$0xf]
  %v862 = vld [vmem:[%s849 + $0x30] sm:$0xf]
  %v863 = vld [vmem:[%s849 + $0x34] sm:$0xf]
  %v864 = vld [vmem:[%s849 + $0x38] sm:$0xf]
  %v865 = vld [vmem:[%s849 + $0x3c] sm:$0xf]
  %v866 = vld [vmem:[%s849 + $0x40] sm:$0xf]
  %v867 = vld [vmem:[%s849 + $0x44] sm:$0xf]
  %v868 = vld [vmem:[%s849 + $0x48] sm:$0xf]
  %v869 = vld [vmem:[%s849 + $0x4c] sm:$0xf]
  %v870 = vld [vmem:[%s849 + $0x50] sm:$0xf]
  %v871 = vld [vmem:[%s849 + $0x54] sm:$0xf]
  %v872 = vld [vmem:[%s849 + $0x58] sm:$0x3]
  %v896 = vunpack.c.l.b16 %v850
  %v897 = vunpack.c.l.b16 %v851
  %v898 = vunpack.c.l.b16 %v852
  %v899 = vunpack.c.l.b16 %v853
  %v900 = vunpack.c.l.b16 %v854
  %v901 = vunpack.c.l.b16 %v855
  %v902 = vunpack.c.l.b16 %v856
  %v903 = vunpack.c.l.b16 %v857
  %v904 = vunpack.c.l.b16 %v858
  %v905 = vunpack.c.l.b16 %v859
  %v906 = vunpack.c.l.b16 %v860
  %v907 = vunpack.c.l.b16 %v861
  %v908 = vunpack.c.l.b16 %v862
  %v909 = vunpack.c.l.b16 %v863
  %v910 = vunpack.c.l.b16 %v864
  %v911 = vunpack.c.l.b16 %v865
  %v912 = vunpack.c.l.b16 %v866
  %v913 = vunpack.c.l.b16 %v867
  %v914 = vunpack.c.l.b16 %v868
  %v915 = vunpack.c.l.b16 %v869
  %v916 = vunpack.c.l.b16 %v870
  %v917 = vunpack.c.l.b16 %v871
  %v918 = vunpack.c.l.b16 %v872
  %v919 = vpack.c.b16 %v897, %v896
  %v920 = vpack.c.b16 %v899, %v898
  %v921 = vpack.c.b16 %v901, %v900
  %v922 = vpack.c.b16 %v903, %v902
  %v923 = vpack.c.b16 %v905, %v904
  %v924 = vpack.c.b16 %v907, %v906
  %v925 = vpack.c.b16 %v909, %v908
  %v926 = vpack.c.b16 %v911, %v910
  %v927 = vpack.c.b16 %v913, %v912
  %v928 = vpack.c.b16 %v915, %v914
  %v929 = vpack.c.b16 %v917, %v916
  %v930 = vpack.c.b16 %v918, %v918
  %v943 = vsel %vm748, %v930, 0
  %945 = vmatprep.subr.bf16.mxu0 0
  %946 = vmatpush1.bf16.msra.mxu0 %v926
  %947 = vmatprep.subr.bf16.mxu0 0
  %948 = vmatpush1.bf16.msra.mxu0 %v925
  %949 = vmatprep.subr.bf16.mxu0 0
  %950 = vmatpush1.bf16.msra.mxu0 %v924
  %951 = vmatprep.subr.bf16.mxu0 0
  %952 = vmatpush1.bf16.msra.mxu0 %v923
  %953 = vmatprep.subr.bf16.mxu0 0
  %954 = vmatpush1.bf16.msra.mxu0 %v922
  %955 = vmatprep.subr.bf16.mxu0 0
  %956 = vmatpush1.bf16.msra.mxu0 %v921
  %957 = vmatprep.subr.bf16.mxu0 0
  %958 = vmatpush1.bf16.msra.mxu0 %v920
  %959 = vmatprep.subr.bf16.mxu0 0
  %960 = vmatpush1.bf16.msra.mxu0 %v919
  %961 = vmatprep.subr.bf16.mxu0 0
  %962 = vmatpush2.bf16.msra.mxu0 0
  %963 = vmatprep.subr.bf16.mxu0 0
  %964 = vmatpush2.bf16.msra.mxu0 0
  %965 = vmatprep.subr.bf16.mxu0 0
  %966 = vmatpush2.bf16.msra.mxu0 0
  %967 = vmatprep.subr.bf16.mxu0 0
  %968 = vmatpush2.bf16.msra.mxu0 0
  %969 = vmatprep.subr.bf16.mxu0 0
  %970 = vmatpush2.bf16.msra.mxu0 %v943
  %971 = vmatprep.subr.bf16.mxu0 0
  %972 = vmatpush2.bf16.msra.mxu0 %v929
  %973 = vmatprep.subr.bf16.mxu0 0
  %974 = vmatpush2.bf16.msra.mxu0 %v928
  %975 = vmatprep.subr.bf16.mxu0 0
  %976 = vmatpush2.bf16.msra.mxu0 %v927
  %977 = vmatprep.mubr.bf16.mxu0 %v725
  %978 = vmatmul.mubr.bf16.gmra.mxu0 %v615
  %v979 = vpop.f32.mrf.mxu0
  %v980 = vadd.f32 0.0, %v979
  %v981 = vpop.f32.mrf.mxu0
  %v982 = vpop.f32.mrf.mxu0
  %v983 = vadd.f32 0.0, %v982
  %v984 = vpop.f32.mrf.mxu0
  %985 = vmatprep.mubr.bf16.mxu0 %v728
  %986 = vmatmul.mubr.bf16.gmra.mxu0 %v617
  %v987 = vpop.f32.mrf.mxu0
  %v988 = vadd.f32 0.0, %v987
  %v989 = vpop.f32.mrf.mxu0
  %v990 = vpop.f32.mrf.mxu0
  %v991 = vadd.f32 0.0, %v990
  %v992 = vpop.f32.mrf.mxu0
  %993 = vmatprep.mubr.bf16.mxu0 %v731
  %994 = vmatmul.mubr.bf16.gmra.mxu0 %v619
  %v995 = vpop.f32.mrf.mxu0
  %v996 = vadd.f32 0.0, %v995
  %v997 = vpop.f32.mrf.mxu0
  %v998 = vpop.f32.mrf.mxu0
  %v999 = vadd.f32 0.0, %v998
  %v1000 = vpop.f32.mrf.mxu0
  %1001 = vmatprep.mubr.bf16.mxu0 %v734
  %1002 = vmatmul.mubr.bf16.gmra.mxu0 %v621
  %v1003 = vpop.f32.mrf.mxu0
  %v1004 = vadd.f32 0.0, %v1003
  %v1005 = vpop.f32.mrf.mxu0
  %v1006 = vpop.f32.mrf.mxu0
  %v1007 = vadd.f32 0.0, %v1006
  %v1008 = vpop.f32.mrf.mxu0
  %1009 = vmatprep.mubr.bf16.mxu0 %v737
  %1010 = vmatmul.mubr.bf16.gmra.mxu0 %v623
  %v1011 = vpop.f32.mrf.mxu0
  %v1012 = vadd.f32 0.0, %v1011
  %v1013 = vpop.f32.mrf.mxu0
  %v1014 = vpop.f32.mrf.mxu0
  %v1015 = vadd.f32 0.0, %v1014
  %v1016 = vpop.f32.mrf.mxu0
  %1017 = vmatprep.mubr.bf16.mxu0 %v740
  %1018 = vmatmul.mubr.bf16.gmra.mxu0 %v625
  %v1019 = vpop.f32.mrf.mxu0
  %v1020 = vadd.f32 0.0, %v1019
  %v1021 = vpop.f32.mrf.mxu0
  %v1022 = vpop.f32.mrf.mxu0
  %v1023 = vadd.f32 0.0, %v1022
  %v1024 = vpop.f32.mrf.mxu0
  %1025 = vmatprep.mubr.bf16.mxu0 %v743
  %1026 = vmatmul.mubr.bf16.gmra.mxu0 %v627
  %v1027 = vpop.f32.mrf.mxu0
  %v1028 = vadd.f32 0.0, %v1027
  %v1029 = vpop.f32.mrf.mxu0
  %v1030 = vpop.f32.mrf.mxu0
  %v1031 = vadd.f32 0.0, %v1030
  %v1032 = vpop.f32.mrf.mxu0
  %1033 = vmatprep.mubr.bf16.mxu0 %v746
  %1034 = vmatmul.mubr.bf16.gmra.mxu0 %v629
  %v1035 = vpop.f32.mrf.mxu0
  %v1036 = vadd.f32 0.0, %v1035
  %v1037 = vpop.f32.mrf.mxu0
  %v1038 = vpop.f32.mrf.mxu0
  %v1039 = vadd.f32 0.0, %v1038
  %v1040 = vpop.f32.mrf.mxu0
  %1041 = vdwg.mxu0
  %v1042 = vmax.f32 %v787, %v980
  %v1043 = vmax.f32 %v790, %v983
  %v1044 = vmax.f32 %v795, %v988
  %v1045 = vmax.f32 %v798, %v991
  %v1046 = vmax.f32 %v803, %v996
  %v1047 = vmax.f32 %v806, %v999
  %v1048 = vmax.f32 %v811, %v1004
  %v1049 = vmax.f32 %v814, %v1007
  %v1050 = vmax.f32 %v819, %v1012
  %v1051 = vmax.f32 %v822, %v1015
  %v1052 = vmax.f32 %v827, %v1020
  %v1053 = vmax.f32 %v830, %v1023
  %v1054 = vmax.f32 %v835, %v1028
  %v1055 = vmax.f32 %v838, %v1031
  %v1056 = vmax.f32 %v843, %v1036
  %v1057 = vmax.f32 %v846, %v1039
  %v1058 = vpack.c.bf16 %v1043, %v1042
  %v1059 = vpack.c.bf16 %v1045, %v1044
  %v1060 = vpack.c.bf16 %v1047, %v1046
  %v1061 = vpack.c.bf16 %v1049, %v1048
  %v1062 = vpack.c.bf16 %v1051, %v1050
  %v1063 = vpack.c.bf16 %v1053, %v1052
  %v1064 = vpack.c.bf16 %v1055, %v1054
  %v1065 = vpack.c.bf16 %v1057, %v1056
  %v1074 = vunpack.c.l.b16 %v1058
  %v1075 = vunpack.c.h.b16 %v1058
  %v1076 = vunpack.c.l.b16 %v1059
  %v1077 = vunpack.c.h.b16 %v1059
  %v1078 = vunpack.c.l.b16 %v1060
  %v1079 = vunpack.c.h.b16 %v1060
  %v1080 = vunpack.c.l.b16 %v1061
  %v1081 = vunpack.c.h.b16 %v1061
  %v1082 = vunpack.c.l.b16 %v1062
  %v1083 = vunpack.c.h.b16 %v1062
  %v1084 = vunpack.c.l.b16 %v1063
  %v1085 = vunpack.c.h.b16 %v1063
  %v1086 = vunpack.c.l.b16 %v1064
  %v1087 = vunpack.c.h.b16 %v1064
  %v1088 = vunpack.c.l.b16 %v1065
  %v1089 = vunpack.c.h.b16 %v1065
  %v1090 = vpack.c.b16 %v1074, %v1074
  %v1091 = vpack.c.b16 %v1075, %v1075
  %v1092 = vpack.c.b16 %v1076, %v1076
  %v1093 = vpack.c.b16 %v1077, %v1077
  %v1094 = vpack.c.b16 %v1078, %v1078
  %v1095 = vpack.c.b16 %v1079, %v1079
  %v1096 = vpack.c.b16 %v1080, %v1080
  %v1097 = vpack.c.b16 %v1081, %v1081
  %v1098 = vpack.c.b16 %v1082, %v1082
  %v1099 = vpack.c.b16 %v1083, %v1083
  %v1100 = vpack.c.b16 %v1084, %v1084
  %v1101 = vpack.c.b16 %v1085, %v1085
  %v1102 = vpack.c.b16 %v1086, %v1086
  %v1103 = vpack.c.b16 %v1087, %v1087
  %v1104 = vpack.c.b16 %v1088, %v1088
  %v1105 = vpack.c.b16 %v1089, %v1089
  %vm1122 = vcmask 732160
  %1123 = vst.msk [vmem:[#allocation2] sm:$0xf] %vm1122, %v1090
  %1124 = vst.msk [vmem:[#allocation2 + $0x4] sm:$0xf] %vm1122, %v1091
  %1125 = vst.msk [vmem:[#allocation2 + $0x8] sm:$0xf] %vm1122, %v1092
  %1126 = vst.msk [vmem:[#allocation2 + $0xc] sm:$0xf] %vm1122, %v1093
  %1127 = vst.msk [vmem:[#allocation2 + $0x10] sm:$0xf] %vm1122, %v1094
  %1128 = vst.msk [vmem:[#allocation2 + $0x14] sm:$0xf] %vm1122, %v1095
  %1129 = vst.msk [vmem:[#allocation2 + $0x18] sm:$0xf] %vm1122, %v1096
  %1130 = vst.msk [vmem:[#allocation2 + $0x1c] sm:$0xf] %vm1122, %v1097
  %1131 = vst.msk [vmem:[#allocation2 + $0x20] sm:$0xf] %vm1122, %v1098
  %1132 = vst.msk [vmem:[#allocation2 + $0x24] sm:$0xf] %vm1122, %v1099
  %1133 = vst.msk [vmem:[#allocation2 + $0x28] sm:$0xf] %vm1122, %v1100
  %1134 = vst.msk [vmem:[#allocation2 + $0x2c] sm:$0xf] %vm1122, %v1101
  %1135 = vst.msk [vmem:[#allocation2 + $0x30] sm:$0xf] %vm1122, %v1102
  %1136 = vst.msk [vmem:[#allocation2 + $0x34] sm:$0xf] %vm1122, %v1103
  %1137 = vst.msk [vmem:[#allocation2 + $0x38] sm:$0xf] %vm1122, %v1104
  %1138 = vst.msk [vmem:[#allocation2 + $0x3c] sm:$0xf] %vm1122, %v1105
  %1139 = vst.msk [vmem:[#allocation2 + $0x40] sm:$0xf] %vm1122, 0
  %v1140 = vld [vmem:[#allocation2] sm:$0xf]
  %v1141 = vld [vmem:[#allocation2 + $0x4] sm:$0xf]
  %v1142 = vld [vmem:[#allocation2 + $0x8] sm:$0xf]
  %v1143 = vld [vmem:[#allocation2 + $0xc] sm:$0xf]
  %v1144 = vld [vmem:[#allocation2 + $0x10] sm:$0xf]
  %v1145 = vld [vmem:[#allocation2 + $0x14] sm:$0xf]
  %v1146 = vld [vmem:[#allocation2 + $0x18] sm:$0xf]
  %v1147 = vld [vmem:[#allocation2 + $0x1c] sm:$0xf]
  %v1148 = vld [vmem:[#allocation2 + $0x20] sm:$0xf]
  %v1149 = vld [vmem:[#allocation2 + $0x24] sm:$0xf]
  %v1150 = vld [vmem:[#allocation2 + $0x28] sm:$0xf]
  %v1151 = vld [vmem:[#allocation2 + $0x2c] sm:$0xf]
  %v1152 = vld [vmem:[#allocation2 + $0x30] sm:$0xf]
  %v1153 = vld [vmem:[#allocation2 + $0x34] sm:$0xf]
  %v1154 = vld [vmem:[#allocation2 + $0x38] sm:$0xf]
  %v1155 = vld [vmem:[#allocation2 + $0x3c] sm:$0xf]
  %v1156 = vld [vmem:[%s5] sm:$0xff]
  %v1157 = vld [vmem:[%s5 + $0x8] sm:$0xff]
  %v1158 = vld [vmem:[%s5 + $0x10] sm:$0xff]
  %v1159 = vld [vmem:[%s5 + $0x18] sm:$0xff]
  %v1160 = vld [vmem:[%s5 + $0x20] sm:$0xff]
  %v1161 = vld [vmem:[%s5 + $0x28] sm:$0xff]
  %v1162 = vld [vmem:[%s5 + $0x30] sm:$0xff]
  %v1163 = vld [vmem:[%s5 + $0x38] sm:$0xff]
  %v1164 = vld [vmem:[%s5 + $0x40] sm:$0xff]
  %v1165 = vld [vmem:[%s5 + $0x48] sm:$0xff]
  %v1166 = vld [vmem:[%s5 + $0x50] sm:$0xff]
  %v1167 = vld [vmem:[%s5 + $0x58] sm:$0x11]
  %v1168 = vld [vmem:[#allocation2 + $0x40] sm:$0x1]
  %s1169 = scalar_lea.vmem %s5, 96
  %v1170 = vld [vmem:[%s1169] sm:$0xff]
  %v1171 = vld [vmem:[%s1169 + $0x8] sm:$0xff]
  %v1172 = vld [vmem:[%s1169 + $0x10] sm:$0xff]
  %v1173 = vld [vmem:[%s1169 + $0x18] sm:$0xff]
  %v1174 = vld [vmem:[%s1169 + $0x20] sm:$0xff]
  %v1175 = vld [vmem:[%s1169 + $0x28] sm:$0xff]
  %v1176 = vld [vmem:[%s1169 + $0x30] sm:$0xff]
  %v1177 = vld [vmem:[%s1169 + $0x38] sm:$0xff]
  %v1178 = vld [vmem:[%s1169 + $0x40] sm:$0xff]
  %v1179 = vld [vmem:[%s1169 + $0x48] sm:$0xff]
  %v1180 = vld [vmem:[%s1169 + $0x50] sm:$0xff]
  %v1181 = vld [vmem:[%s1169 + $0x58] sm:$0x11]
  %v1199 = vunpack.c.l.b16 %v1140
  %v1200 = vunpack.c.l.b16 %v1141
  %v1201 = vunpack.c.l.b16 %v1142
  %v1202 = vunpack.c.l.b16 %v1143
  %v1203 = vunpack.c.l.b16 %v1144
  %v1204 = vunpack.c.l.b16 %v1145
  %v1205 = vunpack.c.l.b16 %v1146
  %v1206 = vunpack.c.l.b16 %v1147
  %v1207 = vunpack.c.l.b16 %v1148
  %v1208 = vunpack.c.l.b16 %v1149
  %v1209 = vunpack.c.l.b16 %v1150
  %v1210 = vunpack.c.l.b16 %v1151
  %v1211 = vunpack.c.l.b16 %v1152
  %v1212 = vunpack.c.l.b16 %v1153
  %v1213 = vunpack.c.l.b16 %v1154
  %v1214 = vunpack.c.l.b16 %v1155
  %v1215 = vunpack.c.l.b16 %v1168
  %v1216 = vpack.c.b16 %v1200, %v1199
  %v1217 = vpack.c.b16 %v1202, %v1201
  %v1218 = vpack.c.b16 %v1204, %v1203
  %v1219 = vpack.c.b16 %v1206, %v1205
  %v1220 = vpack.c.b16 %v1208, %v1207
  %v1221 = vpack.c.b16 %v1210, %v1209
  %v1222 = vpack.c.b16 %v1212, %v1211
  %v1223 = vpack.c.b16 %v1214, %v1213
  %v1224 = vpack.c.b16 %v1215, %v1215
  %vm1225 = vsmask.f32 7424
  %v1227 = vshrl.u32 %v1216, 16
  %v1229 = vshll.u32 %v1216, 16
  %v1231 = vrot.slane %v1229, 1
  %v1232 = vor.u32 %v1227, %v1231
  %v1234 = vshll.u32 %v1217, 16
  %v1236 = vrot.slane %v1234, 1
  %v1237 = vsel %vm1225, %v1232, %v1236
  %v1238 = vshrl.u32 %v1217, 16
  %v1240 = vor.u32 %v1238, %v1236
  %v1242 = vshll.u32 %v1218, 16
  %v1244 = vrot.slane %v1242, 1
  %v1245 = vsel %vm1225, %v1240, %v1244
  %v1246 = vshrl.u32 %v1218, 16
  %v1248 = vor.u32 %v1246, %v1244
  %v1250 = vshll.u32 %v1219, 16
  %v1252 = vrot.slane %v1250, 1
  %v1253 = vsel %vm1225, %v1248, %v1252
  %v1254 = vshrl.u32 %v1219, 16
  %v1256 = vor.u32 %v1254, %v1252
  %v1258 = vshll.u32 %v1220, 16
  %v1260 = vrot.slane %v1258, 1
  %v1261 = vsel %vm1225, %v1256, %v1260
  %v1262 = vshrl.u32 %v1220, 16
  %v1264 = vor.u32 %v1262, %v1260
  %v1266 = vshll.u32 %v1221, 16
  %v1268 = vrot.slane %v1266, 1
  %v1269 = vsel %vm1225, %v1264, %v1268
  %v1270 = vshrl.u32 %v1221, 16
  %v1272 = vor.u32 %v1270, %v1268
  %v1274 = vshll.u32 %v1222, 16
  %v1276 = vrot.slane %v1274, 1
  %v1277 = vsel %vm1225, %v1272, %v1276
  %v1278 = vshrl.u32 %v1222, 16
  %v1280 = vor.u32 %v1278, %v1276
  %v1282 = vshll.u32 %v1223, 16
  %v1284 = vrot.slane %v1282, 1
  %v1285 = vsel %vm1225, %v1280, %v1284
  %v1286 = vshrl.u32 %v1223, 16
  %v1288 = vor.u32 %v1286, %v1284
  %v1290 = vshll.u32 %v1224, 16
  %v1292 = vrot.slane %v1290, 1
  %v1293 = vsel %vm1225, %v1288, %v1292
  %v1306 = vunpack.c.l.b16 %v1170
  %v1307 = vunpack.c.h.b16 %v1170
  %v1308 = vunpack.c.l.b16 %v1171
  %v1309 = vunpack.c.h.b16 %v1171
  %v1310 = vunpack.c.l.b16 %v1172
  %v1311 = vunpack.c.h.b16 %v1172
  %v1312 = vunpack.c.l.b16 %v1173
  %v1313 = vunpack.c.h.b16 %v1173
  %v1314 = vunpack.c.l.b16 %v1174
  %v1315 = vunpack.c.h.b16 %v1174
  %v1316 = vunpack.c.l.b16 %v1175
  %v1317 = vunpack.c.h.b16 %v1175
  %v1318 = vunpack.c.l.b16 %v1176
  %v1319 = vunpack.c.h.b16 %v1176
  %v1320 = vunpack.c.l.b16 %v1177
  %v1321 = vunpack.c.h.b16 %v1177
  %v1322 = vunpack.c.l.b16 %v1178
  %v1323 = vunpack.c.h.b16 %v1178
  %v1324 = vunpack.c.l.b16 %v1179
  %v1325 = vunpack.c.h.b16 %v1179
  %v1326 = vunpack.c.l.b16 %v1180
  %v1327 = vunpack.c.h.b16 %v1180
  %v1328 = vunpack.c.l.b16 %v1181
  %v1329 = vunpack.c.h.b16 %v1181
  %v1330 = vpack.c.b16 %v1308, %v1306
  %v1331 = vpack.c.b16 %v1309, %v1307
  %v1332 = vpack.c.b16 %v1312, %v1310
  %v1333 = vpack.c.b16 %v1313, %v1311
  %v1334 = vpack.c.b16 %v1316, %v1314
  %v1335 = vpack.c.b16 %v1317, %v1315
  %v1336 = vpack.c.b16 %v1320, %v1318
  %v1337 = vpack.c.b16 %v1321, %v1319
  %v1338 = vpack.c.b16 %v1324, %v1322
  %v1339 = vpack.c.b16 %v1325, %v1323
  %v1340 = vpack.c.b16 %v1328, %v1326
  %v1341 = vpack.c.b16 %v1329, %v1327
  %vm1352 = vcmask 736256
  %v1354 = vsel %vm1352, %v1237, 0
  %v1357 = vsel %vm1352, %v1245, 0
  %v1360 = vsel %vm1352, %v1253, 0
  %v1363 = vsel %vm1352, %v1261, 0
  %v1366 = vsel %vm1352, %v1269, 0
  %v1369 = vsel %vm1352, %v1277, 0
  %v1372 = vsel %vm1352, %v1285, 0
  %v1375 = vsel %vm1352, %v1293, 0
  %vm1377 = vcmask 1044480
  %v1379 = vsel %vm1377, %v1340, 0
  %v1382 = vsel %vm1377, %v1341, 0
  %1384 = vmatprep.subr.bf16.mxu0 0
  %1385 = vmatpush1.bf16.msra.mxu0 0
  %1386 = vmatprep.subr.bf16.mxu0 0
  %1387 = vmatpush1.bf16.msra.mxu0 0
  %1388 = vmatprep.subr.bf16.mxu0 %v1382
  %1389 = vmatpush1.bf16.msra.mxu0 %v1379
  %1390 = vmatprep.subr.bf16.mxu0 %v1339
  %1391 = vmatpush1.bf16.msra.mxu0 %v1338
  %1392 = vmatprep.subr.bf16.mxu0 %v1337
  %1393 = vmatpush1.bf16.msra.mxu0 %v1336
  %1394 = vmatprep.subr.bf16.mxu0 %v1335
  %1395 = vmatpush1.bf16.msra.mxu0 %v1334
  %1396 = vmatprep.subr.bf16.mxu0 %v1333
  %1397 = vmatpush1.bf16.msra.mxu0 %v1332
  %1398 = vmatprep.subr.bf16.mxu0 %v1331
  %1399 = vmatpush1.bf16.msra.mxu0 %v1330
  %1400 = vmatprep.subr.bf16.mxu0 0
  %1401 = vmatpush2.bf16.msra.mxu0 0
  %1402 = vmatprep.subr.bf16.mxu0 0
  %1403 = vmatpush2.bf16.msra.mxu0 0
  %1404 = vmatprep.subr.bf16.mxu0 0
  %1405 = vmatpush2.bf16.msra.mxu0 0
  %1406 = vmatprep.subr.bf16.mxu0 0
  %1407 = vmatpush2.bf16.msra.mxu0 0
  %1408 = vmatprep.subr.bf16.mxu0 0
  %1409 = vmatpush2.bf16.msra.mxu0 0
  %1410 = vmatprep.subr.bf16.mxu0 0
  %1411 = vmatpush2.bf16.msra.mxu0 0
  %1412 = vmatprep.subr.bf16.mxu0 0
  %1413 = vmatpush2.bf16.msra.mxu0 0
  %1414 = vmatprep.subr.bf16.mxu0 0
  %1415 = vmatpush2.bf16.msra.mxu0 0
  %1416 = vmatprep.mubr.bf16.mxu0 0
  %1417 = vmatmul.mubr.bf16.gmra.mxu0 %v1354
  %v1418 = vpop.f32.mrf.mxu0
  %v1419 = vadd.f32 0.0, %v1418
  %v1420 = vpop.f32.mrf.mxu0
  %v1421 = vadd.f32 0.0, %v1420
  %v1422 = vpop.f32.mrf.mxu0
  %v1423 = vadd.f32 0.0, %v1422
  %v1424 = vpop.f32.mrf.mxu0
  %v1425 = vadd.f32 0.0, %v1424
  %1426 = vmatprep.mubr.bf16.mxu0 0
  %1427 = vmatmul.mubr.bf16.gmra.mxu0 %v1357
  %v1428 = vpop.f32.mrf.mxu0
  %v1429 = vadd.f32 0.0, %v1428
  %v1430 = vpop.f32.mrf.mxu0
  %v1431 = vadd.f32 0.0, %v1430
  %v1432 = vpop.f32.mrf.mxu0
  %v1433 = vadd.f32 0.0, %v1432
  %v1434 = vpop.f32.mrf.mxu0
  %v1435 = vadd.f32 0.0, %v1434
  %1436 = vmatprep.mubr.bf16.mxu0 0
  %1437 = vmatmul.mubr.bf16.gmra.mxu0 %v1360
  %v1438 = vpop.f32.mrf.mxu0
  %v1439 = vadd.f32 0.0, %v1438
  %v1440 = vpop.f32.mrf.mxu0
  %v1441 = vadd.f32 0.0, %v1440
  %v1442 = vpop.f32.mrf.mxu0
  %v1443 = vadd.f32 0.0, %v1442
  %v1444 = vpop.f32.mrf.mxu0
  %v1445 = vadd.f32 0.0, %v1444
  %1446 = vmatprep.mubr.bf16.mxu0 0
  %1447 = vmatmul.mubr.bf16.gmra.mxu0 %v1363
  %v1448 = vpop.f32.mrf.mxu0
  %v1449 = vadd.f32 0.0, %v1448
  %v1450 = vpop.f32.mrf.mxu0
  %v1451 = vadd.f32 0.0, %v1450
  %v1452 = vpop.f32.mrf.mxu0
  %v1453 = vadd.f32 0.0, %v1452
  %v1454 = vpop.f32.mrf.mxu0
  %v1455 = vadd.f32 0.0, %v1454
  %1456 = vmatprep.mubr.bf16.mxu0 0
  %1457 = vmatmul.mubr.bf16.gmra.mxu0 %v1366
  %v1458 = vpop.f32.mrf.mxu0
  %v1459 = vadd.f32 0.0, %v1458
  %v1460 = vpop.f32.mrf.mxu0
  %v1461 = vadd.f32 0.0, %v1460
  %v1462 = vpop.f32.mrf.mxu0
  %v1463 = vadd.f32 0.0, %v1462
  %v1464 = vpop.f32.mrf.mxu0
  %v1465 = vadd.f32 0.0, %v1464
  %1466 = vmatprep.mubr.bf16.mxu0 0
  %1467 = vmatmul.mubr.bf16.gmra.mxu0 %v1369
  %v1468 = vpop.f32.mrf.mxu0
  %v1469 = vadd.f32 0.0, %v1468
  %v1470 = vpop.f32.mrf.mxu0
  %v1471 = vadd.f32 0.0, %v1470
  %v1472 = vpop.f32.mrf.mxu0
  %v1473 = vadd.f32 0.0, %v1472
  %v1474 = vpop.f32.mrf.mxu0
  %v1475 = vadd.f32 0.0, %v1474
  %1476 = vmatprep.mubr.bf16.mxu0 0
  %1477 = vmatmul.mubr.bf16.gmra.mxu0 %v1372
  %v1478 = vpop.f32.mrf.mxu0
  %v1479 = vadd.f32 0.0, %v1478
  %v1480 = vpop.f32.mrf.mxu0
  %v1481 = vadd.f32 0.0, %v1480
  %v1482 = vpop.f32.mrf.mxu0
  %v1483 = vadd.f32 0.0, %v1482
  %v1484 = vpop.f32.mrf.mxu0
  %v1485 = vadd.f32 0.0, %v1484
  %1486 = vmatprep.mubr.bf16.mxu0 0
  %1487 = vmatmul.mubr.bf16.gmra.mxu0 %v1375
  %v1488 = vpop.f32.mrf.mxu0
  %v1489 = vadd.f32 0.0, %v1488
  %v1490 = vpop.f32.mrf.mxu0
  %v1491 = vadd.f32 0.0, %v1490
  %v1492 = vpop.f32.mrf.mxu0
  %v1493 = vadd.f32 0.0, %v1492
  %v1494 = vpop.f32.mrf.mxu0
  %v1495 = vadd.f32 0.0, %v1494
  %1496 = vdwg.mxu0
  %v1509 = vunpack.c.l.b16 %v1156
  %v1510 = vunpack.c.h.b16 %v1156
  %v1511 = vunpack.c.l.b16 %v1157
  %v1512 = vunpack.c.h.b16 %v1157
  %v1513 = vunpack.c.l.b16 %v1158
  %v1514 = vunpack.c.h.b16 %v1158
  %v1515 = vunpack.c.l.b16 %v1159
  %v1516 = vunpack.c.h.b16 %v1159
  %v1517 = vunpack.c.l.b16 %v1160
  %v1518 = vunpack.c.h.b16 %v1160
  %v1519 = vunpack.c.l.b16 %v1161
  %v1520 = vunpack.c.h.b16 %v1161
  %v1521 = vunpack.c.l.b16 %v1162
  %v1522 = vunpack.c.h.b16 %v1162
  %v1523 = vunpack.c.l.b16 %v1163
  %v1524 = vunpack.c.h.b16 %v1163
  %v1525 = vunpack.c.l.b16 %v1164
  %v1526 = vunpack.c.h.b16 %v1164
  %v1527 = vunpack.c.l.b16 %v1165
  %v1528 = vunpack.c.h.b16 %v1165
  %v1529 = vunpack.c.l.b16 %v1166
  %v1530 = vunpack.c.h.b16 %v1166
  %v1531 = vunpack.c.l.b16 %v1167
  %v1532 = vunpack.c.h.b16 %v1167
  %v1533 = vpack.c.b16 %v1511, %v1509
  %v1534 = vpack.c.b16 %v1512, %v1510
  %v1535 = vpack.c.b16 %v1515, %v1513
  %v1536 = vpack.c.b16 %v1516, %v1514
  %v1537 = vpack.c.b16 %v1519, %v1517
  %v1538 = vpack.c.b16 %v1520, %v1518
  %v1539 = vpack.c.b16 %v1523, %v1521
  %v1540 = vpack.c.b16 %v1524, %v1522
  %v1541 = vpack.c.b16 %v1527, %v1525
  %v1542 = vpack.c.b16 %v1528, %v1526
  %v1543 = vpack.c.b16 %v1531, %v1529
  %v1544 = vpack.c.b16 %v1532, %v1530
  %v1555 = vsel %vm1352, %v1216, 0
  %v1557 = vsel %vm1352, %v1217, 0
  %v1559 = vsel %vm1352, %v1218, 0
  %v1561 = vsel %vm1352, %v1219, 0
  %v1563 = vsel %vm1352, %v1220, 0
  %v1565 = vsel %vm1352, %v1221, 0
  %v1567 = vsel %vm1352, %v1222, 0
  %v1569 = vsel %vm1352, %v1223, 0
  %v1572 = vsel %vm1377, %v1543, 0
  %v1575 = vsel %vm1377, %v1544, 0
  %1577 = vmatprep.subr.bf16.mxu0 0
  %1578 = vmatpush1.bf16.msra.mxu0 0
  %1579 = vmatprep.subr.bf16.mxu0 0
  %1580 = vmatpush1.bf16.msra.mxu0 0
  %1581 = vmatprep.subr.bf16.mxu0 %v1575
  %1582 = vmatpush1.bf16.msra.mxu0 %v1572
  %1583 = vmatprep.subr.bf16.mxu0 %v1542
  %1584 = vmatpush1.bf16.msra.mxu0 %v1541
  %1585 = vmatprep.subr.bf16.mxu0 %v1540
  %1586 = vmatpush1.bf16.msra.mxu0 %v1539
  %1587 = vmatprep.subr.bf16.mxu0 %v1538
  %1588 = vmatpush1.bf16.msra.mxu0 %v1537
  %1589 = vmatprep.subr.bf16.mxu0 %v1536
  %1590 = vmatpush1.bf16.msra.mxu0 %v1535
  %1591 = vmatprep.subr.bf16.mxu0 %v1534
  %1592 = vmatpush1.bf16.msra.mxu0 %v1533
  %1593 = vmatprep.subr.bf16.mxu0 0
  %1594 = vmatpush2.bf16.msra.mxu0 0
  %1595 = vmatprep.subr.bf16.mxu0 0
  %1596 = vmatpush2.bf16.msra.mxu0 0
  %1597 = vmatprep.subr.bf16.mxu0 0
  %1598 = vmatpush2.bf16.msra.mxu0 0
  %1599 = vmatprep.subr.bf16.mxu0 0
  %1600 = vmatpush2.bf16.msra.mxu0 0
  %1601 = vmatprep.subr.bf16.mxu0 0
  %1602 = vmatpush2.bf16.msra.mxu0 0
  %1603 = vmatprep.subr.bf16.mxu0 0
  %1604 = vmatpush2.bf16.msra.mxu0 0
  %1605 = vmatprep.subr.bf16.mxu0 0
  %1606 = vmatpush2.bf16.msra.mxu0 0
  %1607 = vmatprep.subr.bf16.mxu0 0
  %1608 = vmatpush2.bf16.msra.mxu0 0
  %1609 = vmatprep.mubr.bf16.mxu0 0
  %1610 = vmatmul.mubr.bf16.gmra.mxu0 %v1555
  %v1611 = vpop.f32.mrf.mxu0
  %v1612 = vadd.f32 %v1419, %v1611
  %v1613 = vpop.f32.mrf.mxu0
  %v1614 = vadd.f32 %v1421, %v1613
  %v1615 = vpop.f32.mrf.mxu0
  %v1616 = vadd.f32 %v1423, %v1615
  %v1617 = vpop.f32.mrf.mxu0
  %v1618 = vadd.f32 %v1425, %v1617
  %1619 = vmatprep.mubr.bf16.mxu0 0
  %1620 = vmatmul.mubr.bf16.gmra.mxu0 %v1557
  %v1621 = vpop.f32.mrf.mxu0
  %v1622 = vadd.f32 %v1429, %v1621
  %v1623 = vpop.f32.mrf.mxu0
  %v1624 = vadd.f32 %v1431, %v1623
  %v1625 = vpop.f32.mrf.mxu0
  %v1626 = vadd.f32 %v1433, %v1625
  %v1627 = vpop.f32.mrf.mxu0
  %v1628 = vadd.f32 %v1435, %v1627
  %1629 = vmatprep.mubr.bf16.mxu0 0
  %1630 = vmatmul.mubr.bf16.gmra.mxu0 %v1559
  %v1631 = vpop.f32.mrf.mxu0
  %v1632 = vadd.f32 %v1439, %v1631
  %v1633 = vpop.f32.mrf.mxu0
  %v1634 = vadd.f32 %v1441, %v1633
  %v1635 = vpop.f32.mrf.mxu0
  %v1636 = vadd.f32 %v1443, %v1635
  %v1637 = vpop.f32.mrf.mxu0
  %v1638 = vadd.f32 %v1445, %v1637
  %1639 = vmatprep.mubr.bf16.mxu0 0
  %1640 = vmatmul.mubr.bf16.gmra.mxu0 %v1561
  %v1641 = vpop.f32.mrf.mxu0
  %v1642 = vadd.f32 %v1449, %v1641
  %v1643 = vpop.f32.mrf.mxu0
  %v1644 = vadd.f32 %v1451, %v1643
  %v1645 = vpop.f32.mrf.mxu0
  %v1646 = vadd.f32 %v1453, %v1645
  %v1647 = vpop.f32.mrf.mxu0
  %v1648 = vadd.f32 %v1455, %v1647
  %1649 = vmatprep.mubr.bf16.mxu0 0
  %1650 = vmatmul.mubr.bf16.gmra.mxu0 %v1563
  %v1651 = vpop.f32.mrf.mxu0
  %v1652 = vadd.f32 %v1459, %v1651
  %v1653 = vpop.f32.mrf.mxu0
  %v1654 = vadd.f32 %v1461, %v1653
  %v1655 = vpop.f32.mrf.mxu0
  %v1656 = vadd.f32 %v1463, %v1655
  %v1657 = vpop.f32.mrf.mxu0
  %v1658 = vadd.f32 %v1465, %v1657
  %1659 = vmatprep.mubr.bf16.mxu0 0
  %1660 = vmatmul.mubr.bf16.gmra.mxu0 %v1565
  %v1661 = vpop.f32.mrf.mxu0
  %v1662 = vadd.f32 %v1469, %v1661
  %v1663 = vpop.f32.mrf.mxu0
  %v1664 = vadd.f32 %v1471, %v1663
  %v1665 = vpop.f32.mrf.mxu0
  %v1666 = vadd.f32 %v1473, %v1665
  %v1667 = vpop.f32.mrf.mxu0
  %v1668 = vadd.f32 %v1475, %v1667
  %1669 = vmatprep.mubr.bf16.mxu0 0
  %1670 = vmatmul.mubr.bf16.gmra.mxu0 %v1567
  %v1671 = vpop.f32.mrf.mxu0
  %v1672 = vadd.f32 %v1479, %v1671
  %v1673 = vpop.f32.mrf.mxu0
  %v1674 = vadd.f32 %v1481, %v1673
  %v1675 = vpop.f32.mrf.mxu0
  %v1676 = vadd.f32 %v1483, %v1675
  %v1677 = vpop.f32.mrf.mxu0
  %v1678 = vadd.f32 %v1485, %v1677
  %1679 = vmatprep.mubr.bf16.mxu0 0
  %1680 = vmatmul.mubr.bf16.gmra.mxu0 %v1569
  %v1681 = vpop.f32.mrf.mxu0
  %v1682 = vadd.f32 %v1489, %v1681
  %v1683 = vpop.f32.mrf.mxu0
  %v1684 = vadd.f32 %v1491, %v1683
  %v1685 = vpop.f32.mrf.mxu0
  %v1686 = vadd.f32 %v1493, %v1685
  %v1687 = vpop.f32.mrf.mxu0
  %v1688 = vadd.f32 %v1495, %v1687
  %1689 = vdwg.mxu0
  %v1690 = vld [vmem:[#allocation2] sm:$0xe]
  %s1691 = scalar_lea.vmem %s5, 192
  %v1692 = vld [vmem:[%s1691] sm:$0xff]
  %v1693 = vld [vmem:[%s1691 + $0x8] sm:$0xff]
  %v1694 = vld [vmem:[%s1691 + $0x10] sm:$0xff]
  %v1695 = vld [vmem:[%s1691 + $0x18] sm:$0xff]
  %v1696 = vld [vmem:[%s1691 + $0x20] sm:$0xff]
  %v1697 = vld [vmem:[%s1691 + $0x28] sm:$0xff]
  %v1698 = vld [vmem:[%s1691 + $0x30] sm:$0xff]
  %v1699 = vld [vmem:[%s1691 + $0x38] sm:$0xff]
  %v1700 = vld [vmem:[%s1691 + $0x40] sm:$0xff]
  %v1701 = vld [vmem:[%s1691 + $0x48] sm:$0xff]
  %v1702 = vld [vmem:[%s1691 + $0x50] sm:$0xff]
  %v1703 = vld [vmem:[%s1691 + $0x58] sm:$0x11]
  %v1705 = vunpack.c.l.b16 %v1690
  %v1706 = vpack.c.b16 %v1200, %v1705
  %vm1707 = vcmask 1046528
  %v1708 = vrot.slane %v1706, 1
  %v1709 = vrot.slane %v1217, 1
  %v1710 = vsel %vm1707, %v1708, %v1709
  %v1711 = vrot.slane %v1218, 1
  %v1712 = vsel %vm1707, %v1709, %v1711
  %v1713 = vrot.slane %v1219, 1
  %v1714 = vsel %vm1707, %v1711, %v1713
  %v1715 = vrot.slane %v1220, 1
  %v1716 = vsel %vm1707, %v1713, %v1715
  %v1717 = vrot.slane %v1221, 1
  %v1718 = vsel %vm1707, %v1715, %v1717
  %v1719 = vrot.slane %v1222, 1
  %v1720 = vsel %vm1707, %v1717, %v1719
  %v1721 = vrot.slane %v1223, 1
  %v1722 = vsel %vm1707, %v1719, %v1721
  %v1723 = vrot.slane %v1224, 1
  %v1724 = vsel %vm1707, %v1721, %v1723
  %v1737 = vunpack.c.l.b16 %v1692
  %v1738 = vunpack.c.h.b16 %v1692
  %v1739 = vunpack.c.l.b16 %v1693
  %v1740 = vunpack.c.h.b16 %v1693
  %v1741 = vunpack.c.l.b16 %v1694
  %v1742 = vunpack.c.h.b16 %v1694
  %v1743 = vunpack.c.l.b16 %v1695
  %v1744 = vunpack.c.h.b16 %v1695
  %v1745 = vunpack.c.l.b16 %v1696
  %v1746 = vunpack.c.h.b16 %v1696
  %v1747 = vunpack.c.l.b16 %v1697
  %v1748 = vunpack.c.h.b16 %v1697
  %v1749 = vunpack.c.l.b16 %v1698
  %v1750 = vunpack.c.h.b16 %v1698
  %v1751 = vunpack.c.l.b16 %v1699
  %v1752 = vunpack.c.h.b16 %v1699
  %v1753 = vunpack.c.l.b16 %v1700
  %v1754 = vunpack.c.h.b16 %v1700
  %v1755 = vunpack.c.l.b16 %v1701
  %v1756 = vunpack.c.h.b16 %v1701
  %v1757 = vunpack.c.l.b16 %v1702
  %v1758 = vunpack.c.h.b16 %v1702
  %v1759 = vunpack.c.l.b16 %v1703
  %v1760 = vunpack.c.h.b16 %v1703
  %v1761 = vpack.c.b16 %v1739, %v1737
  %v1762 = vpack.c.b16 %v1740, %v1738
  %v1763 = vpack.c.b16 %v1743, %v1741
  %v1764 = vpack.c.b16 %v1744, %v1742
  %v1765 = vpack.c.b16 %v1747, %v1745
  %v1766 = vpack.c.b16 %v1748, %v1746
  %v1767 = vpack.c.b16 %v1751, %v1749
  %v1768 = vpack.c.b16 %v1752, %v1750
  %v1769 = vpack.c.b16 %v1755, %v1753
  %v1770 = vpack.c.b16 %v1756, %v1754
  %v1771 = vpack.c.b16 %v1759, %v1757
  %v1772 = vpack.c.b16 %v1760, %v1758
  %v1784 = vsel %vm1352, %v1710, 0
  %v1787 = vsel %vm1352, %v1712, 0
  %v1790 = vsel %vm1352, %v1714, 0
  %v1793 = vsel %vm1352, %v1716, 0
  %v1796 = vsel %vm1352, %v1718, 0
  %v1799 = vsel %vm1352, %v1720, 0
  %v1802 = vsel %vm1352, %v1722, 0
  %v1805 = vsel %vm1352, %v1724, 0
  %v1808 = vsel %vm1377, %v1771, 0
  %v1811 = vsel %vm1377, %v1772, 0
  %1813 = vmatprep.subr.bf16.mxu0 0
  %1814 = vmatpush1.bf16.msra.mxu0 0
  %1815 = vmatprep.subr.bf16.mxu0 0
  %1816 = vmatpush1.bf16.msra.mxu0 0
  %1817 = vmatprep.subr.bf16.mxu0 %v1811
  %1818 = vmatpush1.bf16.msra.mxu0 %v1808
  %1819 = vmatprep.subr.bf16.mxu0 %v1770
  %1820 = vmatpush1.bf16.msra.mxu0 %v1769
  %1821 = vmatprep.subr.bf16.mxu0 %v1768
  %1822 = vmatpush1.bf16.msra.mxu0 %v1767
  %1823 = vmatprep.subr.bf16.mxu0 %v1766
  %1824 = vmatpush1.bf16.msra.mxu0 %v1765
  %1825 = vmatprep.subr.bf16.mxu0 %v1764
  %1826 = vmatpush1.bf16.msra.mxu0 %v1763
  %1827 = vmatprep.subr.bf16.mxu0 %v1762
  %1828 = vmatpush1.bf16.msra.mxu0 %v1761
  %1829 = vmatprep.subr.bf16.mxu0 0
  %1830 = vmatpush2.bf16.msra.mxu0 0
  %1831 = vmatprep.subr.bf16.mxu0 0
  %1832 = vmatpush2.bf16.msra.mxu0 0
  %1833 = vmatprep.subr.bf16.mxu0 0
  %1834 = vmatpush2.bf16.msra.mxu0 0
  %1835 = vmatprep.subr.bf16.mxu0 0
  %1836 = vmatpush2.bf16.msra.mxu0 0
  %1837 = vmatprep.subr.bf16.mxu0 0
  %1838 = vmatpush2.bf16.msra.mxu0 0
  %1839 = vmatprep.subr.bf16.mxu0 0
  %1840 = vmatpush2.bf16.msra.mxu0 0
  %1841 = vmatprep.subr.bf16.mxu0 0
  %1842 = vmatpush2.bf16.msra.mxu0 0
  %1843 = vmatprep.subr.bf16.mxu0 0
  %1844 = vmatpush2.bf16.msra.mxu0 0
  %1845 = vmatprep.mubr.bf16.mxu0 0
  %1846 = vmatmul.mubr.bf16.gmra.mxu0 %v1784
  %v1847 = vpop.f32.mrf.mxu0
  %v1848 = vadd.f32 0.0, %v1847
  %v1849 = vpop.f32.mrf.mxu0
  %v1850 = vadd.f32 0.0, %v1849
  %v1851 = vpop.f32.mrf.mxu0
  %v1852 = vadd.f32 0.0, %v1851
  %v1853 = vpop.f32.mrf.mxu0
  %v1854 = vadd.f32 0.0, %v1853
  %1855 = vmatprep.mubr.bf16.mxu0 0
  %1856 = vmatmul.mubr.bf16.gmra.mxu0 %v1787
  %v1857 = vpop.f32.mrf.mxu0
  %v1858 = vadd.f32 0.0, %v1857
  %v1859 = vpop.f32.mrf.mxu0
  %v1860 = vadd.f32 0.0, %v1859
  %v1861 = vpop.f32.mrf.mxu0
  %v1862 = vadd.f32 0.0, %v1861
  %v1863 = vpop.f32.mrf.mxu0
  %v1864 = vadd.f32 0.0, %v1863
  %1865 = vmatprep.mubr.bf16.mxu0 0
  %1866 = vmatmul.mubr.bf16.gmra.mxu0 %v1790
  %v1867 = vpop.f32.mrf.mxu0
  %v1868 = vadd.f32 0.0, %v1867
  %v1869 = vpop.f32.mrf.mxu0
  %v1870 = vadd.f32 0.0, %v1869
  %v1871 = vpop.f32.mrf.mxu0
  %v1872 = vadd.f32 0.0, %v1871
  %v1873 = vpop.f32.mrf.mxu0
  %v1874 = vadd.f32 0.0, %v1873
  %1875 = vmatprep.mubr.bf16.mxu0 0
  %1876 = vmatmul.mubr.bf16.gmra.mxu0 %v1793
  %v1877 = vpop.f32.mrf.mxu0
  %v1878 = vadd.f32 0.0, %v1877
  %v1879 = vpop.f32.mrf.mxu0
  %v1880 = vadd.f32 0.0, %v1879
  %v1881 = vpop.f32.mrf.mxu0
  %v1882 = vadd.f32 0.0, %v1881
  %v1883 = vpop.f32.mrf.mxu0
  %v1884 = vadd.f32 0.0, %v1883
  %1885 = vmatprep.mubr.bf16.mxu0 0
  %1886 = vmatmul.mubr.bf16.gmra.mxu0 %v1796
  %v1887 = vpop.f32.mrf.mxu0
  %v1888 = vadd.f32 0.0, %v1887
  %v1889 = vpop.f32.mrf.mxu0
  %v1890 = vadd.f32 0.0, %v1889
  %v1891 = vpop.f32.mrf.mxu0
  %v1892 = vadd.f32 0.0, %v1891
  %v1893 = vpop.f32.mrf.mxu0
  %v1894 = vadd.f32 0.0, %v1893
  %1895 = vmatprep.mubr.bf16.mxu0 0
  %1896 = vmatmul.mubr.bf16.gmra.mxu0 %v1799
  %v1897 = vpop.f32.mrf.mxu0
  %v1898 = vadd.f32 0.0, %v1897
  %v1899 = vpop.f32.mrf.mxu0
  %v1900 = vadd.f32 0.0, %v1899
  %v1901 = vpop.f32.mrf.mxu0
  %v1902 = vadd.f32 0.0, %v1901
  %v1903 = vpop.f32.mrf.mxu0
  %v1904 = vadd.f32 0.0, %v1903
  %1905 = vmatprep.mubr.bf16.mxu0 0
  %1906 = vmatmul.mubr.bf16.gmra.mxu0 %v1802
  %v1907 = vpop.f32.mrf.mxu0
  %v1908 = vadd.f32 0.0, %v1907
  %v1909 = vpop.f32.mrf.mxu0
  %v1910 = vadd.f32 0.0, %v1909
  %v1911 = vpop.f32.mrf.mxu0
  %v1912 = vadd.f32 0.0, %v1911
  %v1913 = vpop.f32.mrf.mxu0
  %v1914 = vadd.f32 0.0, %v1913
  %1915 = vmatprep.mubr.bf16.mxu0 0
  %1916 = vmatmul.mubr.bf16.gmra.mxu0 %v1805
  %v1917 = vpop.f32.mrf.mxu0
  %v1918 = vadd.f32 0.0, %v1917
  %v1919 = vpop.f32.mrf.mxu0
  %v1920 = vadd.f32 0.0, %v1919
  %v1921 = vpop.f32.mrf.mxu0
  %v1922 = vadd.f32 0.0, %v1921
  %v1923 = vpop.f32.mrf.mxu0
  %v1924 = vadd.f32 0.0, %v1923
  %1925 = vdwg.mxu0
  %v1926 = vadd.f32 %v1612, %v1848
  %v1927 = vadd.f32 %v1614, %v1850
  %v1928 = vadd.f32 %v1616, %v1852
  %v1929 = vadd.f32 %v1618, %v1854
  %v1930 = vadd.f32 %v1622, %v1858
  %v1931 = vadd.f32 %v1624, %v1860
  %v1932 = vadd.f32 %v1626, %v1862
  %v1933 = vadd.f32 %v1628, %v1864
  %v1934 = vadd.f32 %v1632, %v1868
  %v1935 = vadd.f32 %v1634, %v1870
  %v1936 = vadd.f32 %v1636, %v1872
  %v1937 = vadd.f32 %v1638, %v1874
  %v1938 = vadd.f32 %v1642, %v1878
  %v1939 = vadd.f32 %v1644, %v1880
  %v1940 = vadd.f32 %v1646, %v1882
  %v1941 = vadd.f32 %v1648, %v1884
  %v1942 = vadd.f32 %v1652, %v1888
  %v1943 = vadd.f32 %v1654, %v1890
  %v1944 = vadd.f32 %v1656, %v1892
  %v1945 = vadd.f32 %v1658, %v1894
  %v1946 = vadd.f32 %v1662, %v1898
  %v1947 = vadd.f32 %v1664, %v1900
  %v1948 = vadd.f32 %v1666, %v1902
  %v1949 = vadd.f32 %v1668, %v1904
  %v1950 = vadd.f32 %v1672, %v1908
  %v1951 = vadd.f32 %v1674, %v1910
  %v1952 = vadd.f32 %v1676, %v1912
  %v1953 = vadd.f32 %v1678, %v1914
  %v1954 = vadd.f32 %v1682, %v1918
  %v1955 = vadd.f32 %v1684, %v1920
  %v1956 = vadd.f32 %v1686, %v1922
  %v1957 = vadd.f32 %v1688, %v1924
  %v1958 = vld [vmem:[%s6] sm:$0x3]
  %v1960 = vlaneseq
  %v1961 = vshrl.u32 %v1960, 7
  %v1962 = vsub.s32 0, %v1961
  %v1963 = vrot.slane %v1958, %v1962
  %v1964 = vlaneseq
  %v1965 = vshrl.u32 %v1964, 7
  %v1966 = vsub.s32 1, %v1965
  %v1967 = vrot.slane %v1958, %v1966
  %v1970 = vadd.f32 %v1926, %v1963
  %v1971 = vadd.f32 %v1927, %v1967
  %v1972 = vadd.f32 %v1928, %v1963
  %v1973 = vadd.f32 %v1929, %v1967
  %v1974 = vadd.f32 %v1930, %v1963
  %v1975 = vadd.f32 %v1931, %v1967
  %v1976 = vadd.f32 %v1932, %v1963
  %v1977 = vadd.f32 %v1933, %v1967
  %v1978 = vadd.f32 %v1934, %v1963
  %v1979 = vadd.f32 %v1935, %v1967
  %v1980 = vadd.f32 %v1936, %v1963
  %v1981 = vadd.f32 %v1937, %v1967
  %v1982 = vadd.f32 %v1938, %v1963
  %v1983 = vadd.f32 %v1939, %v1967
  %v1984 = vadd.f32 %v1940, %v1963
  %v1985 = vadd.f32 %v1941, %v1967
  %v1986 = vadd.f32 %v1942, %v1963
  %v1987 = vadd.f32 %v1943, %v1967
  %v1988 = vadd.f32 %v1944, %v1963
  %v1989 = vadd.f32 %v1945, %v1967
  %v1990 = vadd.f32 %v1946, %v1963
  %v1991 = vadd.f32 %v1947, %v1967
  %v1992 = vadd.f32 %v1948, %v1963
  %v1993 = vadd.f32 %v1949, %v1967
  %v1994 = vadd.f32 %v1950, %v1963
  %v1995 = vadd.f32 %v1951, %v1967
  %v1996 = vadd.f32 %v1952, %v1963
  %v1997 = vadd.f32 %v1953, %v1967
  %v1998 = vadd.f32 %v1954, %v1963
  %v1999 = vadd.f32 %v1955, %v1967
  %v2000 = vadd.f32 %v1956, %v1963
  %v2001 = vadd.f32 %v1957, %v1967
  %v2002 = vmax.f32 %v1970, 0.0
  %v2003 = vmax.f32 %v1971, 0.0
  %v2004 = vmax.f32 %v1972, 0.0
  %v2005 = vmax.f32 %v1973, 0.0
  %v2006 = vmax.f32 %v1974, 0.0
  %v2007 = vmax.f32 %v1975, 0.0
  %v2008 = vmax.f32 %v1976, 0.0
  %v2009 = vmax.f32 %v1977, 0.0
  %v2010 = vmax.f32 %v1978, 0.0
  %v2011 = vmax.f32 %v1979, 0.0
  %v2012 = vmax.f32 %v1980, 0.0
  %v2013 = vmax.f32 %v1981, 0.0
  %v2014 = vmax.f32 %v1982, 0.0
  %v2015 = vmax.f32 %v1983, 0.0
  %v2016 = vmax.f32 %v1984, 0.0
  %v2017 = vmax.f32 %v1985, 0.0
  %v2018 = vmax.f32 %v1986, 0.0
  %v2019 = vmax.f32 %v1987, 0.0
  %v2020 = vmax.f32 %v1988, 0.0
  %v2021 = vmax.f32 %v1989, 0.0
  %v2022 = vmax.f32 %v1990, 0.0
  %v2023 = vmax.f32 %v1991, 0.0
  %v2024 = vmax.f32 %v1992, 0.0
  %v2025 = vmax.f32 %v1993, 0.0
  %v2026 = vmax.f32 %v1994, 0.0
  %v2027 = vmax.f32 %v1995, 0.0
  %v2028 = vmax.f32 %v1996, 0.0
  %v2029 = vmax.f32 %v1997, 0.0
  %v2030 = vmax.f32 %v1998, 0.0
  %v2031 = vmax.f32 %v1999, 0.0
  %v2032 = vmax.f32 %v2000, 0.0
  %v2033 = vmax.f32 %v2001, 0.0
  %v2034 = vpack.c.bf16 %v2004, %v2002
  %v2035 = vpack.c.bf16 %v2005, %v2003
  %v2036 = vpack.c.bf16 %v2008, %v2006
  %v2037 = vpack.c.bf16 %v2009, %v2007
  %v2038 = vpack.c.bf16 %v2012, %v2010
  %v2039 = vpack.c.bf16 %v2013, %v2011
  %v2040 = vpack.c.bf16 %v2016, %v2014
  %v2041 = vpack.c.bf16 %v2017, %v2015
  %v2042 = vpack.c.bf16 %v2020, %v2018
  %v2043 = vpack.c.bf16 %v2021, %v2019
  %v2044 = vpack.c.bf16 %v2024, %v2022
  %v2045 = vpack.c.bf16 %v2025, %v2023
  %v2046 = vpack.c.bf16 %v2028, %v2026
  %v2047 = vpack.c.bf16 %v2029, %v2027
  %v2048 = vpack.c.bf16 %v2032, %v2030
  %v2049 = vpack.c.bf16 %v2033, %v2031
  %v2066 = vunpack.c.l.b16 %v2034
  %v2067 = vunpack.c.l.b16 %v2035
  %v2068 = vunpack.c.h.b16 %v2034
  %v2069 = vunpack.c.h.b16 %v2035
  %v2070 = vunpack.c.l.b16 %v2036
  %v2071 = vunpack.c.l.b16 %v2037
  %v2072 = vunpack.c.h.b16 %v2036
  %v2073 = vunpack.c.h.b16 %v2037
  %v2074 = vunpack.c.l.b16 %v2038
  %v2075 = vunpack.c.l.b16 %v2039
  %v2076 = vunpack.c.h.b16 %v2038
  %v2077 = vunpack.c.h.b16 %v2039
  %v2078 = vunpack.c.l.b16 %v2040
  %v2079 = vunpack.c.l.b16 %v2041
  %v2080 = vunpack.c.h.b16 %v2040
  %v2081 = vunpack.c.h.b16 %v2041
  %v2082 = vunpack.c.l.b16 %v2042
  %v2083 = vunpack.c.l.b16 %v2043
  %v2084 = vunpack.c.h.b16 %v2042
  %v2085 = vunpack.c.h.b16 %v2043
  %v2086 = vunpack.c.l.b16 %v2044
  %v2087 = vunpack.c.l.b16 %v2045
  %v2088 = vunpack.c.h.b16 %v2044
  %v2089 = vunpack.c.h.b16 %v2045
  %v2090 = vunpack.c.l.b16 %v2046
  %v2091 = vunpack.c.l.b16 %v2047
  %v2092 = vunpack.c.h.b16 %v2046
  %v2093 = vunpack.c.h.b16 %v2047
  %v2094 = vunpack.c.l.b16 %v2048
  %v2095 = vunpack.c.l.b16 %v2049
  %v2096 = vunpack.c.h.b16 %v2048
  %v2097 = vunpack.c.h.b16 %v2049
  %v2098 = vpack.c.b16 %v2067, %v2066
  %v2099 = vpack.c.b16 %v2069, %v2068
  %v2100 = vpack.c.b16 %v2071, %v2070
  %v2101 = vpack.c.b16 %v2073, %v2072
  %v2102 = vpack.c.b16 %v2075, %v2074
  %v2103 = vpack.c.b16 %v2077, %v2076
  %v2104 = vpack.c.b16 %v2079, %v2078
  %v2105 = vpack.c.b16 %v2081, %v2080
  %v2106 = vpack.c.b16 %v2083, %v2082
  %v2107 = vpack.c.b16 %v2085, %v2084
  %v2108 = vpack.c.b16 %v2087, %v2086
  %v2109 = vpack.c.b16 %v2089, %v2088
  %v2110 = vpack.c.b16 %v2091, %v2090
  %v2111 = vpack.c.b16 %v2093, %v2092
  %v2112 = vpack.c.b16 %v2095, %v2094
  %v2113 = vpack.c.b16 %v2097, %v2096
  %vm2130 = vcmask 1043456
  %vm2131 = vcmask 654340
  %vm2132 = vmor %vm2131, %vm2130
  %2133 = vst.msk [vmem:[#allocation3] sm:$0xff] %vm2132, %v2098
  %2134 = vst.msk [vmem:[#allocation3 + $0x8] sm:$0xff] %vm2132, %v2099
  %2135 = vst.msk [vmem:[#allocation3 + $0x10] sm:$0xff] %vm2132, %v2100
  %2136 = vst.msk [vmem:[#allocation3 + $0x18] sm:$0xff] %vm2132, %v2101
  %2137 = vst.msk [vmem:[#allocation3 + $0x20] sm:$0xff] %vm2132, %v2102
  %2138 = vst.msk [vmem:[#allocation3 + $0x28] sm:$0xff] %vm2132, %v2103
  %2139 = vst.msk [vmem:[#allocation3 + $0x30] sm:$0xff] %vm2132, %v2104
  %2140 = vst.msk [vmem:[#allocation3 + $0x38] sm:$0xff] %vm2132, %v2105
  %2141 = vst.msk [vmem:[#allocation3 + $0x40] sm:$0xff] %vm2132, %v2106
  %2142 = vst.msk [vmem:[#allocation3 + $0x48] sm:$0xff] %vm2132, %v2107
  %2143 = vst.msk [vmem:[#allocation3 + $0x50] sm:$0xff] %vm2132, %v2108
  %2144 = vst.msk [vmem:[#allocation3 + $0x58] sm:$0xff] %vm2132, %v2109
  %2145 = vst.msk [vmem:[#allocation3 + $0x60] sm:$0xff] %vm2132, %v2110
  %2146 = vst.msk [vmem:[#allocation3 + $0x68] sm:$0xff] %vm2132, %v2111
  %2147 = vst.msk [vmem:[#allocation3 + $0x70] sm:$0xff] %vm2132, %v2112
  %2148 = vst.msk [vmem:[#allocation3 + $0x78] sm:$0xff] %vm2132, %v2113
  %v2149 = vld [vmem:[%s7] sm:$0xf]
  %v2150 = vld [vmem:[%s7 + $0x4] sm:$0xf]
  %v2151 = vld [vmem:[%s7 + $0x8] sm:$0xf]
  %v2152 = vld [vmem:[%s7 + $0xc] sm:$0xf]
  %v2153 = vld [vmem:[%s7 + $0x10] sm:$0xf]
  %v2154 = vld [vmem:[%s7 + $0x14] sm:$0xf]
  %v2155 = vld [vmem:[%s7 + $0x18] sm:$0xf]
  %v2156 = vld [vmem:[%s7 + $0x1c] sm:$0xf]
  %v2157 = vld [vmem:[%s7 + $0x20] sm:$0xf]
  %v2158 = vld [vmem:[%s7 + $0x24] sm:$0xf]
  %v2159 = vld [vmem:[%s7 + $0x28] sm:$0xf]
  %v2160 = vld [vmem:[%s7 + $0x2c] sm:$0xf]
  %v2161 = vld [vmem:[%s7 + $0x30] sm:$0xf]
  %v2162 = vld [vmem:[%s7 + $0x34] sm:$0xf]
  %v2163 = vld [vmem:[%s7 + $0x38] sm:$0xf]
  %v2164 = vld [vmem:[%s7 + $0x3c] sm:$0xf]
  %v2165 = vld [vmem:[%s7 + $0x40] sm:$0xf]
  %v2166 = vld [vmem:[%s7 + $0x44] sm:$0xf]
  %v2167 = vld [vmem:[%s7 + $0x48] sm:$0xf]
  %v2168 = vld [vmem:[%s7 + $0x4c] sm:$0xf]
  %v2169 = vld [vmem:[%s7 + $0x50] sm:$0xf]
  %v2170 = vld [vmem:[%s7 + $0x54] sm:$0xf]
  %v2171 = vld [vmem:[%s7 + $0x58] sm:$0xf]
  %v2172 = vld [vmem:[%s7 + $0x5c] sm:$0xf]
  %v2173 = vld [vmem:[%s7 + $0x60] sm:$0xf]
  %v2174 = vld [vmem:[%s7 + $0x64] sm:$0xf]
  %s2175 = scalar_lea.vmem %s7, 104
  %v2176 = vld [vmem:[%s2175] sm:$0xf]
  %v2177 = vld [vmem:[%s2175 + $0x4] sm:$0xf]
  %v2178 = vld [vmem:[%s2175 + $0x8] sm:$0xf]
  %v2179 = vld [vmem:[%s2175 + $0xc] sm:$0xf]
  %v2180 = vld [vmem:[%s2175 + $0x10] sm:$0xf]
  %v2181 = vld [vmem:[%s2175 + $0x14] sm:$0xf]
  %v2182 = vld [vmem:[%s2175 + $0x18] sm:$0xf]
  %v2183 = vld [vmem:[%s2175 + $0x1c] sm:$0xf]
  %v2184 = vld [vmem:[%s2175 + $0x20] sm:$0xf]
  %v2185 = vld [vmem:[%s2175 + $0x24] sm:$0xf]
  %v2186 = vld [vmem:[%s2175 + $0x28] sm:$0xf]
  %v2187 = vld [vmem:[%s2175 + $0x2c] sm:$0xf]
  %v2188 = vld [vmem:[%s2175 + $0x30] sm:$0xf]
  %v2189 = vld [vmem:[%s2175 + $0x34] sm:$0xf]
  %v2190 = vld [vmem:[%s2175 + $0x38] sm:$0xf]
  %v2191 = vld [vmem:[%s2175 + $0x3c] sm:$0xf]
  %v2192 = vld [vmem:[%s2175 + $0x40] sm:$0xf]
  %v2193 = vld [vmem:[%s2175 + $0x44] sm:$0xf]
  %v2194 = vld [vmem:[%s2175 + $0x48] sm:$0xf]
  %v2195 = vld [vmem:[%s2175 + $0x4c] sm:$0xf]
  %v2196 = vld [vmem:[%s2175 + $0x50] sm:$0xf]
  %v2197 = vld [vmem:[%s2175 + $0x54] sm:$0xf]
  %v2198 = vld [vmem:[%s2175 + $0x58] sm:$0xf]
  %v2199 = vld [vmem:[%s2175 + $0x5c] sm:$0xf]
  %v2200 = vld [vmem:[%s2175 + $0x60] sm:$0xf]
  %v2201 = vld [vmem:[%s2175 + $0x64] sm:$0xf]
  %v2202 = vld [vmem:[#allocation3] sm:$0x11]
  %v2203 = vld [vmem:[#allocation3 + $0x10] sm:$0x11]
  %v2204 = vld [vmem:[#allocation3 + $0x20] sm:$0x11]
  %v2205 = vld [vmem:[#allocation3 + $0x30] sm:$0x11]
  %v2206 = vld [vmem:[#allocation3 + $0x40] sm:$0x11]
  %v2207 = vld [vmem:[#allocation3 + $0x50] sm:$0x11]
  %v2208 = vld [vmem:[#allocation3 + $0x60] sm:$0x11]
  %v2209 = vld [vmem:[#allocation3 + $0x70] sm:$0x11]
  %v2211 = vshrl.u32 %v2202, 16
  %v2213 = vrot.slane %v2211, 4
  %v2214 = vrot.slane %v2213, 4
  %v2216 = vshrl.u32 %v2203, 16
  %v2218 = vrot.slane %v2216, 4
  %v2219 = vrot.slane %v2218, 4
  %v2221 = vshrl.u32 %v2204, 16
  %v2223 = vrot.slane %v2221, 4
  %v2224 = vrot.slane %v2223, 4
  %v2226 = vshrl.u32 %v2205, 16
  %v2228 = vrot.slane %v2226, 4
  %v2229 = vrot.slane %v2228, 4
  %v2231 = vshrl.u32 %v2206, 16
  %v2233 = vrot.slane %v2231, 4
  %v2234 = vrot.slane %v2233, 4
  %v2236 = vshrl.u32 %v2207, 16
  %v2238 = vrot.slane %v2236, 4
  %v2239 = vrot.slane %v2238, 4
  %v2241 = vshrl.u32 %v2208, 16
  %v2243 = vrot.slane %v2241, 4
  %v2244 = vrot.slane %v2243, 4
  %v2246 = vshrl.u32 %v2209, 16
  %v2248 = vrot.slane %v2246, 4
  %v2249 = vrot.slane %v2248, 4
  %v2258 = vmax.bf16 %v2202, %v2214
  %v2259 = vmax.bf16 %v2203, %v2219
  %v2260 = vmax.bf16 %v2204, %v2224
  %v2261 = vmax.bf16 %v2205, %v2229
  %v2262 = vmax.bf16 %v2206, %v2234
  %v2263 = vmax.bf16 %v2207, %v2239
  %v2264 = vmax.bf16 %v2208, %v2244
  %v2265 = vmax.bf16 %v2209, %v2249
  %v2274 = vunpack.c.l.b16 %v2258
  %v2275 = vunpack.c.h.b16 %v2258
  %v2276 = vunpack.c.l.b16 %v2259
  %v2277 = vunpack.c.h.b16 %v2259
  %v2278 = vunpack.c.l.b16 %v2260
  %v2279 = vunpack.c.h.b16 %v2260
  %v2280 = vunpack.c.l.b16 %v2261
  %v2281 = vunpack.c.h.b16 %v2261
  %v2282 = vunpack.c.l.b16 %v2262
  %v2283 = vunpack.c.h.b16 %v2262
  %v2284 = vunpack.c.l.b16 %v2263
  %v2285 = vunpack.c.h.b16 %v2263
  %v2286 = vunpack.c.l.b16 %v2264
  %v2287 = vunpack.c.h.b16 %v2264
  %v2288 = vunpack.c.l.b16 %v2265
  %v2289 = vunpack.c.h.b16 %v2265
  %v2290 = vpack.c.b16 %v2274, %v2274
  %v2291 = vpack.c.b16 %v2275, %v2275
  %v2292 = vpack.c.b16 %v2276, %v2276
  %v2293 = vpack.c.b16 %v2277, %v2277
  %v2294 = vpack.c.b16 %v2278, %v2278
  %v2295 = vpack.c.b16 %v2279, %v2279
  %v2296 = vpack.c.b16 %v2280, %v2280
  %v2297 = vpack.c.b16 %v2281, %v2281
  %v2298 = vpack.c.b16 %v2282, %v2282
  %v2299 = vpack.c.b16 %v2283, %v2283
  %v2300 = vpack.c.b16 %v2284, %v2284
  %v2301 = vpack.c.b16 %v2285, %v2285
  %v2302 = vpack.c.b16 %v2286, %v2286
  %v2303 = vpack.c.b16 %v2287, %v2287
  %v2304 = vpack.c.b16 %v2288, %v2288
  %v2305 = vpack.c.b16 %v2289, %v2289
  %v2306 = vunpack.c.l.b16 %v2290
  %v2307 = vunpack.c.l.b16 %v2291
  %v2308 = vunpack.c.l.b16 %v2292
  %v2309 = vunpack.c.l.b16 %v2293
  %v2310 = vunpack.c.l.b16 %v2294
  %v2311 = vunpack.c.l.b16 %v2295
  %v2312 = vunpack.c.l.b16 %v2296
  %v2313 = vunpack.c.l.b16 %v2297
  %v2314 = vunpack.c.l.b16 %v2298
  %v2315 = vunpack.c.l.b16 %v2299
  %v2316 = vunpack.c.l.b16 %v2300
  %v2317 = vunpack.c.l.b16 %v2301
  %v2318 = vunpack.c.l.b16 %v2302
  %v2319 = vunpack.c.l.b16 %v2303
  %v2320 = vunpack.c.l.b16 %v2304
  %v2321 = vunpack.c.l.b16 %v2305
  %v2322 = vrot.slane %v2308, 7
  %vm2323 = vcmask 1041409
  %v2324 = vsel %vm2323, %v2322, %v2306
  %v2325 = vrot.slane %v2310, 6
  %vm2326 = vcmask 1042434
  %v2327 = vsel %vm2326, %v2325, %v2324
  %v2328 = vrot.slane %v2312, 5
  %vm2329 = vcmask 1043459
  %v2330 = vsel %vm2329, %v2328, %v2327
  %v2331 = vrot.slane %v2314, 4
  %vm2332 = vcmask 1044484
  %v2333 = vsel %vm2332, %v2331, %v2330
  %v2334 = vrot.slane %v2316, 3
  %vm2335 = vcmask 1045509
  %v2336 = vsel %vm2335, %v2334, %v2333
  %v2337 = vrot.slane %v2318, 2
  %vm2338 = vcmask 1046534
  %v2339 = vsel %vm2338, %v2337, %v2336
  %v2340 = vrot.slane %v2320, 1
  %vm2341 = vcmask 1047559
  %v2342 = vsel %vm2341, %v2340, %v2339
  %v2343 = vrot.slane %v2309, 7
  %v2344 = vsel %vm2323, %v2343, %v2307
  %v2345 = vrot.slane %v2311, 6
  %v2346 = vsel %vm2326, %v2345, %v2344
  %v2347 = vrot.slane %v2313, 5
  %v2348 = vsel %vm2329, %v2347, %v2346
  %v2349 = vrot.slane %v2315, 4
  %v2350 = vsel %vm2332, %v2349, %v2348
  %v2351 = vrot.slane %v2317, 3
  %v2352 = vsel %vm2335, %v2351, %v2350
  %v2353 = vrot.slane %v2319, 2
  %v2354 = vsel %vm2338, %v2353, %v2352
  %v2355 = vrot.slane %v2321, 1
  %v2356 = vsel %vm2341, %v2355, %v2354
  %v2357 = vpack.c.b16 %v2342, %v2342
  %v2358 = vpack.c.b16 %v2356, %v2356
  %v2386 = vunpack.c.l.b16 %v2149
  %v2387 = vunpack.c.l.b16 %v2150
  %v2388 = vunpack.c.l.b16 %v2151
  %v2389 = vunpack.c.l.b16 %v2152
  %v2390 = vunpack.c.l.b16 %v2153
  %v2391 = vunpack.c.l.b16 %v2154
  %v2392 = vunpack.c.l.b16 %v2155
  %v2393 = vunpack.c.l.b16 %v2156
  %v2394 = vunpack.c.l.b16 %v2157
  %v2395 = vunpack.c.l.b16 %v2158
  %v2396 = vunpack.c.l.b16 %v2159
  %v2397 = vunpack.c.l.b16 %v2160
  %v2398 = vunpack.c.l.b16 %v2161
  %v2399 = vunpack.c.l.b16 %v2162
  %v2400 = vunpack.c.l.b16 %v2163
  %v2401 = vunpack.c.l.b16 %v2164
  %v2402 = vunpack.c.l.b16 %v2165
  %v2403 = vunpack.c.l.b16 %v2166
  %v2404 = vunpack.c.l.b16 %v2167
  %v2405 = vunpack.c.l.b16 %v2168
  %v2406 = vunpack.c.l.b16 %v2169
  %v2407 = vunpack.c.l.b16 %v2170
  %v2408 = vunpack.c.l.b16 %v2171
  %v2409 = vunpack.c.l.b16 %v2172
  %v2410 = vunpack.c.l.b16 %v2173
  %v2411 = vunpack.c.l.b16 %v2174
  %v2412 = vpack.c.b16 %v2387, %v2386
  %v2413 = vpack.c.b16 %v2389, %v2388
  %v2414 = vpack.c.b16 %v2391, %v2390
  %v2415 = vpack.c.b16 %v2393, %v2392
  %v2416 = vpack.c.b16 %v2395, %v2394
  %v2417 = vpack.c.b16 %v2397, %v2396
  %v2418 = vpack.c.b16 %v2399, %v2398
  %v2419 = vpack.c.b16 %v2401, %v2400
  %v2420 = vpack.c.b16 %v2403, %v2402
  %v2421 = vpack.c.b16 %v2405, %v2404
  %v2422 = vpack.c.b16 %v2407, %v2406
  %v2423 = vpack.c.b16 %v2409, %v2408
  %v2424 = vpack.c.b16 %v2411, %v2410
  %vm2438 = vcmask 654336
  %v2440 = vsel %vm2438, %v2358, 0
  %2442 = vmatprep.subr.bf16.mxu0 0
  %2443 = vmatpush1.bf16.msra.mxu0 %v2419
  %2444 = vmatprep.subr.bf16.mxu0 0
  %2445 = vmatpush1.bf16.msra.mxu0 %v2418
  %2446 = vmatprep.subr.bf16.mxu0 0
  %2447 = vmatpush1.bf16.msra.mxu0 %v2417
  %2448 = vmatprep.subr.bf16.mxu0 0
  %2449 = vmatpush1.bf16.msra.mxu0 %v2416
  %2450 = vmatprep.subr.bf16.mxu0 0
  %2451 = vmatpush1.bf16.msra.mxu0 %v2415
  %2452 = vmatprep.subr.bf16.mxu0 0
  %2453 = vmatpush1.bf16.msra.mxu0 %v2414
  %2454 = vmatprep.subr.bf16.mxu0 0
  %2455 = vmatpush1.bf16.msra.mxu0 %v2413
  %2456 = vmatprep.subr.bf16.mxu0 0
  %2457 = vmatpush1.bf16.msra.mxu0 %v2412
  %2458 = vmatprep.subr.bf16.mxu0 0
  %2459 = vmatpush2.bf16.msra.mxu0 0
  %2460 = vmatprep.subr.bf16.mxu0 0
  %2461 = vmatpush2.bf16.msra.mxu0 0
  %2462 = vmatprep.subr.bf16.mxu0 0
  %2463 = vmatpush2.bf16.msra.mxu0 0
  %2464 = vmatprep.subr.bf16.mxu0 0
  %2465 = vmatpush2.bf16.msra.mxu0 %v2424
  %2466 = vmatprep.subr.bf16.mxu0 0
  %2467 = vmatpush2.bf16.msra.mxu0 %v2423
  %2468 = vmatprep.subr.bf16.mxu0 0
  %2469 = vmatpush2.bf16.msra.mxu0 %v2422
  %2470 = vmatprep.subr.bf16.mxu0 0
  %2471 = vmatpush2.bf16.msra.mxu0 %v2421
  %2472 = vmatprep.subr.bf16.mxu0 0
  %2473 = vmatpush2.bf16.msra.mxu0 %v2420
  %2474 = vmatprep.mubr.bf16.mxu0 %v2440
  %2475 = vmatmul.mubr.bf16.gmra.mxu0 %v2357
  %v2476 = vpop.f32.mrf.mxu0
  %v2477 = vadd.f32 0.0, %v2476
  %v2478 = vpop.f32.mrf.mxu0
  %v2479 = vpop.f32.mrf.mxu0
  %v2480 = vpop.f32.mrf.mxu0
  %2481 = vdwg.mxu0
  %v2508 = vunpack.c.l.b16 %v2176
  %v2509 = vunpack.c.l.b16 %v2177
  %v2510 = vunpack.c.l.b16 %v2178
  %v2511 = vunpack.c.l.b16 %v2179
  %v2512 = vunpack.c.l.b16 %v2180
  %v2513 = vunpack.c.l.b16 %v2181
  %v2514 = vunpack.c.l.b16 %v2182
  %v2515 = vunpack.c.l.b16 %v2183
  %v2516 = vunpack.c.l.b16 %v2184
  %v2517 = vunpack.c.l.b16 %v2185
  %v2518 = vunpack.c.l.b16 %v2186
  %v2519 = vunpack.c.l.b16 %v2187
  %v2520 = vunpack.c.l.b16 %v2188
  %v2521 = vunpack.c.l.b16 %v2189
  %v2522 = vunpack.c.l.b16 %v2190
  %v2523 = vunpack.c.l.b16 %v2191
  %v2524 = vunpack.c.l.b16 %v2192
  %v2525 = vunpack.c.l.b16 %v2193
  %v2526 = vunpack.c.l.b16 %v2194
  %v2527 = vunpack.c.l.b16 %v2195
  %v2528 = vunpack.c.l.b16 %v2196
  %v2529 = vunpack.c.l.b16 %v2197
  %v2530 = vunpack.c.l.b16 %v2198
  %v2531 = vunpack.c.l.b16 %v2199
  %v2532 = vunpack.c.l.b16 %v2200
  %v2533 = vunpack.c.l.b16 %v2201
  %v2534 = vpack.c.b16 %v2509, %v2508
  %v2535 = vpack.c.b16 %v2511, %v2510
  %v2536 = vpack.c.b16 %v2513, %v2512
  %v2537 = vpack.c.b16 %v2515, %v2514
  %v2538 = vpack.c.b16 %v2517, %v2516
  %v2539 = vpack.c.b16 %v2519, %v2518
  %v2540 = vpack.c.b16 %v2521, %v2520
  %v2541 = vpack.c.b16 %v2523, %v2522
  %v2542 = vpack.c.b16 %v2525, %v2524
  %v2543 = vpack.c.b16 %v2527, %v2526
  %v2544 = vpack.c.b16 %v2529, %v2528
  %v2545 = vpack.c.b16 %v2531, %v2530
  %v2546 = vpack.c.b16 %v2533, %v2532
  %2560 = vmatprep.subr.bf16.mxu0 0
  %2561 = vmatpush1.bf16.msra.mxu0 %v2541
  %2562 = vmatprep.subr.bf16.mxu0 0
  %2563 = vmatpush1.bf16.msra.mxu0 %v2540
  %2564 = vmatprep.subr.bf16.mxu0 0
  %2565 = vmatpush1.bf16.msra.mxu0 %v2539
  %2566 = vmatprep.subr.bf16.mxu0 0
  %2567 = vmatpush1.bf16.msra.mxu0 %v2538
  %2568 = vmatprep.subr.bf16.mxu0 0
  %2569 = vmatpush1.bf16.msra.mxu0 %v2537
  %2570 = vmatprep.subr.bf16.mxu0 0
  %2571 = vmatpush1.bf16.msra.mxu0 %v2536
  %2572 = vmatprep.subr.bf16.mxu0 0
  %2573 = vmatpush1.bf16.msra.mxu0 %v2535
  %2574 = vmatprep.subr.bf16.mxu0 0
  %2575 = vmatpush1.bf16.msra.mxu0 %v2534
  %2576 = vmatprep.subr.bf16.mxu0 0
  %2577 = vmatpush2.bf16.msra.mxu0 0
  %2578 = vmatprep.subr.bf16.mxu0 0
  %2579 = vmatpush2.bf16.msra.mxu0 0
  %2580 = vmatprep.subr.bf16.mxu0 0
  %2581 = vmatpush2.bf16.msra.mxu0 0
  %2582 = vmatprep.subr.bf16.mxu0 0
  %2583 = vmatpush2.bf16.msra.mxu0 %v2546
  %2584 = vmatprep.subr.bf16.mxu0 0
  %2585 = vmatpush2.bf16.msra.mxu0 %v2545
  %2586 = vmatprep.subr.bf16.mxu0 0
  %2587 = vmatpush2.bf16.msra.mxu0 %v2544
  %2588 = vmatprep.subr.bf16.mxu0 0
  %2589 = vmatpush2.bf16.msra.mxu0 %v2543
  %2590 = vmatprep.subr.bf16.mxu0 0
  %2591 = vmatpush2.bf16.msra.mxu0 %v2542
  %2592 = vmatprep.mubr.bf16.mxu0 %v2440
  %2593 = vmatmul.mubr.bf16.gmra.mxu0 %v2357
  %v2594 = vpop.f32.mrf.mxu0
  %v2595 = vadd.f32 0.0, %v2594
  %v2596 = vpop.f32.mrf.mxu0
  %v2597 = vpop.f32.mrf.mxu0
  %v2598 = vpop.f32.mrf.mxu0
  %2599 = vdwg.mxu0
  %v2600 = vmax.f32 %v2477, %v2595
  %v2601 = vpack.c.bf16 %v2600, %v2600
  %v2602 = vld [vmem:[%s8] sm:$0xf]
  %v2603 = vld [vmem:[%s8 + $0x4] sm:$0xf]
  %v2604 = vld [vmem:[%s8 + $0x8] sm:$0xf]
  %v2605 = vld [vmem:[%s8 + $0xc] sm:$0xf]
  %v2606 = vld [vmem:[%s8 + $0x10] sm:$0xf]
  %v2607 = vld [vmem:[%s8 + $0x14] sm:$0xf]
  %v2608 = vld [vmem:[%s8 + $0x18] sm:$0xf]
  %v2609 = vld [vmem:[%s8 + $0x1c] sm:$0xf]
  %v2610 = vld [vmem:[%s8 + $0x20] sm:$0xf]
  %v2611 = vld [vmem:[%s8 + $0x24] sm:$0xf]
  %v2612 = vld [vmem:[%s8 + $0x28] sm:$0xf]
  %v2613 = vld [vmem:[%s8 + $0x2c] sm:$0xf]
  %v2614 = vld [vmem:[#allocation3] sm:$0x22]
  %v2615 = vld [vmem:[#allocation3 + $0x10] sm:$0x22]
  %v2616 = vld [vmem:[#allocation3 + $0x20] sm:$0x22]
  %v2617 = vld [vmem:[#allocation3 + $0x30] sm:$0x22]
  %v2618 = vld [vmem:[#allocation3 + $0x40] sm:$0x22]
  %v2619 = vld [vmem:[#allocation3 + $0x50] sm:$0x22]
  %v2620 = vld [vmem:[#allocation3 + $0x60] sm:$0x22]
  %v2621 = vld [vmem:[#allocation3 + $0x70] sm:$0x22]
  %v2623 = vshrl.u32 %v2614, 16
  %v2625 = vrot.slane %v2623, 4
  %v2626 = vrot.slane %v2625, 4
  %v2628 = vshrl.u32 %v2615, 16
  %v2630 = vrot.slane %v2628, 4
  %v2631 = vrot.slane %v2630, 4
  %v2633 = vshrl.u32 %v2616, 16
  %v2635 = vrot.slane %v2633, 4
  %v2636 = vrot.slane %v2635, 4
  %v2638 = vshrl.u32 %v2617, 16
  %v2640 = vrot.slane %v2638, 4
  %v2641 = vrot.slane %v2640, 4
  %v2643 = vshrl.u32 %v2618, 16
  %v2645 = vrot.slane %v2643, 4
  %v2646 = vrot.slane %v2645, 4
  %v2648 = vshrl.u32 %v2619, 16
  %v2650 = vrot.slane %v2648, 4
  %v2651 = vrot.slane %v2650, 4
  %v2653 = vshrl.u32 %v2620, 16
  %v2655 = vrot.slane %v2653, 4
  %v2656 = vrot.slane %v2655, 4
  %v2658 = vshrl.u32 %v2621, 16
  %v2660 = vrot.slane %v2658, 4
  %v2661 = vrot.slane %v2660, 4
  %v2670 = vmax.bf16 %v2614, %v2626
  %v2671 = vmax.bf16 %v2615, %v2631
  %v2672 = vmax.bf16 %v2616, %v2636
  %v2673 = vmax.bf16 %v2617, %v2641
  %v2674 = vmax.bf16 %v2618, %v2646
  %v2675 = vmax.bf16 %v2619, %v2651
  %v2676 = vmax.bf16 %v2620, %v2656
  %v2677 = vmax.bf16 %v2621, %v2661
  %v2686 = vunpack.c.l.b16 %v2670
  %v2687 = vunpack.c.h.b16 %v2670
  %v2688 = vunpack.c.l.b16 %v2671
  %v2689 = vunpack.c.h.b16 %v2671
  %v2690 = vunpack.c.l.b16 %v2672
  %v2691 = vunpack.c.h.b16 %v2672
  %v2692 = vunpack.c.l.b16 %v2673
  %v2693 = vunpack.c.h.b16 %v2673
  %v2694 = vunpack.c.l.b16 %v2674
  %v2695 = vunpack.c.h.b16 %v2674
  %v2696 = vunpack.c.l.b16 %v2675
  %v2697 = vunpack.c.h.b16 %v2675
  %v2698 = vunpack.c.l.b16 %v2676
  %v2699 = vunpack.c.h.b16 %v2676
  %v2700 = vunpack.c.l.b16 %v2677
  %v2701 = vunpack.c.h.b16 %v2677
  %v2702 = vpack.c.b16 %v2686, %v2686
  %v2703 = vpack.c.b16 %v2687, %v2687
  %v2704 = vpack.c.b16 %v2688, %v2688
  %v2705 = vpack.c.b16 %v2689, %v2689
  %v2706 = vpack.c.b16 %v2690, %v2690
  %v2707 = vpack.c.b16 %v2691, %v2691
  %v2708 = vpack.c.b16 %v2692, %v2692
  %v2709 = vpack.c.b16 %v2693, %v2693
  %v2710 = vpack.c.b16 %v2694, %v2694
  %v2711 = vpack.c.b16 %v2695, %v2695
  %v2712 = vpack.c.b16 %v2696, %v2696
  %v2713 = vpack.c.b16 %v2697, %v2697
  %v2714 = vpack.c.b16 %v2698, %v2698
  %v2715 = vpack.c.b16 %v2699, %v2699
  %v2716 = vpack.c.b16 %v2700, %v2700
  %v2717 = vpack.c.b16 %v2701, %v2701
  %v2718 = vunpack.c.l.b16 %v2702
  %v2719 = vunpack.c.l.b16 %v2703
  %v2720 = vunpack.c.l.b16 %v2704
  %v2721 = vunpack.c.l.b16 %v2705
  %v2722 = vunpack.c.l.b16 %v2706
  %v2723 = vunpack.c.l.b16 %v2707
  %v2724 = vunpack.c.l.b16 %v2708
  %v2725 = vunpack.c.l.b16 %v2709
  %v2726 = vunpack.c.l.b16 %v2710
  %v2727 = vunpack.c.l.b16 %v2711
  %v2728 = vunpack.c.l.b16 %v2712
  %v2729 = vunpack.c.l.b16 %v2713
  %v2730 = vunpack.c.l.b16 %v2714
  %v2731 = vunpack.c.l.b16 %v2715
  %v2732 = vunpack.c.l.b16 %v2716
  %v2733 = vunpack.c.l.b16 %v2717
  %v2734 = vrot.slane %v2718, 2
  %v2735 = vrot.slane %v2720, 1
  %v2736 = vsel %vm2323, %v2735, %v2734
  %v2737 = vsel %vm2326, %v2722, %v2736
  %v2738 = vrot.slane %v2724, 7
  %v2739 = vsel %vm2329, %v2738, %v2737
  %v2740 = vrot.slane %v2726, 6
  %v2741 = vsel %vm2332, %v2740, %v2739
  %v2742 = vrot.slane %v2728, 5
  %v2743 = vsel %vm2335, %v2742, %v2741
  %v2744 = vrot.slane %v2730, 4
  %v2745 = vsel %vm2338, %v2744, %v2743
  %v2746 = vrot.slane %v2732, 3
  %v2747 = vsel %vm2341, %v2746, %v2745
  %v2748 = vrot.slane %v2719, 2
  %v2749 = vrot.slane %v2721, 1
  %v2750 = vsel %vm2323, %v2749, %v2748
  %v2751 = vsel %vm2326, %v2723, %v2750
  %v2752 = vrot.slane %v2725, 7
  %v2753 = vsel %vm2329, %v2752, %v2751
  %v2754 = vrot.slane %v2727, 6
  %v2755 = vsel %vm2332, %v2754, %v2753
  %v2756 = vrot.slane %v2729, 5
  %v2757 = vsel %vm2335, %v2756, %v2755
  %v2758 = vrot.slane %v2731, 4
  %v2759 = vsel %vm2338, %v2758, %v2757
  %v2760 = vrot.slane %v2733, 3
  %v2761 = vsel %vm2341, %v2760, %v2759
  %v2762 = vpack.c.b16 %v2747, %v2747
  %v2763 = vpack.c.b16 %v2761, %v2761
  %v2766 = vsel %vm2438, %v2763, 0
  %2768 = vmatprep.subr.bf16.mxu0 0
  %2769 = vmatpush1.bf16.msra.mxu0 %v2419
  %2770 = vmatprep.subr.bf16.mxu0 0
  %2771 = vmatpush1.bf16.msra.mxu0 %v2418
  %2772 = vmatprep.subr.bf16.mxu0 0
  %2773 = vmatpush1.bf16.msra.mxu0 %v2417
  %2774 = vmatprep.subr.bf16.mxu0 0
  %2775 = vmatpush1.bf16.msra.mxu0 %v2416
  %2776 = vmatprep.subr.bf16.mxu0 0
  %2777 = vmatpush1.bf16.msra.mxu0 %v2415
  %2778 = vmatprep.subr.bf16.mxu0 0
  %2779 = vmatpush1.bf16.msra.mxu0 %v2414
  %2780 = vmatprep.subr.bf16.mxu0 0
  %2781 = vmatpush1.bf16.msra.mxu0 %v2413
  %2782 = vmatprep.subr.bf16.mxu0 0
  %2783 = vmatpush1.bf16.msra.mxu0 %v2412
  %2784 = vmatprep.subr.bf16.mxu0 0
  %2785 = vmatpush2.bf16.msra.mxu0 0
  %2786 = vmatprep.subr.bf16.mxu0 0
  %2787 = vmatpush2.bf16.msra.mxu0 0
  %2788 = vmatprep.subr.bf16.mxu0 0
  %2789 = vmatpush2.bf16.msra.mxu0 0
  %2790 = vmatprep.subr.bf16.mxu0 0
  %2791 = vmatpush2.bf16.msra.mxu0 %v2424
  %2792 = vmatprep.subr.bf16.mxu0 0
  %2793 = vmatpush2.bf16.msra.mxu0 %v2423
  %2794 = vmatprep.subr.bf16.mxu0 0
  %2795 = vmatpush2.bf16.msra.mxu0 %v2422
  %2796 = vmatprep.subr.bf16.mxu0 0
  %2797 = vmatpush2.bf16.msra.mxu0 %v2421
  %2798 = vmatprep.subr.bf16.mxu0 0
  %2799 = vmatpush2.bf16.msra.mxu0 %v2420
  %2800 = vmatprep.mubr.bf16.mxu0 %v2766
  %2801 = vmatmul.mubr.bf16.gmra.mxu0 %v2762
  %v2802 = vpop.f32.mrf.mxu0
  %v2803 = vadd.f32 0.0, %v2802
  %v2804 = vpop.f32.mrf.mxu0
  %v2805 = vpop.f32.mrf.mxu0
  %v2806 = vpop.f32.mrf.mxu0
  %2807 = vdwg.mxu0
  %2808 = vmatprep.subr.bf16.mxu0 0
  %2809 = vmatpush1.bf16.msra.mxu0 %v2541
  %2810 = vmatprep.subr.bf16.mxu0 0
  %2811 = vmatpush1.bf16.msra.mxu0 %v2540
  %2812 = vmatprep.subr.bf16.mxu0 0
  %2813 = vmatpush1.bf16.msra.mxu0 %v2539
  %2814 = vmatprep.subr.bf16.mxu0 0
  %2815 = vmatpush1.bf16.msra.mxu0 %v2538
  %2816 = vmatprep.subr.bf16.mxu0 0
  %2817 = vmatpush1.bf16.msra.mxu0 %v2537
  %2818 = vmatprep.subr.bf16.mxu0 0
  %2819 = vmatpush1.bf16.msra.mxu0 %v2536
  %2820 = vmatprep.subr.bf16.mxu0 0
  %2821 = vmatpush1.bf16.msra.mxu0 %v2535
  %2822 = vmatprep.subr.bf16.mxu0 0
  %2823 = vmatpush1.bf16.msra.mxu0 %v2534
  %2824 = vmatprep.subr.bf16.mxu0 0
  %2825 = vmatpush2.bf16.msra.mxu0 0
  %2826 = vmatprep.subr.bf16.mxu0 0
  %2827 = vmatpush2.bf16.msra.mxu0 0
  %2828 = vmatprep.subr.bf16.mxu0 0
  %2829 = vmatpush2.bf16.msra.mxu0 0
  %2830 = vmatprep.subr.bf16.mxu0 0
  %2831 = vmatpush2.bf16.msra.mxu0 %v2546
  %2832 = vmatprep.subr.bf16.mxu0 0
  %2833 = vmatpush2.bf16.msra.mxu0 %v2545
  %2834 = vmatprep.subr.bf16.mxu0 0
  %2835 = vmatpush2.bf16.msra.mxu0 %v2544
  %2836 = vmatprep.subr.bf16.mxu0 0
  %2837 = vmatpush2.bf16.msra.mxu0 %v2543
  %2838 = vmatprep.subr.bf16.mxu0 0
  %2839 = vmatpush2.bf16.msra.mxu0 %v2542
  %2840 = vmatprep.mubr.bf16.mxu0 %v2766
  %2841 = vmatmul.mubr.bf16.gmra.mxu0 %v2762
  %v2842 = vpop.f32.mrf.mxu0
  %v2843 = vadd.f32 0.0, %v2842
  %v2844 = vpop.f32.mrf.mxu0
  %v2845 = vpop.f32.mrf.mxu0
  %v2846 = vpop.f32.mrf.mxu0
  %2847 = vdwg.mxu0
  %v2848 = vmax.f32 %v2803, %v2843
  %v2849 = vpack.c.bf16 %v2848, %v2848
  %s2850 = scalar_lea.vmem %s8, 48
  %v2851 = vld [vmem:[%s2850] sm:$0xf]
  %v2852 = vld [vmem:[%s2850 + $0x4] sm:$0xf]
  %v2853 = vld [vmem:[%s2850 + $0x8] sm:$0xf]
  %v2854 = vld [vmem:[%s2850 + $0xc] sm:$0xf]
  %v2855 = vld [vmem:[%s2850 + $0x10] sm:$0xf]
  %v2856 = vld [vmem:[%s2850 + $0x14] sm:$0xf]
  %v2857 = vld [vmem:[%s2850 + $0x18] sm:$0xf]
  %v2858 = vld [vmem:[%s2850 + $0x1c] sm:$0xf]
  %v2859 = vld [vmem:[%s2850 + $0x20] sm:$0xf]
  %v2860 = vld [vmem:[%s2850 + $0x24] sm:$0xf]
  %v2861 = vld [vmem:[%s2850 + $0x28] sm:$0xf]
  %v2862 = vld [vmem:[%s2850 + $0x2c] sm:$0xf]
  %v2875 = vunpack.c.l.b16 %v2851
  %v2876 = vunpack.c.l.b16 %v2852
  %v2877 = vunpack.c.l.b16 %v2853
  %v2878 = vunpack.c.l.b16 %v2854
  %v2879 = vunpack.c.l.b16 %v2855
  %v2880 = vunpack.c.l.b16 %v2856
  %v2881 = vunpack.c.l.b16 %v2857
  %v2882 = vunpack.c.l.b16 %v2858
  %v2883 = vunpack.c.l.b16 %v2859
  %v2884 = vunpack.c.l.b16 %v2860
  %v2885 = vunpack.c.l.b16 %v2861
  %v2886 = vunpack.c.l.b16 %v2862
  %v2887 = vpack.c.b16 %v2876, %v2875
  %v2888 = vpack.c.b16 %v2878, %v2877
  %v2889 = vpack.c.b16 %v2880, %v2879
  %v2890 = vpack.c.b16 %v2882, %v2881
  %v2891 = vpack.c.b16 %v2884, %v2883
  %v2892 = vpack.c.b16 %v2886, %v2885
  %v2900 = vsel %vm188, %v2849, 0
  %2902 = vmatprep.subr.bf16.mxu0 0
  %2903 = vmatpush1.bf16.msra.mxu0 0
  %2904 = vmatprep.subr.bf16.mxu0 0
  %2905 = vmatpush1.bf16.msra.mxu0 0
  %2906 = vmatprep.subr.bf16.mxu0 0
  %2907 = vmatpush1.bf16.msra.mxu0 %v2892
  %2908 = vmatprep.subr.bf16.mxu0 0
  %2909 = vmatpush1.bf16.msra.mxu0 %v2891
  %2910 = vmatprep.subr.bf16.mxu0 0
  %2911 = vmatpush1.bf16.msra.mxu0 %v2890
  %2912 = vmatprep.subr.bf16.mxu0 0
  %2913 = vmatpush1.bf16.msra.mxu0 %v2889
  %2914 = vmatprep.subr.bf16.mxu0 0
  %2915 = vmatpush1.bf16.msra.mxu0 %v2888
  %2916 = vmatprep.subr.bf16.mxu0 0
  %2917 = vmatpush1.bf16.msra.mxu0 %v2887
  %2918 = vmatprep.subr.bf16.mxu0 0
  %2919 = vmatpush2.bf16.msra.mxu0 0
  %2920 = vmatprep.subr.bf16.mxu0 0
  %2921 = vmatpush2.bf16.msra.mxu0 0
  %2922 = vmatprep.subr.bf16.mxu0 0
  %2923 = vmatpush2.bf16.msra.mxu0 0
  %2924 = vmatprep.subr.bf16.mxu0 0
  %2925 = vmatpush2.bf16.msra.mxu0 0
  %2926 = vmatprep.subr.bf16.mxu0 0
  %2927 = vmatpush2.bf16.msra.mxu0 0
  %2928 = vmatprep.subr.bf16.mxu0 0
  %2929 = vmatpush2.bf16.msra.mxu0 0
  %2930 = vmatprep.subr.bf16.mxu0 0
  %2931 = vmatpush2.bf16.msra.mxu0 0
  %2932 = vmatprep.subr.bf16.mxu0 0
  %2933 = vmatpush2.bf16.msra.mxu0 0
  %2934 = vmatprep.mubr.bf16.mxu0 0
  %2935 = vmatmul.mubr.bf16.gmra.mxu0 %v2900
  %v2936 = vpop.f32.mrf.mxu0
  %v2937 = vadd.f32 0.0, %v2936
  %v2938 = vpop.f32.mrf.mxu0
  %v2939 = vpop.f32.mrf.mxu0
  %v2940 = vpop.f32.mrf.mxu0
  %2941 = vdwg.mxu0
  %v2954 = vunpack.c.l.b16 %v2602
  %v2955 = vunpack.c.l.b16 %v2603
  %v2956 = vunpack.c.l.b16 %v2604
  %v2957 = vunpack.c.l.b16 %v2605
  %v2958 = vunpack.c.l.b16 %v2606
  %v2959 = vunpack.c.l.b16 %v2607
  %v2960 = vunpack.c.l.b16 %v2608
  %v2961 = vunpack.c.l.b16 %v2609
  %v2962 = vunpack.c.l.b16 %v2610
  %v2963 = vunpack.c.l.b16 %v2611
  %v2964 = vunpack.c.l.b16 %v2612
  %v2965 = vunpack.c.l.b16 %v2613
  %v2966 = vpack.c.b16 %v2955, %v2954
  %v2967 = vpack.c.b16 %v2957, %v2956
  %v2968 = vpack.c.b16 %v2959, %v2958
  %v2969 = vpack.c.b16 %v2961, %v2960
  %v2970 = vpack.c.b16 %v2963, %v2962
  %v2971 = vpack.c.b16 %v2965, %v2964
  %v2979 = vsel %vm188, %v2601, 0
  %2981 = vmatprep.subr.bf16.mxu0 0
  %2982 = vmatpush1.bf16.msra.mxu0 0
  %2983 = vmatprep.subr.bf16.mxu0 0
  %2984 = vmatpush1.bf16.msra.mxu0 0
  %2985 = vmatprep.subr.bf16.mxu0 0
  %2986 = vmatpush1.bf16.msra.mxu0 %v2971
  %2987 = vmatprep.subr.bf16.mxu0 0
  %2988 = vmatpush1.bf16.msra.mxu0 %v2970
  %2989 = vmatprep.subr.bf16.mxu0 0
  %2990 = vmatpush1.bf16.msra.mxu0 %v2969
  %2991 = vmatprep.subr.bf16.mxu0 0
  %2992 = vmatpush1.bf16.msra.mxu0 %v2968
  %2993 = vmatprep.subr.bf16.mxu0 0
  %2994 = vmatpush1.bf16.msra.mxu0 %v2967
  %2995 = vmatprep.subr.bf16.mxu0 0
  %2996 = vmatpush1.bf16.msra.mxu0 %v2966
  %2997 = vmatprep.subr.bf16.mxu0 0
  %2998 = vmatpush2.bf16.msra.mxu0 0
  %2999 = vmatprep.subr.bf16.mxu0 0
  %3000 = vmatpush2.bf16.msra.mxu0 0
  %3001 = vmatprep.subr.bf16.mxu0 0
  %3002 = vmatpush2.bf16.msra.mxu0 0
  %3003 = vmatprep.subr.bf16.mxu0 0
  %3004 = vmatpush2.bf16.msra.mxu0 0
  %3005 = vmatprep.subr.bf16.mxu0 0
  %3006 = vmatpush2.bf16.msra.mxu0 0
  %3007 = vmatprep.subr.bf16.mxu0 0
  %3008 = vmatpush2.bf16.msra.mxu0 0
  %3009 = vmatprep.subr.bf16.mxu0 0
  %3010 = vmatpush2.bf16.msra.mxu0 0
  %3011 = vmatprep.subr.bf16.mxu0 0
  %3012 = vmatpush2.bf16.msra.mxu0 0
  %3013 = vmatprep.mubr.bf16.mxu0 0
  %3014 = vmatmul.mubr.bf16.gmra.mxu0 %v2979
  %v3015 = vpop.f32.mrf.mxu0
  %v3016 = vadd.f32 %v2937, %v3015
  %v3017 = vpop.f32.mrf.mxu0
  %v3018 = vpop.f32.mrf.mxu0
  %v3019 = vpop.f32.mrf.mxu0
  %3020 = vdwg.mxu0
  %v3021 = vld [vmem:[#allocation3] sm:$0x44]
  %v3022 = vld [vmem:[#allocation3 + $0x10] sm:$0x44]
  %v3023 = vld [vmem:[#allocation3 + $0x20] sm:$0x44]
  %v3024 = vld [vmem:[#allocation3 + $0x30] sm:$0x44]
  %v3025 = vld [vmem:[#allocation3 + $0x40] sm:$0x44]
  %v3026 = vld [vmem:[#allocation3 + $0x50] sm:$0x44]
  %v3027 = vld [vmem:[#allocation3 + $0x60] sm:$0x44]
  %v3028 = vld [vmem:[#allocation3 + $0x70] sm:$0x44]
  %v3030 = vshrl.u32 %v3021, 16
  %v3032 = vrot.slane %v3030, 4
  %v3033 = vrot.slane %v3032, 4
  %v3035 = vshrl.u32 %v3022, 16
  %v3037 = vrot.slane %v3035, 4
  %v3038 = vrot.slane %v3037, 4
  %v3040 = vshrl.u32 %v3023, 16
  %v3042 = vrot.slane %v3040, 4
  %v3043 = vrot.slane %v3042, 4
  %v3045 = vshrl.u32 %v3024, 16
  %v3047 = vrot.slane %v3045, 4
  %v3048 = vrot.slane %v3047, 4
  %v3050 = vshrl.u32 %v3025, 16
  %v3052 = vrot.slane %v3050, 4
  %v3053 = vrot.slane %v3052, 4
  %v3055 = vshrl.u32 %v3026, 16
  %v3057 = vrot.slane %v3055, 4
  %v3058 = vrot.slane %v3057, 4
  %v3060 = vshrl.u32 %v3027, 16
  %v3062 = vrot.slane %v3060, 4
  %v3063 = vrot.slane %v3062, 4
  %v3065 = vshrl.u32 %v3028, 16
  %v3067 = vrot.slane %v3065, 4
  %v3068 = vrot.slane %v3067, 4
  %v3077 = vmax.bf16 %v3021, %v3033
  %v3078 = vmax.bf16 %v3022, %v3038
  %v3079 = vmax.bf16 %v3023, %v3043
  %v3080 = vmax.bf16 %v3024, %v3048
  %v3081 = vmax.bf16 %v3025, %v3053
  %v3082 = vmax.bf16 %v3026, %v3058
  %v3083 = vmax.bf16 %v3027, %v3063
  %v3084 = vmax.bf16 %v3028, %v3068
  %v3093 = vunpack.c.l.b16 %v3077
  %v3094 = vunpack.c.h.b16 %v3077
  %v3095 = vunpack.c.l.b16 %v3078
  %v3096 = vunpack.c.h.b16 %v3078
  %v3097 = vunpack.c.l.b16 %v3079
  %v3098 = vunpack.c.h.b16 %v3079
  %v3099 = vunpack.c.l.b16 %v3080
  %v3100 = vunpack.c.h.b16 %v3080
  %v3101 = vunpack.c.l.b16 %v3081
  %v3102 = vunpack.c.h.b16 %v3081
  %v3103 = vunpack.c.l.b16 %v3082
  %v3104 = vunpack.c.h.b16 %v3082
  %v3105 = vunpack.c.l.b16 %v3083
  %v3106 = vunpack.c.h.b16 %v3083
  %v3107 = vunpack.c.l.b16 %v3084
  %v3108 = vunpack.c.h.b16 %v3084
  %v3109 = vpack.c.b16 %v3093, %v3093
  %v3110 = vpack.c.b16 %v3094, %v3094
  %v3111 = vpack.c.b16 %v3095, %v3095
  %v3112 = vpack.c.b16 %v3096, %v3096
  %v3113 = vpack.c.b16 %v3097, %v3097
  %v3114 = vpack.c.b16 %v3098, %v3098
  %v3115 = vpack.c.b16 %v3099, %v3099
  %v3116 = vpack.c.b16 %v3100, %v3100
  %v3117 = vpack.c.b16 %v3101, %v3101
  %v3118 = vpack.c.b16 %v3102, %v3102
  %v3119 = vpack.c.b16 %v3103, %v3103
  %v3120 = vpack.c.b16 %v3104, %v3104
  %v3121 = vpack.c.b16 %v3105, %v3105
  %v3122 = vpack.c.b16 %v3106, %v3106
  %v3123 = vpack.c.b16 %v3107, %v3107
  %v3124 = vpack.c.b16 %v3108, %v3108
  %v3125 = vunpack.c.l.b16 %v3109
  %v3126 = vunpack.c.l.b16 %v3110
  %v3127 = vunpack.c.l.b16 %v3111
  %v3128 = vunpack.c.l.b16 %v3112
  %v3129 = vunpack.c.l.b16 %v3113
  %v3130 = vunpack.c.l.b16 %v3114
  %v3131 = vunpack.c.l.b16 %v3115
  %v3132 = vunpack.c.l.b16 %v3116
  %v3133 = vunpack.c.l.b16 %v3117
  %v3134 = vunpack.c.l.b16 %v3118
  %v3135 = vunpack.c.l.b16 %v3119
  %v3136 = vunpack.c.l.b16 %v3120
  %v3137 = vunpack.c.l.b16 %v3121
  %v3138 = vunpack.c.l.b16 %v3122
  %v3139 = vunpack.c.l.b16 %v3123
  %v3140 = vunpack.c.l.b16 %v3124
  %v3141 = vrot.slane %v3125, 4
  %v3142 = vrot.slane %v3127, 3
  %v3143 = vsel %vm2323, %v3142, %v3141
  %v3144 = vrot.slane %v3129, 2
  %v3145 = vsel %vm2326, %v3144, %v3143
  %v3146 = vrot.slane %v3131, 1
  %v3147 = vsel %vm2329, %v3146, %v3145
  %v3148 = vsel %vm2332, %v3133, %v3147
  %v3149 = vrot.slane %v3135, 7
  %v3150 = vsel %vm2335, %v3149, %v3148
  %v3151 = vrot.slane %v3137, 6
  %v3152 = vsel %vm2338, %v3151, %v3150
  %v3153 = vrot.slane %v3139, 5
  %v3154 = vsel %vm2341, %v3153, %v3152
  %v3155 = vrot.slane %v3126, 4
  %v3156 = vrot.slane %v3128, 3
  %v3157 = vsel %vm2323, %v3156, %v3155
  %v3158 = vrot.slane %v3130, 2
  %v3159 = vsel %vm2326, %v3158, %v3157
  %v3160 = vrot.slane %v3132, 1
  %v3161 = vsel %vm2329, %v3160, %v3159
  %v3162 = vsel %vm2332, %v3134, %v3161
  %v3163 = vrot.slane %v3136, 7
  %v3164 = vsel %vm2335, %v3163, %v3162
  %v3165 = vrot.slane %v3138, 6
  %v3166 = vsel %vm2338, %v3165, %v3164
  %v3167 = vrot.slane %v3140, 5
  %v3168 = vsel %vm2341, %v3167, %v3166
  %v3169 = vpack.c.b16 %v3154, %v3154
  %v3170 = vpack.c.b16 %v3168, %v3168
  %v3173 = vsel %vm2438, %v3170, 0
  %3175 = vmatprep.subr.bf16.mxu0 0
  %3176 = vmatpush1.bf16.msra.mxu0 %v2419
  %3177 = vmatprep.subr.bf16.mxu0 0
  %3178 = vmatpush1.bf16.msra.mxu0 %v2418
  %3179 = vmatprep.subr.bf16.mxu0 0
  %3180 = vmatpush1.bf16.msra.mxu0 %v2417
  %3181 = vmatprep.subr.bf16.mxu0 0
  %3182 = vmatpush1.bf16.msra.mxu0 %v2416
  %3183 = vmatprep.subr.bf16.mxu0 0
  %3184 = vmatpush1.bf16.msra.mxu0 %v2415
  %3185 = vmatprep.subr.bf16.mxu0 0
  %3186 = vmatpush1.bf16.msra.mxu0 %v2414
  %3187 = vmatprep.subr.bf16.mxu0 0
  %3188 = vmatpush1.bf16.msra.mxu0 %v2413
  %3189 = vmatprep.subr.bf16.mxu0 0
  %3190 = vmatpush1.bf16.msra.mxu0 %v2412
  %3191 = vmatprep.subr.bf16.mxu0 0
  %3192 = vmatpush2.bf16.msra.mxu0 0
  %3193 = vmatprep.subr.bf16.mxu0 0
  %3194 = vmatpush2.bf16.msra.mxu0 0
  %3195 = vmatprep.subr.bf16.mxu0 0
  %3196 = vmatpush2.bf16.msra.mxu0 0
  %3197 = vmatprep.subr.bf16.mxu0 0
  %3198 = vmatpush2.bf16.msra.mxu0 %v2424
  %3199 = vmatprep.subr.bf16.mxu0 0
  %3200 = vmatpush2.bf16.msra.mxu0 %v2423
  %3201 = vmatprep.subr.bf16.mxu0 0
  %3202 = vmatpush2.bf16.msra.mxu0 %v2422
  %3203 = vmatprep.subr.bf16.mxu0 0
  %3204 = vmatpush2.bf16.msra.mxu0 %v2421
  %3205 = vmatprep.subr.bf16.mxu0 0
  %3206 = vmatpush2.bf16.msra.mxu0 %v2420
  %3207 = vmatprep.mubr.bf16.mxu0 %v3173
  %3208 = vmatmul.mubr.bf16.gmra.mxu0 %v3169
  %v3209 = vpop.f32.mrf.mxu0
  %v3210 = vadd.f32 0.0, %v3209
  %v3211 = vpop.f32.mrf.mxu0
  %v3212 = vpop.f32.mrf.mxu0
  %v3213 = vpop.f32.mrf.mxu0
  %3214 = vdwg.mxu0
  %3215 = vmatprep.subr.bf16.mxu0 0
  %3216 = vmatpush1.bf16.msra.mxu0 %v2541
  %3217 = vmatprep.subr.bf16.mxu0 0
  %3218 = vmatpush1.bf16.msra.mxu0 %v2540
  %3219 = vmatprep.subr.bf16.mxu0 0
  %3220 = vmatpush1.bf16.msra.mxu0 %v2539
  %3221 = vmatprep.subr.bf16.mxu0 0
  %3222 = vmatpush1.bf16.msra.mxu0 %v2538
  %3223 = vmatprep.subr.bf16.mxu0 0
  %3224 = vmatpush1.bf16.msra.mxu0 %v2537
  %3225 = vmatprep.subr.bf16.mxu0 0
  %3226 = vmatpush1.bf16.msra.mxu0 %v2536
  %3227 = vmatprep.subr.bf16.mxu0 0
  %3228 = vmatpush1.bf16.msra.mxu0 %v2535
  %3229 = vmatprep.subr.bf16.mxu0 0
  %3230 = vmatpush1.bf16.msra.mxu0 %v2534
  %3231 = vmatprep.subr.bf16.mxu0 0
  %3232 = vmatpush2.bf16.msra.mxu0 0
  %3233 = vmatprep.subr.bf16.mxu0 0
  %3234 = vmatpush2.bf16.msra.mxu0 0
  %3235 = vmatprep.subr.bf16.mxu0 0
  %3236 = vmatpush2.bf16.msra.mxu0 0
  %3237 = vmatprep.subr.bf16.mxu0 0
  %3238 = vmatpush2.bf16.msra.mxu0 %v2546
  %3239 = vmatprep.subr.bf16.mxu0 0
  %3240 = vmatpush2.bf16.msra.mxu0 %v2545
  %3241 = vmatprep.subr.bf16.mxu0 0
  %3242 = vmatpush2.bf16.msra.mxu0 %v2544
  %3243 = vmatprep.subr.bf16.mxu0 0
  %3244 = vmatpush2.bf16.msra.mxu0 %v2543
  %3245 = vmatprep.subr.bf16.mxu0 0
  %3246 = vmatpush2.bf16.msra.mxu0 %v2542
  %3247 = vmatprep.mubr.bf16.mxu0 %v3173
  %3248 = vmatmul.mubr.bf16.gmra.mxu0 %v3169
  %v3249 = vpop.f32.mrf.mxu0
  %v3250 = vadd.f32 0.0, %v3249
  %v3251 = vpop.f32.mrf.mxu0
  %v3252 = vpop.f32.mrf.mxu0
  %v3253 = vpop.f32.mrf.mxu0
  %3254 = vdwg.mxu0
  %v3255 = vmax.f32 %v3210, %v3250
  %v3256 = vpack.c.bf16 %v3255, %v3255
  %s3257 = scalar_lea.vmem %s8, 96
  %v3258 = vld [vmem:[%s3257] sm:$0xf]
  %v3259 = vld [vmem:[%s3257 + $0x4] sm:$0xf]
  %v3260 = vld [vmem:[%s3257 + $0x8] sm:$0xf]
  %v3261 = vld [vmem:[%s3257 + $0xc] sm:$0xf]
  %v3262 = vld [vmem:[%s3257 + $0x10] sm:$0xf]
  %v3263 = vld [vmem:[%s3257 + $0x14] sm:$0xf]
  %v3264 = vld [vmem:[%s3257 + $0x18] sm:$0xf]
  %v3265 = vld [vmem:[%s3257 + $0x1c] sm:$0xf]
  %v3266 = vld [vmem:[%s3257 + $0x20] sm:$0xf]
  %v3267 = vld [vmem:[%s3257 + $0x24] sm:$0xf]
  %v3268 = vld [vmem:[%s3257 + $0x28] sm:$0xf]
  %v3269 = vld [vmem:[%s3257 + $0x2c] sm:$0xf]
  %v3282 = vunpack.c.l.b16 %v3258
  %v3283 = vunpack.c.l.b16 %v3259
  %v3284 = vunpack.c.l.b16 %v3260
  %v3285 = vunpack.c.l.b16 %v3261
  %v3286 = vunpack.c.l.b16 %v3262
  %v3287 = vunpack.c.l.b16 %v3263
  %v3288 = vunpack.c.l.b16 %v3264
  %v3289 = vunpack.c.l.b16 %v3265
  %v3290 = vunpack.c.l.b16 %v3266
  %v3291 = vunpack.c.l.b16 %v3267
  %v3292 = vunpack.c.l.b16 %v3268
  %v3293 = vunpack.c.l.b16 %v3269
  %v3294 = vpack.c.b16 %v3283, %v3282
  %v3295 = vpack.c.b16 %v3285, %v3284
  %v3296 = vpack.c.b16 %v3287, %v3286
  %v3297 = vpack.c.b16 %v3289, %v3288
  %v3298 = vpack.c.b16 %v3291, %v3290
  %v3299 = vpack.c.b16 %v3293, %v3292
  %v3307 = vsel %vm188, %v3256, 0
  %3309 = vmatprep.subr.bf16.mxu0 0
  %3310 = vmatpush1.bf16.msra.mxu0 0
  %3311 = vmatprep.subr.bf16.mxu0 0
  %3312 = vmatpush1.bf16.msra.mxu0 0
  %3313 = vmatprep.subr.bf16.mxu0 0
  %3314 = vmatpush1.bf16.msra.mxu0 %v3299
  %3315 = vmatprep.subr.bf16.mxu0 0
  %3316 = vmatpush1.bf16.msra.mxu0 %v3298
  %3317 = vmatprep.subr.bf16.mxu0 0
  %3318 = vmatpush1.bf16.msra.mxu0 %v3297
  %3319 = vmatprep.subr.bf16.mxu0 0
  %3320 = vmatpush1.bf16.msra.mxu0 %v3296
  %3321 = vmatprep.subr.bf16.mxu0 0
  %3322 = vmatpush1.bf16.msra.mxu0 %v3295
  %3323 = vmatprep.subr.bf16.mxu0 0
  %3324 = vmatpush1.bf16.msra.mxu0 %v3294
  %3325 = vmatprep.subr.bf16.mxu0 0
  %3326 = vmatpush2.bf16.msra.mxu0 0
  %3327 = vmatprep.subr.bf16.mxu0 0
  %3328 = vmatpush2.bf16.msra.mxu0 0
  %3329 = vmatprep.subr.bf16.mxu0 0
  %3330 = vmatpush2.bf16.msra.mxu0 0
  %3331 = vmatprep.subr.bf16.mxu0 0
  %3332 = vmatpush2.bf16.msra.mxu0 0
  %3333 = vmatprep.subr.bf16.mxu0 0
  %3334 = vmatpush2.bf16.msra.mxu0 0
  %3335 = vmatprep.subr.bf16.mxu0 0
  %3336 = vmatpush2.bf16.msra.mxu0 0
  %3337 = vmatprep.subr.bf16.mxu0 0
  %3338 = vmatpush2.bf16.msra.mxu0 0
  %3339 = vmatprep.subr.bf16.mxu0 0
  %3340 = vmatpush2.bf16.msra.mxu0 0
  %3341 = vmatprep.mubr.bf16.mxu0 0
  %3342 = vmatmul.mubr.bf16.gmra.mxu0 %v3307
  %v3343 = vpop.f32.mrf.mxu0
  %v3344 = vadd.f32 0.0, %v3343
  %v3345 = vpop.f32.mrf.mxu0
  %v3346 = vpop.f32.mrf.mxu0
  %v3347 = vpop.f32.mrf.mxu0
  %3348 = vdwg.mxu0
  %v3349 = vadd.f32 %v3016, %v3344
  %v3350 = vld [vmem:[#allocation3] sm:$0x88]
  %v3351 = vld [vmem:[#allocation3 + $0x10] sm:$0x88]
  %v3352 = vld [vmem:[#allocation3 + $0x20] sm:$0x88]
  %v3353 = vld [vmem:[#allocation3 + $0x30] sm:$0x88]
  %v3354 = vld [vmem:[#allocation3 + $0x40] sm:$0x88]
  %v3355 = vld [vmem:[#allocation3 + $0x50] sm:$0x88]
  %v3356 = vld [vmem:[#allocation3 + $0x60] sm:$0x88]
  %v3357 = vld [vmem:[#allocation3 + $0x70] sm:$0x88]
  %v3359 = vshrl.u32 %v3350, 16
  %v3361 = vrot.slane %v3359, 4
  %v3362 = vrot.slane %v3361, 4
  %v3364 = vshrl.u32 %v3351, 16
  %v3366 = vrot.slane %v3364, 4
  %v3367 = vrot.slane %v3366, 4
  %v3369 = vshrl.u32 %v3352, 16
  %v3371 = vrot.slane %v3369, 4
  %v3372 = vrot.slane %v3371, 4
  %v3374 = vshrl.u32 %v3353, 16
  %v3376 = vrot.slane %v3374, 4
  %v3377 = vrot.slane %v3376, 4
  %v3379 = vshrl.u32 %v3354, 16
  %v3381 = vrot.slane %v3379, 4
  %v3382 = vrot.slane %v3381, 4
  %v3384 = vshrl.u32 %v3355, 16
  %v3386 = vrot.slane %v3384, 4
  %v3387 = vrot.slane %v3386, 4
  %v3389 = vshrl.u32 %v3356, 16
  %v3391 = vrot.slane %v3389, 4
  %v3392 = vrot.slane %v3391, 4
  %v3394 = vshrl.u32 %v3357, 16
  %v3396 = vrot.slane %v3394, 4
  %v3397 = vrot.slane %v3396, 4
  %v3406 = vmax.bf16 %v3350, %v3362
  %v3407 = vmax.bf16 %v3351, %v3367
  %v3408 = vmax.bf16 %v3352, %v3372
  %v3409 = vmax.bf16 %v3353, %v3377
  %v3410 = vmax.bf16 %v3354, %v3382
  %v3411 = vmax.bf16 %v3355, %v3387
  %v3412 = vmax.bf16 %v3356, %v3392
  %v3413 = vmax.bf16 %v3357, %v3397
  %v3422 = vunpack.c.l.b16 %v3406
  %v3423 = vunpack.c.h.b16 %v3406
  %v3424 = vunpack.c.l.b16 %v3407
  %v3425 = vunpack.c.h.b16 %v3407
  %v3426 = vunpack.c.l.b16 %v3408
  %v3427 = vunpack.c.h.b16 %v3408
  %v3428 = vunpack.c.l.b16 %v3409
  %v3429 = vunpack.c.h.b16 %v3409
  %v3430 = vunpack.c.l.b16 %v3410
  %v3431 = vunpack.c.h.b16 %v3410
  %v3432 = vunpack.c.l.b16 %v3411
  %v3433 = vunpack.c.h.b16 %v3411
  %v3434 = vunpack.c.l.b16 %v3412
  %v3435 = vunpack.c.h.b16 %v3412
  %v3436 = vunpack.c.l.b16 %v3413
  %v3437 = vunpack.c.h.b16 %v3413
  %v3438 = vpack.c.b16 %v3422, %v3422
  %v3439 = vpack.c.b16 %v3423, %v3423
  %v3440 = vpack.c.b16 %v3424, %v3424
  %v3441 = vpack.c.b16 %v3425, %v3425
  %v3442 = vpack.c.b16 %v3426, %v3426
  %v3443 = vpack.c.b16 %v3427, %v3427
  %v3444 = vpack.c.b16 %v3428, %v3428
  %v3445 = vpack.c.b16 %v3429, %v3429
  %v3446 = vpack.c.b16 %v3430, %v3430
  %v3447 = vpack.c.b16 %v3431, %v3431
  %v3448 = vpack.c.b16 %v3432, %v3432
  %v3449 = vpack.c.b16 %v3433, %v3433
  %v3450 = vpack.c.b16 %v3434, %v3434
  %v3451 = vpack.c.b16 %v3435, %v3435
  %v3452 = vpack.c.b16 %v3436, %v3436
  %v3453 = vpack.c.b16 %v3437, %v3437
  %v3454 = vunpack.c.l.b16 %v3438
  %v3455 = vunpack.c.l.b16 %v3439
  %v3456 = vunpack.c.l.b16 %v3440
  %v3457 = vunpack.c.l.b16 %v3441
  %v3458 = vunpack.c.l.b16 %v3442
  %v3459 = vunpack.c.l.b16 %v3443
  %v3460 = vunpack.c.l.b16 %v3444
  %v3461 = vunpack.c.l.b16 %v3445
  %v3462 = vunpack.c.l.b16 %v3446
  %v3463 = vunpack.c.l.b16 %v3447
  %v3464 = vunpack.c.l.b16 %v3448
  %v3465 = vunpack.c.l.b16 %v3449
  %v3466 = vunpack.c.l.b16 %v3450
  %v3467 = vunpack.c.l.b16 %v3451
  %v3468 = vunpack.c.l.b16 %v3452
  %v3469 = vunpack.c.l.b16 %v3453
  %v3470 = vrot.slane %v3454, 6
  %v3471 = vrot.slane %v3456, 5
  %v3472 = vsel %vm2323, %v3471, %v3470
  %v3473 = vrot.slane %v3458, 4
  %v3474 = vsel %vm2326, %v3473, %v3472
  %v3475 = vrot.slane %v3460, 3
  %v3476 = vsel %vm2329, %v3475, %v3474
  %v3477 = vrot.slane %v3462, 2
  %v3478 = vsel %vm2332, %v3477, %v3476
  %v3479 = vrot.slane %v3464, 1
  %v3480 = vsel %vm2335, %v3479, %v3478
  %v3481 = vsel %vm2338, %v3466, %v3480
  %v3482 = vrot.slane %v3468, 7
  %v3483 = vsel %vm2341, %v3482, %v3481
  %v3484 = vrot.slane %v3455, 6
  %v3485 = vrot.slane %v3457, 5
  %v3486 = vsel %vm2323, %v3485, %v3484
  %v3487 = vrot.slane %v3459, 4
  %v3488 = vsel %vm2326, %v3487, %v3486
  %v3489 = vrot.slane %v3461, 3
  %v3490 = vsel %vm2329, %v3489, %v3488
  %v3491 = vrot.slane %v3463, 2
  %v3492 = vsel %vm2332, %v3491, %v3490
  %v3493 = vrot.slane %v3465, 1
  %v3494 = vsel %vm2335, %v3493, %v3492
  %v3495 = vsel %vm2338, %v3467, %v3494
  %v3496 = vrot.slane %v3469, 7
  %v3497 = vsel %vm2341, %v3496, %v3495
  %v3498 = vpack.c.b16 %v3483, %v3483
  %v3499 = vpack.c.b16 %v3497, %v3497
  %v3502 = vsel %vm2438, %v3499, 0
  %3504 = vmatprep.subr.bf16.mxu0 0
  %3505 = vmatpush1.bf16.msra.mxu0 %v2419
  %3506 = vmatprep.subr.bf16.mxu0 0
  %3507 = vmatpush1.bf16.msra.mxu0 %v2418
  %3508 = vmatprep.subr.bf16.mxu0 0
  %3509 = vmatpush1.bf16.msra.mxu0 %v2417
  %3510 = vmatprep.subr.bf16.mxu0 0
  %3511 = vmatpush1.bf16.msra.mxu0 %v2416
  %3512 = vmatprep.subr.bf16.mxu0 0
  %3513 = vmatpush1.bf16.msra.mxu0 %v2415
  %3514 = vmatprep.subr.bf16.mxu0 0
  %3515 = vmatpush1.bf16.msra.mxu0 %v2414
  %3516 = vmatprep.subr.bf16.mxu0 0
  %3517 = vmatpush1.bf16.msra.mxu0 %v2413
  %3518 = vmatprep.subr.bf16.mxu0 0
  %3519 = vmatpush1.bf16.msra.mxu0 %v2412
  %3520 = vmatprep.subr.bf16.mxu0 0
  %3521 = vmatpush2.bf16.msra.mxu0 0
  %3522 = vmatprep.subr.bf16.mxu0 0
  %3523 = vmatpush2.bf16.msra.mxu0 0
  %3524 = vmatprep.subr.bf16.mxu0 0
  %3525 = vmatpush2.bf16.msra.mxu0 0
  %3526 = vmatprep.subr.bf16.mxu0 0
  %3527 = vmatpush2.bf16.msra.mxu0 %v2424
  %3528 = vmatprep.subr.bf16.mxu0 0
  %3529 = vmatpush2.bf16.msra.mxu0 %v2423
  %3530 = vmatprep.subr.bf16.mxu0 0
  %3531 = vmatpush2.bf16.msra.mxu0 %v2422
  %3532 = vmatprep.subr.bf16.mxu0 0
  %3533 = vmatpush2.bf16.msra.mxu0 %v2421
  %3534 = vmatprep.subr.bf16.mxu0 0
  %3535 = vmatpush2.bf16.msra.mxu0 %v2420
  %3536 = vmatprep.mubr.bf16.mxu0 %v3502
  %3537 = vmatmul.mubr.bf16.gmra.mxu0 %v3498
  %v3538 = vpop.f32.mrf.mxu0
  %v3539 = vadd.f32 0.0, %v3538
  %v3540 = vpop.f32.mrf.mxu0
  %v3541 = vpop.f32.mrf.mxu0
  %v3542 = vpop.f32.mrf.mxu0
  %3543 = vdwg.mxu0
  %3544 = vmatprep.subr.bf16.mxu0 0
  %3545 = vmatpush1.bf16.msra.mxu0 %v2541
  %3546 = vmatprep.subr.bf16.mxu0 0
  %3547 = vmatpush1.bf16.msra.mxu0 %v2540
  %3548 = vmatprep.subr.bf16.mxu0 0
  %3549 = vmatpush1.bf16.msra.mxu0 %v2539
  %3550 = vmatprep.subr.bf16.mxu0 0
  %3551 = vmatpush1.bf16.msra.mxu0 %v2538
  %3552 = vmatprep.subr.bf16.mxu0 0
  %3553 = vmatpush1.bf16.msra.mxu0 %v2537
  %3554 = vmatprep.subr.bf16.mxu0 0
  %3555 = vmatpush1.bf16.msra.mxu0 %v2536
  %3556 = vmatprep.subr.bf16.mxu0 0
  %3557 = vmatpush1.bf16.msra.mxu0 %v2535
  %3558 = vmatprep.subr.bf16.mxu0 0
  %3559 = vmatpush1.bf16.msra.mxu0 %v2534
  %3560 = vmatprep.subr.bf16.mxu0 0
  %3561 = vmatpush2.bf16.msra.mxu0 0
  %3562 = vmatprep.subr.bf16.mxu0 0
  %3563 = vmatpush2.bf16.msra.mxu0 0
  %3564 = vmatprep.subr.bf16.mxu0 0
  %3565 = vmatpush2.bf16.msra.mxu0 0
  %3566 = vmatprep.subr.bf16.mxu0 0
  %3567 = vmatpush2.bf16.msra.mxu0 %v2546
  %3568 = vmatprep.subr.bf16.mxu0 0
  %3569 = vmatpush2.bf16.msra.mxu0 %v2545
  %3570 = vmatprep.subr.bf16.mxu0 0
  %3571 = vmatpush2.bf16.msra.mxu0 %v2544
  %3572 = vmatprep.subr.bf16.mxu0 0
  %3573 = vmatpush2.bf16.msra.mxu0 %v2543
  %3574 = vmatprep.subr.bf16.mxu0 0
  %3575 = vmatpush2.bf16.msra.mxu0 %v2542
  %3576 = vmatprep.mubr.bf16.mxu0 %v3502
  %3577 = vmatmul.mubr.bf16.gmra.mxu0 %v3498
  %v3578 = vpop.f32.mrf.mxu0
  %v3579 = vadd.f32 0.0, %v3578
  %v3580 = vpop.f32.mrf.mxu0
  %v3581 = vpop.f32.mrf.mxu0
  %v3582 = vpop.f32.mrf.mxu0
  %3583 = vdwg.mxu0
  %v3584 = vmax.f32 %v3539, %v3579
  %v3585 = vpack.c.bf16 %v3584, %v3584
  %s3586 = scalar_lea.vmem %s8, 144
  %v3587 = vld [vmem:[%s3586] sm:$0xf]
  %v3588 = vld [vmem:[%s3586 + $0x4] sm:$0xf]
  %v3589 = vld [vmem:[%s3586 + $0x8] sm:$0xf]
  %v3590 = vld [vmem:[%s3586 + $0xc] sm:$0xf]
  %v3591 = vld [vmem:[%s3586 + $0x10] sm:$0xf]
  %v3592 = vld [vmem:[%s3586 + $0x14] sm:$0xf]
  %v3593 = vld [vmem:[%s3586 + $0x18] sm:$0xf]
  %v3594 = vld [vmem:[%s3586 + $0x1c] sm:$0xf]
  %v3595 = vld [vmem:[%s3586 + $0x20] sm:$0xf]
  %v3596 = vld [vmem:[%s3586 + $0x24] sm:$0xf]
  %v3597 = vld [vmem:[%s3586 + $0x28] sm:$0xf]
  %v3598 = vld [vmem:[%s3586 + $0x2c] sm:$0xf]
  %v3611 = vunpack.c.l.b16 %v3587
  %v3612 = vunpack.c.l.b16 %v3588
  %v3613 = vunpack.c.l.b16 %v3589
  %v3614 = vunpack.c.l.b16 %v3590
  %v3615 = vunpack.c.l.b16 %v3591
  %v3616 = vunpack.c.l.b16 %v3592
  %v3617 = vunpack.c.l.b16 %v3593
  %v3618 = vunpack.c.l.b16 %v3594
  %v3619 = vunpack.c.l.b16 %v3595
  %v3620 = vunpack.c.l.b16 %v3596
  %v3621 = vunpack.c.l.b16 %v3597
  %v3622 = vunpack.c.l.b16 %v3598
  %v3623 = vpack.c.b16 %v3612, %v3611
  %v3624 = vpack.c.b16 %v3614, %v3613
  %v3625 = vpack.c.b16 %v3616, %v3615
  %v3626 = vpack.c.b16 %v3618, %v3617
  %v3627 = vpack.c.b16 %v3620, %v3619
  %v3628 = vpack.c.b16 %v3622, %v3621
  %v3636 = vsel %vm188, %v3585, 0
  %3638 = vmatprep.subr.bf16.mxu0 0
  %3639 = vmatpush1.bf16.msra.mxu0 0
  %3640 = vmatprep.subr.bf16.mxu0 0
  %3641 = vmatpush1.bf16.msra.mxu0 0
  %3642 = vmatprep.subr.bf16.mxu0 0
  %3643 = vmatpush1.bf16.msra.mxu0 %v3628
  %3644 = vmatprep.subr.bf16.mxu0 0
  %3645 = vmatpush1.bf16.msra.mxu0 %v3627
  %3646 = vmatprep.subr.bf16.mxu0 0
  %3647 = vmatpush1.bf16.msra.mxu0 %v3626
  %3648 = vmatprep.subr.bf16.mxu0 0
  %3649 = vmatpush1.bf16.msra.mxu0 %v3625
  %3650 = vmatprep.subr.bf16.mxu0 0
  %3651 = vmatpush1.bf16.msra.mxu0 %v3624
  %3652 = vmatprep.subr.bf16.mxu0 0
  %3653 = vmatpush1.bf16.msra.mxu0 %v3623
  %3654 = vmatprep.subr.bf16.mxu0 0
  %3655 = vmatpush2.bf16.msra.mxu0 0
  %3656 = vmatprep.subr.bf16.mxu0 0
  %3657 = vmatpush2.bf16.msra.mxu0 0
  %3658 = vmatprep.subr.bf16.mxu0 0
  %3659 = vmatpush2.bf16.msra.mxu0 0
  %3660 = vmatprep.subr.bf16.mxu0 0
  %3661 = vmatpush2.bf16.msra.mxu0 0
  %3662 = vmatprep.subr.bf16.mxu0 0
  %3663 = vmatpush2.bf16.msra.mxu0 0
  %3664 = vmatprep.subr.bf16.mxu0 0
  %3665 = vmatpush2.bf16.msra.mxu0 0
  %3666 = vmatprep.subr.bf16.mxu0 0
  %3667 = vmatpush2.bf16.msra.mxu0 0
  %3668 = vmatprep.subr.bf16.mxu0 0
  %3669 = vmatpush2.bf16.msra.mxu0 0
  %3670 = vmatprep.mubr.bf16.mxu0 0
  %3671 = vmatmul.mubr.bf16.gmra.mxu0 %v3636
  %v3672 = vpop.f32.mrf.mxu0
  %v3673 = vadd.f32 0.0, %v3672
  %v3674 = vpop.f32.mrf.mxu0
  %v3675 = vpop.f32.mrf.mxu0
  %v3676 = vpop.f32.mrf.mxu0
  %3677 = vdwg.mxu0
  %v3678 = vadd.f32 %v3349, %v3673
  %v3679 = vld [vmem:[#allocation3 + $0x8] sm:$0x11]
  %v3680 = vld [vmem:[#allocation3 + $0x18] sm:$0x11]
  %v3681 = vld [vmem:[#allocation3 + $0x28] sm:$0x11]
  %v3682 = vld [vmem:[#allocation3 + $0x38] sm:$0x11]
  %v3683 = vld [vmem:[#allocation3 + $0x48] sm:$0x11]
  %v3684 = vld [vmem:[#allocation3 + $0x58] sm:$0x11]
  %v3685 = vld [vmem:[#allocation3 + $0x68] sm:$0x11]
  %v3686 = vld [vmem:[#allocation3 + $0x78] sm:$0x11]
  %v3688 = vshrl.u32 %v3679, 16
  %v3690 = vrot.slane %v3688, 4
  %v3691 = vrot.slane %v3690, 4
  %v3693 = vshrl.u32 %v3680, 16
  %v3695 = vrot.slane %v3693, 4
  %v3696 = vrot.slane %v3695, 4
  %v3698 = vshrl.u32 %v3681, 16
  %v3700 = vrot.slane %v3698, 4
  %v3701 = vrot.slane %v3700, 4
  %v3703 = vshrl.u32 %v3682, 16
  %v3705 = vrot.slane %v3703, 4
  %v3706 = vrot.slane %v3705, 4
  %v3708 = vshrl.u32 %v3683, 16
  %v3710 = vrot.slane %v3708, 4
  %v3711 = vrot.slane %v3710, 4
  %v3713 = vshrl.u32 %v3684, 16
  %v3715 = vrot.slane %v3713, 4
  %v3716 = vrot.slane %v3715, 4
  %v3718 = vshrl.u32 %v3685, 16
  %v3720 = vrot.slane %v3718, 4
  %v3721 = vrot.slane %v3720, 4
  %v3723 = vshrl.u32 %v3686, 16
  %v3725 = vrot.slane %v3723, 4
  %v3726 = vrot.slane %v3725, 4
  %v3735 = vmax.bf16 %v3679, %v3691
  %v3736 = vmax.bf16 %v3680, %v3696
  %v3737 = vmax.bf16 %v3681, %v3701
  %v3738 = vmax.bf16 %v3682, %v3706
  %v3739 = vmax.bf16 %v3683, %v3711
  %v3740 = vmax.bf16 %v3684, %v3716
  %v3741 = vmax.bf16 %v3685, %v3721
  %v3742 = vmax.bf16 %v3686, %v3726
  %v3751 = vunpack.c.l.b16 %v3735
  %v3752 = vunpack.c.h.b16 %v3735
  %v3753 = vunpack.c.l.b16 %v3736
  %v3754 = vunpack.c.h.b16 %v3736
  %v3755 = vunpack.c.l.b16 %v3737
  %v3756 = vunpack.c.h.b16 %v3737
  %v3757 = vunpack.c.l.b16 %v3738
  %v3758 = vunpack.c.h.b16 %v3738
  %v3759 = vunpack.c.l.b16 %v3739
  %v3760 = vunpack.c.h.b16 %v3739
  %v3761 = vunpack.c.l.b16 %v3740
  %v3762 = vunpack.c.h.b16 %v3740
  %v3763 = vunpack.c.l.b16 %v3741
  %v3764 = vunpack.c.h.b16 %v3741
  %v3765 = vunpack.c.l.b16 %v3742
  %v3766 = vunpack.c.h.b16 %v3742
  %v3767 = vpack.c.b16 %v3751, %v3751
  %v3768 = vpack.c.b16 %v3752, %v3752
  %v3769 = vpack.c.b16 %v3753, %v3753
  %v3770 = vpack.c.b16 %v3754, %v3754
  %v3771 = vpack.c.b16 %v3755, %v3755
  %v3772 = vpack.c.b16 %v3756, %v3756
  %v3773 = vpack.c.b16 %v3757, %v3757
  %v3774 = vpack.c.b16 %v3758, %v3758
  %v3775 = vpack.c.b16 %v3759, %v3759
  %v3776 = vpack.c.b16 %v3760, %v3760
  %v3777 = vpack.c.b16 %v3761, %v3761
  %v3778 = vpack.c.b16 %v3762, %v3762
  %v3779 = vpack.c.b16 %v3763, %v3763
  %v3780 = vpack.c.b16 %v3764, %v3764
  %v3781 = vpack.c.b16 %v3765, %v3765
  %v3782 = vpack.c.b16 %v3766, %v3766
  %v3783 = vunpack.c.l.b16 %v3767
  %v3784 = vunpack.c.l.b16 %v3768
  %v3785 = vunpack.c.l.b16 %v3769
  %v3786 = vunpack.c.l.b16 %v3770
  %v3787 = vunpack.c.l.b16 %v3771
  %v3788 = vunpack.c.l.b16 %v3772
  %v3789 = vunpack.c.l.b16 %v3773
  %v3790 = vunpack.c.l.b16 %v3774
  %v3791 = vunpack.c.l.b16 %v3775
  %v3792 = vunpack.c.l.b16 %v3776
  %v3793 = vunpack.c.l.b16 %v3777
  %v3794 = vunpack.c.l.b16 %v3778
  %v3795 = vunpack.c.l.b16 %v3779
  %v3796 = vunpack.c.l.b16 %v3780
  %v3797 = vunpack.c.l.b16 %v3781
  %v3798 = vunpack.c.l.b16 %v3782
  %v3799 = vrot.slane %v3785, 7
  %v3800 = vsel %vm2323, %v3799, %v3783
  %v3801 = vrot.slane %v3787, 6
  %v3802 = vsel %vm2326, %v3801, %v3800
  %v3803 = vrot.slane %v3789, 5
  %v3804 = vsel %vm2329, %v3803, %v3802
  %v3805 = vrot.slane %v3791, 4
  %v3806 = vsel %vm2332, %v3805, %v3804
  %v3807 = vrot.slane %v3793, 3
  %v3808 = vsel %vm2335, %v3807, %v3806
  %v3809 = vrot.slane %v3795, 2
  %v3810 = vsel %vm2338, %v3809, %v3808
  %v3811 = vrot.slane %v3797, 1
  %v3812 = vsel %vm2341, %v3811, %v3810
  %v3813 = vrot.slane %v3786, 7
  %v3814 = vsel %vm2323, %v3813, %v3784
  %v3815 = vrot.slane %v3788, 6
  %v3816 = vsel %vm2326, %v3815, %v3814
  %v3817 = vrot.slane %v3790, 5
  %v3818 = vsel %vm2329, %v3817, %v3816
  %v3819 = vrot.slane %v3792, 4
  %v3820 = vsel %vm2332, %v3819, %v3818
  %v3821 = vrot.slane %v3794, 3
  %v3822 = vsel %vm2335, %v3821, %v3820
  %v3823 = vrot.slane %v3796, 2
  %v3824 = vsel %vm2338, %v3823, %v3822
  %v3825 = vrot.slane %v3798, 1
  %v3826 = vsel %vm2341, %v3825, %v3824
  %v3827 = vpack.c.b16 %v3812, %v3812
  %v3828 = vpack.c.b16 %v3826, %v3826
  %v3831 = vsel %vm2438, %v3828, 0
  %3833 = vmatprep.subr.bf16.mxu0 0
  %3834 = vmatpush1.bf16.msra.mxu0 %v2419
  %3835 = vmatprep.subr.bf16.mxu0 0
  %3836 = vmatpush1.bf16.msra.mxu0 %v2418
  %3837 = vmatprep.subr.bf16.mxu0 0
  %3838 = vmatpush1.bf16.msra.mxu0 %v2417
  %3839 = vmatprep.subr.bf16.mxu0 0
  %3840 = vmatpush1.bf16.msra.mxu0 %v2416
  %3841 = vmatprep.subr.bf16.mxu0 0
  %3842 = vmatpush1.bf16.msra.mxu0 %v2415
  %3843 = vmatprep.subr.bf16.mxu0 0
  %3844 = vmatpush1.bf16.msra.mxu0 %v2414
  %3845 = vmatprep.subr.bf16.mxu0 0
  %3846 = vmatpush1.bf16.msra.mxu0 %v2413
  %3847 = vmatprep.subr.bf16.mxu0 0
  %3848 = vmatpush1.bf16.msra.mxu0 %v2412
  %3849 = vmatprep.subr.bf16.mxu0 0
  %3850 = vmatpush2.bf16.msra.mxu0 0
  %3851 = vmatprep.subr.bf16.mxu0 0
  %3852 = vmatpush2.bf16.msra.mxu0 0
  %3853 = vmatprep.subr.bf16.mxu0 0
  %3854 = vmatpush2.bf16.msra.mxu0 0
  %3855 = vmatprep.subr.bf16.mxu0 0
  %3856 = vmatpush2.bf16.msra.mxu0 %v2424
  %3857 = vmatprep.subr.bf16.mxu0 0
  %3858 = vmatpush2.bf16.msra.mxu0 %v2423
  %3859 = vmatprep.subr.bf16.mxu0 0
  %3860 = vmatpush2.bf16.msra.mxu0 %v2422
  %3861 = vmatprep.subr.bf16.mxu0 0
  %3862 = vmatpush2.bf16.msra.mxu0 %v2421
  %3863 = vmatprep.subr.bf16.mxu0 0
  %3864 = vmatpush2.bf16.msra.mxu0 %v2420
  %3865 = vmatprep.mubr.bf16.mxu0 %v3831
  %3866 = vmatmul.mubr.bf16.gmra.mxu0 %v3827
  %v3867 = vpop.f32.mrf.mxu0
  %v3868 = vadd.f32 0.0, %v3867
  %v3869 = vpop.f32.mrf.mxu0
  %v3870 = vpop.f32.mrf.mxu0
  %v3871 = vpop.f32.mrf.mxu0
  %3872 = vdwg.mxu0
  %3873 = vmatprep.subr.bf16.mxu0 0
  %3874 = vmatpush1.bf16.msra.mxu0 %v2541
  %3875 = vmatprep.subr.bf16.mxu0 0
  %3876 = vmatpush1.bf16.msra.mxu0 %v2540
  %3877 = vmatprep.subr.bf16.mxu0 0
  %3878 = vmatpush1.bf16.msra.mxu0 %v2539
  %3879 = vmatprep.subr.bf16.mxu0 0
  %3880 = vmatpush1.bf16.msra.mxu0 %v2538
  %3881 = vmatprep.subr.bf16.mxu0 0
  %3882 = vmatpush1.bf16.msra.mxu0 %v2537
  %3883 = vmatprep.subr.bf16.mxu0 0
  %3884 = vmatpush1.bf16.msra.mxu0 %v2536
  %3885 = vmatprep.subr.bf16.mxu0 0
  %3886 = vmatpush1.bf16.msra.mxu0 %v2535
  %3887 = vmatprep.subr.bf16.mxu0 0
  %3888 = vmatpush1.bf16.msra.mxu0 %v2534
  %3889 = vmatprep.subr.bf16.mxu0 0
  %3890 = vmatpush2.bf16.msra.mxu0 0
  %3891 = vmatprep.subr.bf16.mxu0 0
  %3892 = vmatpush2.bf16.msra.mxu0 0
  %3893 = vmatprep.subr.bf16.mxu0 0
  %3894 = vmatpush2.bf16.msra.mxu0 0
  %3895 = vmatprep.subr.bf16.mxu0 0
  %3896 = vmatpush2.bf16.msra.mxu0 %v2546
  %3897 = vmatprep.subr.bf16.mxu0 0
  %3898 = vmatpush2.bf16.msra.mxu0 %v2545
  %3899 = vmatprep.subr.bf16.mxu0 0
  %3900 = vmatpush2.bf16.msra.mxu0 %v2544
  %3901 = vmatprep.subr.bf16.mxu0 0
  %3902 = vmatpush2.bf16.msra.mxu0 %v2543
  %3903 = vmatprep.subr.bf16.mxu0 0
  %3904 = vmatpush2.bf16.msra.mxu0 %v2542
  %3905 = vmatprep.mubr.bf16.mxu0 %v3831
  %3906 = vmatmul.mubr.bf16.gmra.mxu0 %v3827
  %v3907 = vpop.f32.mrf.mxu0
  %v3908 = vadd.f32 0.0, %v3907
  %v3909 = vpop.f32.mrf.mxu0
  %v3910 = vpop.f32.mrf.mxu0
  %v3911 = vpop.f32.mrf.mxu0
  %3912 = vdwg.mxu0
  %v3913 = vmax.f32 %v3868, %v3908
  %v3914 = vpack.c.bf16 %v3913, %v3913
  %s3915 = scalar_lea.vmem %s8, 192
  %v3916 = vld [vmem:[%s3915] sm:$0xf]
  %v3917 = vld [vmem:[%s3915 + $0x4] sm:$0xf]
  %v3918 = vld [vmem:[%s3915 + $0x8] sm:$0xf]
  %v3919 = vld [vmem:[%s3915 + $0xc] sm:$0xf]
  %v3920 = vld [vmem:[%s3915 + $0x10] sm:$0xf]
  %v3921 = vld [vmem:[%s3915 + $0x14] sm:$0xf]
  %v3922 = vld [vmem:[%s3915 + $0x18] sm:$0xf]
  %v3923 = vld [vmem:[%s3915 + $0x1c] sm:$0xf]
  %v3924 = vld [vmem:[%s3915 + $0x20] sm:$0xf]
  %v3925 = vld [vmem:[%s3915 + $0x24] sm:$0xf]
  %v3926 = vld [vmem:[%s3915 + $0x28] sm:$0xf]
  %v3927 = vld [vmem:[%s3915 + $0x2c] sm:$0xf]
  %v3940 = vunpack.c.l.b16 %v3916
  %v3941 = vunpack.c.l.b16 %v3917
  %v3942 = vunpack.c.l.b16 %v3918
  %v3943 = vunpack.c.l.b16 %v3919
  %v3944 = vunpack.c.l.b16 %v3920
  %v3945 = vunpack.c.l.b16 %v3921
  %v3946 = vunpack.c.l.b16 %v3922
  %v3947 = vunpack.c.l.b16 %v3923
  %v3948 = vunpack.c.l.b16 %v3924
  %v3949 = vunpack.c.l.b16 %v3925
  %v3950 = vunpack.c.l.b16 %v3926
  %v3951 = vunpack.c.l.b16 %v3927
  %v3952 = vpack.c.b16 %v3941, %v3940
  %v3953 = vpack.c.b16 %v3943, %v3942
  %v3954 = vpack.c.b16 %v3945, %v3944
  %v3955 = vpack.c.b16 %v3947, %v3946
  %v3956 = vpack.c.b16 %v3949, %v3948
  %v3957 = vpack.c.b16 %v3951, %v3950
  %v3965 = vsel %vm188, %v3914, 0
  %3967 = vmatprep.subr.bf16.mxu0 0
  %3968 = vmatpush1.bf16.msra.mxu0 0
  %3969 = vmatprep.subr.bf16.mxu0 0
  %3970 = vmatpush1.bf16.msra.mxu0 0
  %3971 = vmatprep.subr.bf16.mxu0 0
  %3972 = vmatpush1.bf16.msra.mxu0 %v3957
  %3973 = vmatprep.subr.bf16.mxu0 0
  %3974 = vmatpush1.bf16.msra.mxu0 %v3956
  %3975 = vmatprep.subr.bf16.mxu0 0
  %3976 = vmatpush1.bf16.msra.mxu0 %v3955
  %3977 = vmatprep.subr.bf16.mxu0 0
  %3978 = vmatpush1.bf16.msra.mxu0 %v3954
  %3979 = vmatprep.subr.bf16.mxu0 0
  %3980 = vmatpush1.bf16.msra.mxu0 %v3953
  %3981 = vmatprep.subr.bf16.mxu0 0
  %3982 = vmatpush1.bf16.msra.mxu0 %v3952
  %3983 = vmatprep.subr.bf16.mxu0 0
  %3984 = vmatpush2.bf16.msra.mxu0 0
  %3985 = vmatprep.subr.bf16.mxu0 0
  %3986 = vmatpush2.bf16.msra.mxu0 0
  %3987 = vmatprep.subr.bf16.mxu0 0
  %3988 = vmatpush2.bf16.msra.mxu0 0
  %3989 = vmatprep.subr.bf16.mxu0 0
  %3990 = vmatpush2.bf16.msra.mxu0 0
  %3991 = vmatprep.subr.bf16.mxu0 0
  %3992 = vmatpush2.bf16.msra.mxu0 0
  %3993 = vmatprep.subr.bf16.mxu0 0
  %3994 = vmatpush2.bf16.msra.mxu0 0
  %3995 = vmatprep.subr.bf16.mxu0 0
  %3996 = vmatpush2.bf16.msra.mxu0 0
  %3997 = vmatprep.subr.bf16.mxu0 0
  %3998 = vmatpush2.bf16.msra.mxu0 0
  %3999 = vmatprep.mubr.bf16.mxu0 0
  %4000 = vmatmul.mubr.bf16.gmra.mxu0 %v3965
  %v4001 = vpop.f32.mrf.mxu0
  %v4002 = vadd.f32 0.0, %v4001
  %v4003 = vpop.f32.mrf.mxu0
  %v4004 = vpop.f32.mrf.mxu0
  %v4005 = vpop.f32.mrf.mxu0
  %4006 = vdwg.mxu0
  %v4007 = vadd.f32 %v3678, %v4002
  %v4008 = vld [vmem:[#allocation3 + $0x8] sm:$0x22]
  %v4009 = vld [vmem:[#allocation3 + $0x18] sm:$0x22]
  %v4010 = vld [vmem:[#allocation3 + $0x28] sm:$0x22]
  %v4011 = vld [vmem:[#allocation3 + $0x38] sm:$0x22]
  %v4012 = vld [vmem:[#allocation3 + $0x48] sm:$0x22]
  %v4013 = vld [vmem:[#allocation3 + $0x58] sm:$0x22]
  %v4014 = vld [vmem:[#allocation3 + $0x68] sm:$0x22]
  %v4015 = vld [vmem:[#allocation3 + $0x78] sm:$0x22]
  %v4017 = vshrl.u32 %v4008, 16
  %v4019 = vrot.slane %v4017, 4
  %v4020 = vrot.slane %v4019, 4
  %v4022 = vshrl.u32 %v4009, 16
  %v4024 = vrot.slane %v4022, 4
  %v4025 = vrot.slane %v4024, 4
  %v4027 = vshrl.u32 %v4010, 16
  %v4029 = vrot.slane %v4027, 4
  %v4030 = vrot.slane %v4029, 4
  %v4032 = vshrl.u32 %v4011, 16
  %v4034 = vrot.slane %v4032, 4
  %v4035 = vrot.slane %v4034, 4
  %v4037 = vshrl.u32 %v4012, 16
  %v4039 = vrot.slane %v4037, 4
  %v4040 = vrot.slane %v4039, 4
  %v4042 = vshrl.u32 %v4013, 16
  %v4044 = vrot.slane %v4042, 4
  %v4045 = vrot.slane %v4044, 4
  %v4047 = vshrl.u32 %v4014, 16
  %v4049 = vrot.slane %v4047, 4
  %v4050 = vrot.slane %v4049, 4
  %v4052 = vshrl.u32 %v4015, 16
  %v4054 = vrot.slane %v4052, 4
  %v4055 = vrot.slane %v4054, 4
  %v4064 = vmax.bf16 %v4008, %v4020
  %v4065 = vmax.bf16 %v4009, %v4025
  %v4066 = vmax.bf16 %v4010, %v4030
  %v4067 = vmax.bf16 %v4011, %v4035
  %v4068 = vmax.bf16 %v4012, %v4040
  %v4069 = vmax.bf16 %v4013, %v4045
  %v4070 = vmax.bf16 %v4014, %v4050
  %v4071 = vmax.bf16 %v4015, %v4055
  %v4080 = vunpack.c.l.b16 %v4064
  %v4081 = vunpack.c.h.b16 %v4064
  %v4082 = vunpack.c.l.b16 %v4065
  %v4083 = vunpack.c.h.b16 %v4065
  %v4084 = vunpack.c.l.b16 %v4066
  %v4085 = vunpack.c.h.b16 %v4066
  %v4086 = vunpack.c.l.b16 %v4067
  %v4087 = vunpack.c.h.b16 %v4067
  %v4088 = vunpack.c.l.b16 %v4068
  %v4089 = vunpack.c.h.b16 %v4068
  %v4090 = vunpack.c.l.b16 %v4069
  %v4091 = vunpack.c.h.b16 %v4069
  %v4092 = vunpack.c.l.b16 %v4070
  %v4093 = vunpack.c.h.b16 %v4070
  %v4094 = vunpack.c.l.b16 %v4071
  %v4095 = vunpack.c.h.b16 %v4071
  %v4096 = vpack.c.b16 %v4080, %v4080
  %v4097 = vpack.c.b16 %v4081, %v4081
  %v4098 = vpack.c.b16 %v4082, %v4082
  %v4099 = vpack.c.b16 %v4083, %v4083
  %v4100 = vpack.c.b16 %v4084, %v4084
  %v4101 = vpack.c.b16 %v4085, %v4085
  %v4102 = vpack.c.b16 %v4086, %v4086
  %v4103 = vpack.c.b16 %v4087, %v4087
  %v4104 = vpack.c.b16 %v4088, %v4088
  %v4105 = vpack.c.b16 %v4089, %v4089
  %v4106 = vpack.c.b16 %v4090, %v4090
  %v4107 = vpack.c.b16 %v4091, %v4091
  %v4108 = vpack.c.b16 %v4092, %v4092
  %v4109 = vpack.c.b16 %v4093, %v4093
  %v4110 = vpack.c.b16 %v4094, %v4094
  %v4111 = vpack.c.b16 %v4095, %v4095
  %v4112 = vunpack.c.l.b16 %v4096
  %v4113 = vunpack.c.l.b16 %v4097
  %v4114 = vunpack.c.l.b16 %v4098
  %v4115 = vunpack.c.l.b16 %v4099
  %v4116 = vunpack.c.l.b16 %v4100
  %v4117 = vunpack.c.l.b16 %v4101
  %v4118 = vunpack.c.l.b16 %v4102
  %v4119 = vunpack.c.l.b16 %v4103
  %v4120 = vunpack.c.l.b16 %v4104
  %v4121 = vunpack.c.l.b16 %v4105
  %v4122 = vunpack.c.l.b16 %v4106
  %v4123 = vunpack.c.l.b16 %v4107
  %v4124 = vunpack.c.l.b16 %v4108
  %v4125 = vunpack.c.l.b16 %v4109
  %v4126 = vunpack.c.l.b16 %v4110
  %v4127 = vunpack.c.l.b16 %v4111
  %v4128 = vrot.slane %v4112, 2
  %v4129 = vrot.slane %v4114, 1
  %v4130 = vsel %vm2323, %v4129, %v4128
  %v4131 = vsel %vm2326, %v4116, %v4130
  %v4132 = vrot.slane %v4118, 7
  %v4133 = vsel %vm2329, %v4132, %v4131
  %v4134 = vrot.slane %v4120, 6
  %v4135 = vsel %vm2332, %v4134, %v4133
  %v4136 = vrot.slane %v4122, 5
  %v4137 = vsel %vm2335, %v4136, %v4135
  %v4138 = vrot.slane %v4124, 4
  %v4139 = vsel %vm2338, %v4138, %v4137
  %v4140 = vrot.slane %v4126, 3
  %v4141 = vsel %vm2341, %v4140, %v4139
  %v4142 = vrot.slane %v4113, 2
  %v4143 = vrot.slane %v4115, 1
  %v4144 = vsel %vm2323, %v4143, %v4142
  %v4145 = vsel %vm2326, %v4117, %v4144
  %v4146 = vrot.slane %v4119, 7
  %v4147 = vsel %vm2329, %v4146, %v4145
  %v4148 = vrot.slane %v4121, 6
  %v4149 = vsel %vm2332, %v4148, %v4147
  %v4150 = vrot.slane %v4123, 5
  %v4151 = vsel %vm2335, %v4150, %v4149
  %v4152 = vrot.slane %v4125, 4
  %v4153 = vsel %vm2338, %v4152, %v4151
  %v4154 = vrot.slane %v4127, 3
  %v4155 = vsel %vm2341, %v4154, %v4153
  %v4156 = vpack.c.b16 %v4141, %v4141
  %v4157 = vpack.c.b16 %v4155, %v4155
  %v4160 = vsel %vm2438, %v4157, 0
  %4162 = vmatprep.subr.bf16.mxu0 0
  %4163 = vmatpush1.bf16.msra.mxu0 %v2419
  %4164 = vmatprep.subr.bf16.mxu0 0
  %4165 = vmatpush1.bf16.msra.mxu0 %v2418
  %4166 = vmatprep.subr.bf16.mxu0 0
  %4167 = vmatpush1.bf16.msra.mxu0 %v2417
  %4168 = vmatprep.subr.bf16.mxu0 0
  %4169 = vmatpush1.bf16.msra.mxu0 %v2416
  %4170 = vmatprep.subr.bf16.mxu0 0
  %4171 = vmatpush1.bf16.msra.mxu0 %v2415
  %4172 = vmatprep.subr.bf16.mxu0 0
  %4173 = vmatpush1.bf16.msra.mxu0 %v2414
  %4174 = vmatprep.subr.bf16.mxu0 0
  %4175 = vmatpush1.bf16.msra.mxu0 %v2413
  %4176 = vmatprep.subr.bf16.mxu0 0
  %4177 = vmatpush1.bf16.msra.mxu0 %v2412
  %4178 = vmatprep.subr.bf16.mxu0 0
  %4179 = vmatpush2.bf16.msra.mxu0 0
  %4180 = vmatprep.subr.bf16.mxu0 0
  %4181 = vmatpush2.bf16.msra.mxu0 0
  %4182 = vmatprep.subr.bf16.mxu0 0
  %4183 = vmatpush2.bf16.msra.mxu0 0
  %4184 = vmatprep.subr.bf16.mxu0 0
  %4185 = vmatpush2.bf16.msra.mxu0 %v2424
  %4186 = vmatprep.subr.bf16.mxu0 0
  %4187 = vmatpush2.bf16.msra.mxu0 %v2423
  %4188 = vmatprep.subr.bf16.mxu0 0
  %4189 = vmatpush2.bf16.msra.mxu0 %v2422
  %4190 = vmatprep.subr.bf16.mxu0 0
  %4191 = vmatpush2.bf16.msra.mxu0 %v2421
  %4192 = vmatprep.subr.bf16.mxu0 0
  %4193 = vmatpush2.bf16.msra.mxu0 %v2420
  %4194 = vmatprep.mubr.bf16.mxu0 %v4160
  %4195 = vmatmul.mubr.bf16.gmra.mxu0 %v4156
  %v4196 = vpop.f32.mrf.mxu0
  %v4197 = vadd.f32 0.0, %v4196
  %v4198 = vpop.f32.mrf.mxu0
  %v4199 = vpop.f32.mrf.mxu0
  %v4200 = vpop.f32.mrf.mxu0
  %4201 = vdwg.mxu0
  %4202 = vmatprep.subr.bf16.mxu0 0
  %4203 = vmatpush1.bf16.msra.mxu0 %v2541
  %4204 = vmatprep.subr.bf16.mxu0 0
  %4205 = vmatpush1.bf16.msra.mxu0 %v2540
  %4206 = vmatprep.subr.bf16.mxu0 0
  %4207 = vmatpush1.bf16.msra.mxu0 %v2539
  %4208 = vmatprep.subr.bf16.mxu0 0
  %4209 = vmatpush1.bf16.msra.mxu0 %v2538
  %4210 = vmatprep.subr.bf16.mxu0 0
  %4211 = vmatpush1.bf16.msra.mxu0 %v2537
  %4212 = vmatprep.subr.bf16.mxu0 0
  %4213 = vmatpush1.bf16.msra.mxu0 %v2536
  %4214 = vmatprep.subr.bf16.mxu0 0
  %4215 = vmatpush1.bf16.msra.mxu0 %v2535
  %4216 = vmatprep.subr.bf16.mxu0 0
  %4217 = vmatpush1.bf16.msra.mxu0 %v2534
  %4218 = vmatprep.subr.bf16.mxu0 0
  %4219 = vmatpush2.bf16.msra.mxu0 0
  %4220 = vmatprep.subr.bf16.mxu0 0
  %4221 = vmatpush2.bf16.msra.mxu0 0
  %4222 = vmatprep.subr.bf16.mxu0 0
  %4223 = vmatpush2.bf16.msra.mxu0 0
  %4224 = vmatprep.subr.bf16.mxu0 0
  %4225 = vmatpush2.bf16.msra.mxu0 %v2546
  %4226 = vmatprep.subr.bf16.mxu0 0
  %4227 = vmatpush2.bf16.msra.mxu0 %v2545
  %4228 = vmatprep.subr.bf16.mxu0 0
  %4229 = vmatpush2.bf16.msra.mxu0 %v2544
  %4230 = vmatprep.subr.bf16.mxu0 0
  %4231 = vmatpush2.bf16.msra.mxu0 %v2543
  %4232 = vmatprep.subr.bf16.mxu0 0
  %4233 = vmatpush2.bf16.msra.mxu0 %v2542
  %4234 = vmatprep.mubr.bf16.mxu0 %v4160
  %4235 = vmatmul.mubr.bf16.gmra.mxu0 %v4156
  %v4236 = vpop.f32.mrf.mxu0
  %v4237 = vadd.f32 0.0, %v4236
  %v4238 = vpop.f32.mrf.mxu0
  %v4239 = vpop.f32.mrf.mxu0
  %v4240 = vpop.f32.mrf.mxu0
  %4241 = vdwg.mxu0
  %v4242 = vmax.f32 %v4197, %v4237
  %v4243 = vpack.c.bf16 %v4242, %v4242
  %s4244 = scalar_lea.vmem %s8, 240
  %v4245 = vld [vmem:[%s4244] sm:$0xf]
  %v4246 = vld [vmem:[%s4244 + $0x4] sm:$0xf]
  %v4247 = vld [vmem:[%s4244 + $0x8] sm:$0xf]
  %v4248 = vld [vmem:[%s4244 + $0xc] sm:$0xf]
  %v4249 = vld [vmem:[%s4244 + $0x10] sm:$0xf]
  %v4250 = vld [vmem:[%s4244 + $0x14] sm:$0xf]
  %v4251 = vld [vmem:[%s4244 + $0x18] sm:$0xf]
  %v4252 = vld [vmem:[%s4244 + $0x1c] sm:$0xf]
  %v4253 = vld [vmem:[%s4244 + $0x20] sm:$0xf]
  %v4254 = vld [vmem:[%s4244 + $0x24] sm:$0xf]
  %v4255 = vld [vmem:[%s4244 + $0x28] sm:$0xf]
  %v4256 = vld [vmem:[%s4244 + $0x2c] sm:$0xf]
  %v4269 = vunpack.c.l.b16 %v4245
  %v4270 = vunpack.c.l.b16 %v4246
  %v4271 = vunpack.c.l.b16 %v4247
  %v4272 = vunpack.c.l.b16 %v4248
  %v4273 = vunpack.c.l.b16 %v4249
  %v4274 = vunpack.c.l.b16 %v4250
  %v4275 = vunpack.c.l.b16 %v4251
  %v4276 = vunpack.c.l.b16 %v4252
  %v4277 = vunpack.c.l.b16 %v4253
  %v4278 = vunpack.c.l.b16 %v4254
  %v4279 = vunpack.c.l.b16 %v4255
  %v4280 = vunpack.c.l.b16 %v4256
  %v4281 = vpack.c.b16 %v4270, %v4269
  %v4282 = vpack.c.b16 %v4272, %v4271
  %v4283 = vpack.c.b16 %v4274, %v4273
  %v4284 = vpack.c.b16 %v4276, %v4275
  %v4285 = vpack.c.b16 %v4278, %v4277
  %v4286 = vpack.c.b16 %v4280, %v4279
  %v4294 = vsel %vm188, %v4243, 0
  %4296 = vmatprep.subr.bf16.mxu0 0
  %4297 = vmatpush1.bf16.msra.mxu0 0
  %4298 = vmatprep.subr.bf16.mxu0 0
  %4299 = vmatpush1.bf16.msra.mxu0 0
  %4300 = vmatprep.subr.bf16.mxu0 0
  %4301 = vmatpush1.bf16.msra.mxu0 %v4286
  %4302 = vmatprep.subr.bf16.mxu0 0
  %4303 = vmatpush1.bf16.msra.mxu0 %v4285
  %4304 = vmatprep.subr.bf16.mxu0 0
  %4305 = vmatpush1.bf16.msra.mxu0 %v4284
  %4306 = vmatprep.subr.bf16.mxu0 0
  %4307 = vmatpush1.bf16.msra.mxu0 %v4283
  %4308 = vmatprep.subr.bf16.mxu0 0
  %4309 = vmatpush1.bf16.msra.mxu0 %v4282
  %4310 = vmatprep.subr.bf16.mxu0 0
  %4311 = vmatpush1.bf16.msra.mxu0 %v4281
  %4312 = vmatprep.subr.bf16.mxu0 0
  %4313 = vmatpush2.bf16.msra.mxu0 0
  %4314 = vmatprep.subr.bf16.mxu0 0
  %4315 = vmatpush2.bf16.msra.mxu0 0
  %4316 = vmatprep.subr.bf16.mxu0 0
  %4317 = vmatpush2.bf16.msra.mxu0 0
  %4318 = vmatprep.subr.bf16.mxu0 0
  %4319 = vmatpush2.bf16.msra.mxu0 0
  %4320 = vmatprep.subr.bf16.mxu0 0
  %4321 = vmatpush2.bf16.msra.mxu0 0
  %4322 = vmatprep.subr.bf16.mxu0 0
  %4323 = vmatpush2.bf16.msra.mxu0 0
  %4324 = vmatprep.subr.bf16.mxu0 0
  %4325 = vmatpush2.bf16.msra.mxu0 0
  %4326 = vmatprep.subr.bf16.mxu0 0
  %4327 = vmatpush2.bf16.msra.mxu0 0
  %4328 = vmatprep.mubr.bf16.mxu0 0
  %4329 = vmatmul.mubr.bf16.gmra.mxu0 %v4294
  %v4330 = vpop.f32.mrf.mxu0
  %v4331 = vadd.f32 0.0, %v4330
  %v4332 = vpop.f32.mrf.mxu0
  %v4333 = vpop.f32.mrf.mxu0
  %v4334 = vpop.f32.mrf.mxu0
  %4335 = vdwg.mxu0
  %v4336 = vadd.f32 %v4007, %v4331
  %v4337 = vld [vmem:[%s9] sm:$0x1]
  %v4339 = vlaneseq
  %v4340 = vshrl.u32 %v4339, 7
  %v4341 = vsub.s32 0, %v4340
  %v4342 = vrot.slane %v4337, %v4341
  %v4344 = vadd.f32 %v4336, %v4342
  %v4345 = vmax.f32 %v4344, 0.0
  %v4346 = vpack.c.bf16 %v4345, %v4345
  %v4347 = vld [vmem:[%s10] sm:$0xf]
  %v4348 = vld [vmem:[%s10 + $0x4] sm:$0xf]
  %v4349 = vld [vmem:[%s10 + $0x8] sm:$0xf]
  %v4350 = vld [vmem:[%s10 + $0xc] sm:$0xf]
  %v4351 = vld [vmem:[%s10 + $0x10] sm:$0xf]
  %v4352 = vld [vmem:[%s10 + $0x14] sm:$0xf]
  %v4353 = vld [vmem:[%s10 + $0x18] sm:$0xf]
  %v4354 = vld [vmem:[%s10 + $0x1c] sm:$0xf]
  %v4355 = vld [vmem:[%s10 + $0x20] sm:$0xf]
  %v4356 = vld [vmem:[%s10 + $0x24] sm:$0xf]
  %v4357 = vld [vmem:[%s10 + $0x28] sm:$0xf]
  %v4358 = vld [vmem:[%s10 + $0x2c] sm:$0xf]
  %v4359 = vld [vmem:[%s10 + $0x30] sm:$0xf]
  %v4360 = vld [vmem:[%s10 + $0x34] sm:$0xf]
  %v4361 = vld [vmem:[%s10 + $0x38] sm:$0xf]
  %v4362 = vld [vmem:[%s10 + $0x3c] sm:$0xf]
  %v4363 = vld [vmem:[%s11] sm:$0x1]
  %v4365 = vlaneseq
  %v4366 = vshrl.u32 %v4365, 7
  %v4367 = vsub.s32 0, %v4366
  %v4368 = vrot.slane %v4363, %v4367
  %v4386 = vunpack.c.l.b16 %v4347
  %v4387 = vunpack.c.l.b16 %v4348
  %v4388 = vunpack.c.l.b16 %v4349
  %v4389 = vunpack.c.l.b16 %v4350
  %v4390 = vunpack.c.l.b16 %v4351
  %v4391 = vunpack.c.l.b16 %v4352
  %v4392 = vunpack.c.l.b16 %v4353
  %v4393 = vunpack.c.l.b16 %v4354
  %v4394 = vunpack.c.l.b16 %v4355
  %v4395 = vunpack.c.l.b16 %v4356
  %v4396 = vunpack.c.l.b16 %v4357
  %v4397 = vunpack.c.l.b16 %v4358
  %v4398 = vunpack.c.l.b16 %v4359
  %v4399 = vunpack.c.l.b16 %v4360
  %v4400 = vunpack.c.l.b16 %v4361
  %v4401 = vunpack.c.l.b16 %v4362
  %v4402 = vpack.c.b16 %v4387, %v4386
  %v4403 = vpack.c.b16 %v4389, %v4388
  %v4404 = vpack.c.b16 %v4391, %v4390
  %v4405 = vpack.c.b16 %v4393, %v4392
  %v4406 = vpack.c.b16 %v4395, %v4394
  %v4407 = vpack.c.b16 %v4397, %v4396
  %v4408 = vpack.c.b16 %v4399, %v4398
  %v4409 = vpack.c.b16 %v4401, %v4400
  %4418 = vmatprep.subr.bf16.mxu0 0
  %4419 = vmatpush1.bf16.msra.mxu0 %v4409
  %4420 = vmatprep.subr.bf16.mxu0 0
  %4421 = vmatpush1.bf16.msra.mxu0 %v4408
  %4422 = vmatprep.subr.bf16.mxu0 0
  %4423 = vmatpush1.bf16.msra.mxu0 %v4407
  %4424 = vmatprep.subr.bf16.mxu0 0
  %4425 = vmatpush1.bf16.msra.mxu0 %v4406
  %4426 = vmatprep.subr.bf16.mxu0 0
  %4427 = vmatpush1.bf16.msra.mxu0 %v4405
  %4428 = vmatprep.subr.bf16.mxu0 0
  %4429 = vmatpush1.bf16.msra.mxu0 %v4404
  %4430 = vmatprep.subr.bf16.mxu0 0
  %4431 = vmatpush1.bf16.msra.mxu0 %v4403
  %4432 = vmatprep.subr.bf16.mxu0 0
  %4433 = vmatpush1.bf16.msra.mxu0 %v4402
  %4434 = vmatprep.subr.bf16.mxu0 0
  %4435 = vmatpush2.bf16.msra.mxu0 0
  %4436 = vmatprep.subr.bf16.mxu0 0
  %4437 = vmatpush2.bf16.msra.mxu0 0
  %4438 = vmatprep.subr.bf16.mxu0 0
  %4439 = vmatpush2.bf16.msra.mxu0 0
  %4440 = vmatprep.subr.bf16.mxu0 0
  %4441 = vmatpush2.bf16.msra.mxu0 0
  %4442 = vmatprep.subr.bf16.mxu0 0
  %4443 = vmatpush2.bf16.msra.mxu0 0
  %4444 = vmatprep.subr.bf16.mxu0 0
  %4445 = vmatpush2.bf16.msra.mxu0 0
  %4446 = vmatprep.subr.bf16.mxu0 0
  %4447 = vmatpush2.bf16.msra.mxu0 0
  %4448 = vmatprep.subr.bf16.mxu0 0
  %4449 = vmatpush2.bf16.msra.mxu0 0
  %4450 = vmatprep.mubr.bf16.mxu0 0
  %4451 = vmatmul.mubr.bf16.gmra.mxu0 %v4346
  %v4452 = vpop.f32.mrf.mxu0
  %v4453 = vadd.f32 %v4368, %v4452
  %v4454 = vpop.f32.mrf.mxu0
  %v4455 = vpop.f32.mrf.mxu0
  %v4456 = vpop.f32.mrf.mxu0
  %4457 = vdwg.mxu0
  %v4458 = vmax.f32 %v4453, 0.0
  %v4459 = vpack.c.bf16 %v4458, %v4458
  %v4460 = vld [vmem:[%s12] sm:$0xf]
  %v4461 = vld [vmem:[%s12 + $0x4] sm:$0xf]
  %v4462 = vld [vmem:[%s12 + $0x8] sm:$0xf]
  %v4463 = vld [vmem:[%s12 + $0xc] sm:$0xf]
  %v4464 = vld [vmem:[%s12 + $0x10] sm:$0xf]
  %v4465 = vld [vmem:[%s12 + $0x14] sm:$0xf]
  %v4466 = vld [vmem:[%s12 + $0x18] sm:$0xf]
  %v4467 = vld [vmem:[%s12 + $0x1c] sm:$0xf]
  %v4468 = vld [vmem:[%s12 + $0x20] sm:$0xf]
  %v4469 = vld [vmem:[%s12 + $0x24] sm:$0xf]
  %v4470 = vld [vmem:[%s12 + $0x28] sm:$0xf]
  %v4471 = vld [vmem:[%s12 + $0x2c] sm:$0xf]
  %v4472 = vld [vmem:[%s12 + $0x30] sm:$0xf]
  %v4473 = vld [vmem:[%s12 + $0x34] sm:$0xf]
  %v4474 = vld [vmem:[%s12 + $0x38] sm:$0xf]
  %v4475 = vld [vmem:[%s12 + $0x3c] sm:$0xf]
  %v4476 = vld [vmem:[%s13] sm:$0x1]
  %v4478 = vlaneseq
  %v4479 = vshrl.u32 %v4478, 7
  %v4480 = vsub.s32 0, %v4479
  %v4481 = vrot.slane %v4476, %v4480
  %v4499 = vunpack.c.l.b16 %v4460
  %v4500 = vunpack.c.l.b16 %v4461
  %v4501 = vunpack.c.l.b16 %v4462
  %v4502 = vunpack.c.l.b16 %v4463
  %v4503 = vunpack.c.l.b16 %v4464
  %v4504 = vunpack.c.l.b16 %v4465
  %v4505 = vunpack.c.l.b16 %v4466
  %v4506 = vunpack.c.l.b16 %v4467
  %v4507 = vunpack.c.l.b16 %v4468
  %v4508 = vunpack.c.l.b16 %v4469
  %v4509 = vunpack.c.l.b16 %v4470
  %v4510 = vunpack.c.l.b16 %v4471
  %v4511 = vunpack.c.l.b16 %v4472
  %v4512 = vunpack.c.l.b16 %v4473
  %v4513 = vunpack.c.l.b16 %v4474
  %v4514 = vunpack.c.l.b16 %v4475
  %v4515 = vpack.c.b16 %v4500, %v4499
  %v4516 = vpack.c.b16 %v4502, %v4501
  %v4517 = vpack.c.b16 %v4504, %v4503
  %v4518 = vpack.c.b16 %v4506, %v4505
  %v4519 = vpack.c.b16 %v4508, %v4507
  %v4520 = vpack.c.b16 %v4510, %v4509
  %v4521 = vpack.c.b16 %v4512, %v4511
  %v4522 = vpack.c.b16 %v4514, %v4513
  %4531 = vmatprep.subr.bf16.mxu0 0
  %4532 = vmatpush1.bf16.msra.mxu0 %v4522
  %4533 = vmatprep.subr.bf16.mxu0 0
  %4534 = vmatpush1.bf16.msra.mxu0 %v4521
  %4535 = vmatprep.subr.bf16.mxu0 0
  %4536 = vmatpush1.bf16.msra.mxu0 %v4520
  %4537 = vmatprep.subr.bf16.mxu0 0
  %4538 = vmatpush1.bf16.msra.mxu0 %v4519
  %4539 = vmatprep.subr.bf16.mxu0 0
  %4540 = vmatpush1.bf16.msra.mxu0 %v4518
  %4541 = vmatprep.subr.bf16.mxu0 0
  %4542 = vmatpush1.bf16.msra.mxu0 %v4517
  %4543 = vmatprep.subr.bf16.mxu0 0
  %4544 = vmatpush1.bf16.msra.mxu0 %v4516
  %4545 = vmatprep.subr.bf16.mxu0 0
  %4546 = vmatpush1.bf16.msra.mxu0 %v4515
  %4547 = vmatprep.subr.bf16.mxu0 0
  %4548 = vmatpush2.bf16.msra.mxu0 0
  %4549 = vmatprep.subr.bf16.mxu0 0
  %4550 = vmatpush2.bf16.msra.mxu0 0
  %4551 = vmatprep.subr.bf16.mxu0 0
  %4552 = vmatpush2.bf16.msra.mxu0 0
  %4553 = vmatprep.subr.bf16.mxu0 0
  %4554 = vmatpush2.bf16.msra.mxu0 0
  %4555 = vmatprep.subr.bf16.mxu0 0
  %4556 = vmatpush2.bf16.msra.mxu0 0
  %4557 = vmatprep.subr.bf16.mxu0 0
  %4558 = vmatpush2.bf16.msra.mxu0 0
  %4559 = vmatprep.subr.bf16.mxu0 0
  %4560 = vmatpush2.bf16.msra.mxu0 0
  %4561 = vmatprep.subr.bf16.mxu0 0
  %4562 = vmatpush2.bf16.msra.mxu0 0
  %4563 = vmatprep.mubr.bf16.mxu0 0
  %4564 = vmatmul.mubr.bf16.gmra.mxu0 %v4459
  %v4565 = vpop.f32.mrf.mxu0
  %v4566 = vadd.f32 %v4481, %v4565
  %v4567 = vpop.f32.mrf.mxu0
  %v4568 = vpop.f32.mrf.mxu0
  %v4569 = vpop.f32.mrf.mxu0
  %4570 = vdwg.mxu0
  %4571 = vst [vmem:[%s14] sm:$0xff] %v4566
  // Predicated region
  $region58: #{net_forward.1} parent=0 // pred_check
    _
  $region59: #{net_forward.1} parent=0 // pred_check_branch
    %4573 = sbr.rel (0) target = $region61
  $region60: #{net_forward.1} parent=0 // pred_region
    _
  $region61: #{net_forward.1} parent=0 // pred_fallthru
    _
  // Predicated region
  $region62: #{net_forward.1} parent=0 // pred_check
    _
  $region63: #{net_forward.1} parent=0 // pred_check_branch
    %4575 = sbr.rel (0) target = $region65
  $region64: #{net_forward.1} parent=0 // pred_region
    _
  $region65: #{net_forward.1} parent=0 // pred_fallthru
    _

</llo_original>
